<compile_context>
chip_gen: v6e
topology: v6e:2x2x1
jax: 0.10.0
libtpu: 0.0.40
codegen_flags: <defaults>
</compile_context>

<pallas_src>
import jax
import jax.numpy as jnp
from jax.experimental import pallas as pl
from jax.experimental.pallas import tpu as pltpu

INPUT_SIZE = 784
HIDDEN_SIZE = 512
NUM_CLASSES = 10

OUT_PAD = 128   # lane-dense padded output width
TB = 256        # batch tile (fills v6e/v7x 256x256 MXU height; multiple of 8)


def mlp_kernel(x_ref, w1_ref, b1_ref, w2_ref, b2_ref, o_ref):
    # fc1: (TB, 784)bf16 @ (784, 512)bf16 -> f32, + bias
    h = jnp.dot(x_ref[...], w1_ref[...], preferred_element_type=jnp.float32)
    h = h + b1_ref[...]
    # ReLU
    h = jnp.maximum(h, 0.0)
    # Dropout(0.1) in eval mode -> identity
    # fc2: (TB, 512)bf16 @ (512, 128)bf16 -> f32, + padded bias
    out = jnp.dot(h.astype(w2_ref.dtype), w2_ref[...],
                  preferred_element_type=jnp.float32)
    out = out + b2_ref[...]
    o_ref[...] = out.astype(o_ref.dtype)


def net_forward(x, w1, b1, w2, b2, *, tb=TB):
    """x: (B, 784) f32; w1: (784, 512); b1: (1, 512); w2: (512, 10); b2: (1, 10)."""
    B = x.shape[0]
    n_tiles = pl.cdiv(B, tb)
    B_pad = n_tiles * tb

    # bf16 inputs/weights; f32 biases (added to f32 accumulators).
    xb = x.astype(jnp.bfloat16)
    if B_pad != B:
        xb = jnp.pad(xb, ((0, B_pad - B), (0, 0)))
    w1b = w1.astype(jnp.bfloat16)
    b1f = b1.astype(jnp.float32)
    # Zero-pad fc2 to a lane-dense 128-wide output.
    w2p = jnp.pad(w2, ((0, 0), (0, OUT_PAD - NUM_CLASSES))).astype(jnp.bfloat16)
    b2p = jnp.pad(b2, ((0, 0), (0, OUT_PAD - NUM_CLASSES))).astype(jnp.float32)

    out = pl.pallas_call(
        mlp_kernel,
        out_shape=jax.ShapeDtypeStruct((B_pad, OUT_PAD), jnp.float32),
        grid=(n_tiles,),
        in_specs=[
            pl.BlockSpec((tb, INPUT_SIZE), lambda i: (i, 0)),          # x tile
            pl.BlockSpec((INPUT_SIZE, HIDDEN_SIZE), lambda i: (0, 0)),  # W1 resident
            pl.BlockSpec((1, HIDDEN_SIZE), lambda i: (0, 0)),           # b1 resident
            pl.BlockSpec((HIDDEN_SIZE, OUT_PAD), lambda i: (0, 0)),     # W2 resident
            pl.BlockSpec((1, OUT_PAD), lambda i: (0, 0)),               # b2 resident
        ],
        out_specs=pl.BlockSpec((tb, OUT_PAD), lambda i: (i, 0)),
        compiler_params=pltpu.CompilerParams(
            dimension_semantics=("parallel",),
            # Resident bf16 W1 (~0.8 MB) + double-buffered x/out tiles fit well
            # under the v7x 32 MiB scoped / 64 MiB physical VMEM budget.
            vmem_limit_bytes=32 * 1024 * 1024,
        ),
    )(xb, w1b, b1f, w2p, b2p)

    return out[:B, :NUM_CLASSES]


def init_params(key):
    # Mimic PyTorch nn.Linear default init: U(-1/sqrt(fan_in), 1/sqrt(fan_in))
    k1, k2, k3, k4 = jax.random.split(key, 4)
    bound1 = 1.0 / jnp.sqrt(INPUT_SIZE)
    bound2 = 1.0 / jnp.sqrt(HIDDEN_SIZE)
    w1 = jax.random.uniform(k1, (INPUT_SIZE, HIDDEN_SIZE), jnp.float32,
                            -bound1, bound1)
    b1 = jax.random.uniform(k2, (1, HIDDEN_SIZE), jnp.float32, -bound1, bound1)
    w2 = jax.random.uniform(k3, (HIDDEN_SIZE, NUM_CLASSES), jnp.float32,
                            -bound2, bound2)
    b2 = jax.random.uniform(k4, (1, NUM_CLASSES), jnp.float32, -bound2, bound2)
    return w1, b1, w2, b2


if __name__ == "__main__":
    key = jax.random.PRNGKey(0)
    kx, kp = jax.random.split(key)

    B = 8  # small batch (padded internally to the batch tile)
    x = jax.random.normal(kx, (B, INPUT_SIZE), jnp.float32)
    w1, b1, w2, b2 = init_params(kp)

    out = net_forward(x, w1, b1, w2, b2)
    out = jax.block_until_ready(out)
    assert out.shape == (B, NUM_CLASSES)

    # Pure-JAX reference with the same bf16 inputs / f32 accumulation
    # (eval-mode dropout == identity).
    xb = x.astype(jnp.bfloat16)
    w1b = w1.astype(jnp.bfloat16)
    w2b = w2.astype(jnp.bfloat16)
    h_ref = jnp.maximum(
        jnp.dot(xb, w1b, preferred_element_type=jnp.float32) + b1, 0.0)
    ref = jnp.dot(h_ref.astype(jnp.bfloat16), w2b,
                  preferred_element_type=jnp.float32) + b2
    assert jnp.allclose(out, ref, atol=1e-2, rtol=1e-2), (
        float(jnp.max(jnp.abs(out - ref))))

    # Sanity vs full-f32 math (bf16 quantization error only).
    ref_f32 = jnp.maximum(x @ w1 + b1, 0.0) @ w2 + b2
    assert jnp.allclose(out, ref_f32, atol=5e-2, rtol=5e-2)

    print("KERNEL_OK")
</pallas_src>

<mosaic_0001>
module attributes {stable_mosaic.version = 11 : i64} {
  func.func @mlp_kernel(%arg0: i32, %arg1: memref<256x784xbf16, #tpu.memory_space<vmem>>, %arg2: memref<784x512xbf16, #tpu.memory_space<vmem>>, %arg3: memref<1x512xf32, #tpu.memory_space<vmem>>, %arg4: memref<512x128xbf16, #tpu.memory_space<vmem>>, %arg5: memref<1x128xf32, #tpu.memory_space<vmem>>, %arg6: memref<256x128xf32, #tpu.memory_space<vmem>>) attributes {dimension_semantics = [#tpu.dimension_semantics<parallel>], iteration_bounds = array<i64: 1>, scalar_prefetch = 0 : i64, scratch_operands = 0 : i64, tpu.core_type = #tpu.core_type<tc>, window_params = [{transform_indices = @transform_0, window_bounds = array<i64: 256, 784>}, {pipeline_mode = #tpu.pipeline_mode<synchronous>, transform_indices = @transform_1, window_bounds = array<i64: 784, 512>}, {pipeline_mode = #tpu.pipeline_mode<synchronous>, transform_indices = @transform_2, window_bounds = array<i64: 1, 512>}, {pipeline_mode = #tpu.pipeline_mode<synchronous>, transform_indices = @transform_3, window_bounds = array<i64: 512, 128>}, {pipeline_mode = #tpu.pipeline_mode<synchronous>, transform_indices = @transform_4, window_bounds = array<i64: 1, 128>}, {transform_indices = @transform_5, window_bounds = array<i64: 256, 128>}]} {
    %c0 = arith.constant 0 : index
    %c0_0 = arith.constant 0 : index
    %0 = vector.load %arg1[%c0, %c0_0] : memref<256x784xbf16, #tpu.memory_space<vmem>>, vector<256x784xbf16>
    %c0_1 = arith.constant 0 : index
    %c0_2 = arith.constant 0 : index
    %1 = vector.load %arg2[%c0_1, %c0_2] : memref<784x512xbf16, #tpu.memory_space<vmem>>, vector<784x512xbf16>
    %cst = arith.constant dense<0.000000e+00> : vector<256x512xf32>
    %2 = tpu.matmul %0, %1, %cst {dimension_numbers = #tpu.dot_dimension_numbers<[1], [0], [0], [1], [0, 0, 1, 1], [], []>} : vector<256x784xbf16>, vector<784x512xbf16>, vector<256x512xf32> -> vector<256x512xf32>
    %c0_3 = arith.constant 0 : index
    %c0_4 = arith.constant 0 : index
    %3 = vector.load %arg3[%c0_3, %c0_4] : memref<1x512xf32, #tpu.memory_space<vmem>>, vector<1x512xf32>
    %4 = vector.broadcast %3 : vector<1x512xf32> to vector<256x512xf32>
    %5 = arith.addf %2, %4 : vector<256x512xf32>
    %cst_5 = arith.constant 0.000000e+00 : f32
    %6 = vector.broadcast %cst_5 : f32 to vector<256x512xf32>
    %7 = arith.maximumf %5, %6 : vector<256x512xf32>
    %8 = arith.truncf %7 : vector<256x512xf32> to vector<256x512xbf16>
    %c0_6 = arith.constant 0 : index
    %c0_7 = arith.constant 0 : index
    %9 = vector.load %arg4[%c0_6, %c0_7] : memref<512x128xbf16, #tpu.memory_space<vmem>>, vector<512x128xbf16>
    %cst_8 = arith.constant dense<0.000000e+00> : vector<256x128xf32>
    %10 = tpu.matmul %8, %9, %cst_8 {dimension_numbers = #tpu.dot_dimension_numbers<[1], [0], [0], [1], [0, 0, 1, 1], [], []>} : vector<256x512xbf16>, vector<512x128xbf16>, vector<256x128xf32> -> vector<256x128xf32>
    %c0_9 = arith.constant 0 : index
    %c0_10 = arith.constant 0 : index
    %11 = vector.load %arg5[%c0_9, %c0_10] : memref<1x128xf32, #tpu.memory_space<vmem>>, vector<1x128xf32>
    %12 = vector.broadcast %11 : vector<1x128xf32> to vector<256x128xf32>
    %13 = arith.addf %10, %12 : vector<256x128xf32>
    %c0_11 = arith.constant 0 : index
    %c0_12 = arith.constant 0 : index
    %14 = vector.load %arg6[%c0_11, %c0_12] : memref<256x128xf32, #tpu.memory_space<vmem>>, vector<256x128xf32>
    tpu.vector_store %arg6[%c0_11, %c0_12], %13 {strides = array<i32>} : memref<256x128xf32, #tpu.memory_space<vmem>>, vector<256x128xf32>,
    return
  }
  func.func @transform_0(%arg0: i32) -> (i32, i32) {
    %c0_i32 = arith.constant 0 : i32
    %c0_i32_0 = arith.constant 0 : i32
    return %arg0, %c0_i32 : i32, i32
  }
  func.func @transform_1(%arg0: i32) -> (i32, i32) {
    %c0_i32 = arith.constant 0 : i32
    %c0_i32_0 = arith.constant 0 : i32
    %c0_i32_1 = arith.constant 0 : i32
    return %c0_i32, %c0_i32_0 : i32, i32
  }
  func.func @transform_2(%arg0: i32) -> (i32, i32) {
    %c0_i32 = arith.constant 0 : i32
    %c0_i32_0 = arith.constant 0 : i32
    %c0_i32_1 = arith.constant 0 : i32
    return %c0_i32, %c0_i32_0 : i32, i32
  }
  func.func @transform_3(%arg0: i32) -> (i32, i32) {
    %c0_i32 = arith.constant 0 : i32
    %c0_i32_0 = arith.constant 0 : i32
    %c0_i32_1 = arith.constant 0 : i32
    return %c0_i32, %c0_i32_0 : i32, i32
  }
  func.func @transform_4(%arg0: i32) -> (i32, i32) {
    %c0_i32 = arith.constant 0 : i32
    %c0_i32_0 = arith.constant 0 : i32
    %c0_i32_1 = arith.constant 0 : i32
    return %c0_i32, %c0_i32_0 : i32, i32
  }
  func.func @transform_5(%arg0: i32) -> (i32, i32) {
    %c0_i32 = arith.constant 0 : i32
    %c0_i32_0 = arith.constant 0 : i32
    return %arg0, %c0_i32 : i32, i32
  }
}

</mosaic_0001>

<llo_original>
// kernel: tpu_custom_call.1
$region0: #{tpu_custom_call.1}
  #allocation0 [shape = 'u32[]', space=smem, size = 0x4, offset = 0x4, fixed_abs, tag = 'smem constant byte address 0x4 - core index']
  #allocation1 [shape = 'u32[144,128]{1,0:T(1,128)}', space=vmem, size = 0x12000, scoped, tag = 'internal scratch']
  %s0 = inlined_call_operand.vmem [shape: bf16[256,784], index: 0, kind: input, shape index: {}]
  %s1 = inlined_call_operand.vmem [shape: bf16[784,512], index: 1, kind: input, shape index: {}]
  %s2 = inlined_call_operand.vmem [shape: f32[1,512], index: 2, kind: input, shape index: {}]
  %s3 = inlined_call_operand.hbm [shape: bf16[512,128], index: 3, kind: input, shape index: {}]
  %s4 = inlined_call_operand.vmem [shape: f32[1,128], index: 4, kind: input, shape index: {}]
  %s5 = inlined_call_operand.hbm [shape: f32[256,128], index: 5, kind: output, shape index: {}]
  %s6 = sld [smem:[#allocation0]]
  $region34: #{tpu_custom_call.1} parent=0
    _
  %s8 = ssub.s32 1, %s6
  %s9 = scalar_select 0, %s8, %s6
  $region1: #{tpu_custom_call.1} parent=0
    #allocation2 [shape = 'u8[131072]{0}', space=vmem, size = 0x20000, scoped, tag = 'input window, operand 3, single buffered']
    #allocation3 [shape = 's32[1]{0}', space=sflag, size = 0x4, scoped, tag = 'scoped memory for tpu_custom_call.1']
    #allocation4 [shape = 's32[1]{0}', space=sflag, size = 0x4, scoped, tag = 'scoped memory for tpu_custom_call.1']
    #allocation5 [shape = 'u8[131072]{0}', space=vmem, size = 0x20000, scoped, tag = 'output window, operand 0, single buffered']
    %10 = vsyncpa [#allocation3], 0
    %11 = vsyncpa [#allocation4], 0
    // Predicated region
    $region2: #{tpu_custom_call.1} parent=1 // pred_check
      _
    $region3: #{tpu_custom_call.1} parent=1 // pred_check_branch
      %13 = sbr.rel (0) target = $region5
    $region4: #{tpu_custom_call.1} parent=1 // pred_region
      _
    $region5: #{tpu_custom_call.1} parent=1 // pred_fallthru
      _
    // Predicated region
    $region6: #{tpu_custom_call.1} parent=1 // pred_check
      _
    $region7: #{tpu_custom_call.1} parent=1 // pred_check_branch
      %15 = sbr.rel (0) target = $region9
    $region8: #{tpu_custom_call.1} parent=1 // pred_region
      _
    $region9: #{tpu_custom_call.1} parent=1 // pred_fallthru
      _
    // Predicated region
    $region10: #{tpu_custom_call.1} parent=1 // pred_check
      _
    $region11: #{tpu_custom_call.1} parent=1 // pred_check_branch
      %17 = sbr.rel (0) target = $region13
    $region12: #{tpu_custom_call.1} parent=1 // pred_region
      _
    $region13: #{tpu_custom_call.1} parent=1 // pred_fallthru
      _
    // Predicated region
    $region14: #{tpu_custom_call.1} parent=1 // pred_check
      _
    $region15: #{tpu_custom_call.1} parent=1 // pred_check_branch
      %19 = sbr.rel (0) target = $region17
    $region16: #{tpu_custom_call.1} parent=1 // pred_region
      %s21 = ssub.s32 4096, 4096
      %22 = vsyncadd [#allocation3], %s21
      %s23 = sshll.u32 [#allocation2], 4
      %s24 = int_to_ptr.vmem [resolvable:$true] %s23
      %29 = dma.hbm_to_vmem [thread:$0]  %s3, 4096, %s24, [#allocation3], 64, 64, 4
    $region17: #{tpu_custom_call.1} parent=1 // pred_fallthru
      _
    // Predicated region
    $region18: #{tpu_custom_call.1} parent=1 // pred_check
      _
    $region19: #{tpu_custom_call.1} parent=1 // pred_check_branch
      %31 = sbr.rel (0) target = $region21
    $region20: #{tpu_custom_call.1} parent=1 // pred_region
      _
    $region21: #{tpu_custom_call.1} parent=1 // pred_fallthru
      _
    // Predicated region
    $region22: #{tpu_custom_call.1} parent=1 // pred_check
      _
    $region23: #{tpu_custom_call.1} parent=1 // pred_check_branch
      %33 = sbr.rel (0) target = $region25
    $region24: #{tpu_custom_call.1} parent=1 // pred_region
      %34 = dma.done [#allocation3], 4096
    $region25: #{tpu_custom_call.1} parent=1 // pred_fallthru
      _
    %v36 = vld [vmem:[%s0] sm:$0xff]
    %v37 = vld [vmem:[%s0 + $0x8] sm:$0xff]
    %v38 = vld [vmem:[%s0 + $0x10] sm:$0xff]
    %v39 = vld [vmem:[%s0 + $0x18] sm:$0xf]
    %v40 = vld [vmem:[%s0 + $0x1c] sm:$0xff]
    %v41 = vld [vmem:[%s0 + $0x24] sm:$0xff]
    %v42 = vld [vmem:[%s0 + $0x2c] sm:$0xff]
    %v43 = vld [vmem:[%s0 + $0x34] sm:$0xf]
    %v44 = vld [vmem:[%s0 + $0x38] sm:$0xff]
    %v45 = vld [vmem:[%s0 + $0x40] sm:$0xff]
    %v46 = vld [vmem:[%s0 + $0x48] sm:$0xff]
    %v47 = vld [vmem:[%s0 + $0x50] sm:$0xf]
    %v48 = vld [vmem:[%s0 + $0x54] sm:$0xff]
    %v49 = vld [vmem:[%s0 + $0x5c] sm:$0xff]
    %v50 = vld [vmem:[%s0 + $0x64] sm:$0xff]
    %v51 = vld [vmem:[%s0 + $0x6c] sm:$0xf]
    %v52 = vld [vmem:[%s0 + $0x70] sm:$0xff]
    %v53 = vld [vmem:[%s0 + $0x78] sm:$0xff]
    %v54 = vld [vmem:[%s0 + $0x80] sm:$0xff]
    %v55 = vld [vmem:[%s0 + $0x88] sm:$0xf]
    %v56 = vld [vmem:[%s0 + $0x8c] sm:$0xff]
    %v57 = vld [vmem:[%s0 + $0x94] sm:$0xff]
    %v58 = vld [vmem:[%s0 + $0x9c] sm:$0xff]
    %v59 = vld [vmem:[%s0 + $0xa4] sm:$0xf]
    %v60 = vld [vmem:[%s0 + $0xa8] sm:$0xff]
    %v61 = vld [vmem:[%s0 + $0xb0] sm:$0xff]
    %v62 = vld [vmem:[%s0 + $0xb8] sm:$0xff]
    %v63 = vld [vmem:[%s0 + $0xc0] sm:$0xf]
    %v64 = vld [vmem:[%s0 + $0xc4] sm:$0xff]
    %v65 = vld [vmem:[%s0 + $0xcc] sm:$0xff]
    %v66 = vld [vmem:[%s0 + $0xd4] sm:$0xff]
    %v67 = vld [vmem:[%s0 + $0xdc] sm:$0xf]
    %v68 = vld [vmem:[%s0 + $0xe0] sm:$0xff]
    %v69 = vld [vmem:[%s0 + $0xe8] sm:$0xff]
    %v70 = vld [vmem:[%s0 + $0xf0] sm:$0xff]
    %v71 = vld [vmem:[%s0 + $0xf8] sm:$0xf]
    %v72 = vld [vmem:[%s0 + $0xfc] sm:$0xff]
    %v73 = vld [vmem:[%s0 + $0x104] sm:$0xff]
    %v74 = vld [vmem:[%s0 + $0x10c] sm:$0xff]
    %v75 = vld [vmem:[%s0 + $0x114] sm:$0xf]
    %v76 = vld [vmem:[%s0 + $0x118] sm:$0xff]
    %v77 = vld [vmem:[%s0 + $0x120] sm:$0xff]
    %v78 = vld [vmem:[%s0 + $0x128] sm:$0xff]
    %v79 = vld [vmem:[%s0 + $0x130] sm:$0xf]
    %v80 = vld [vmem:[%s0 + $0x134] sm:$0xff]
    %v81 = vld [vmem:[%s0 + $0x13c] sm:$0xff]
    %v82 = vld [vmem:[%s0 + $0x144] sm:$0xff]
    %v83 = vld [vmem:[%s0 + $0x14c] sm:$0xf]
    %v84 = vld [vmem:[%s0 + $0x150] sm:$0xff]
    %v85 = vld [vmem:[%s0 + $0x158] sm:$0xff]
    %v86 = vld [vmem:[%s0 + $0x160] sm:$0xff]
    %v87 = vld [vmem:[%s0 + $0x168] sm:$0xf]
    %v88 = vld [vmem:[%s0 + $0x16c] sm:$0xff]
    %v89 = vld [vmem:[%s0 + $0x174] sm:$0xff]
    %v90 = vld [vmem:[%s0 + $0x17c] sm:$0xff]
    %v91 = vld [vmem:[%s0 + $0x184] sm:$0xf]
    %v92 = vld [vmem:[%s0 + $0x188] sm:$0xff]
    %v93 = vld [vmem:[%s0 + $0x190] sm:$0xff]
    %v94 = vld [vmem:[%s0 + $0x198] sm:$0xff]
    %v95 = vld [vmem:[%s0 + $0x1a0] sm:$0xf]
    %v96 = vld [vmem:[%s0 + $0x1a4] sm:$0xff]
    %v97 = vld [vmem:[%s0 + $0x1ac] sm:$0xff]
    %v98 = vld [vmem:[%s0 + $0x1b4] sm:$0xff]
    %v99 = vld [vmem:[%s0 + $0x1bc] sm:$0xf]
    %v100 = vld [vmem:[%s0 + $0x1c0] sm:$0xff]
    %v101 = vld [vmem:[%s0 + $0x1c8] sm:$0xff]
    %v102 = vld [vmem:[%s0 + $0x1d0] sm:$0xff]
    %v103 = vld [vmem:[%s0 + $0x1d8] sm:$0xf]
    %v104 = vld [vmem:[%s0 + $0x1dc] sm:$0xff]
    %v105 = vld [vmem:[%s0 + $0x1e4] sm:$0xff]
    %v106 = vld [vmem:[%s0 + $0x1ec] sm:$0xff]
    %v107 = vld [vmem:[%s0 + $0x1f4] sm:$0xf]
    %v108 = vld [vmem:[%s0 + $0x1f8] sm:$0xff]
    %v109 = vld [vmem:[%s0 + $0x200] sm:$0xff]
    %v110 = vld [vmem:[%s0 + $0x208] sm:$0xff]
    %v111 = vld [vmem:[%s0 + $0x210] sm:$0xf]
    %v112 = vld [vmem:[%s0 + $0x214] sm:$0xff]
    %v113 = vld [vmem:[%s0 + $0x21c] sm:$0xff]
    %v114 = vld [vmem:[%s0 + $0x224] sm:$0xff]
    %v115 = vld [vmem:[%s0 + $0x22c] sm:$0xf]
    %v116 = vld [vmem:[%s0 + $0x230] sm:$0xff]
    %v117 = vld [vmem:[%s0 + $0x238] sm:$0xff]
    %v118 = vld [vmem:[%s0 + $0x240] sm:$0xff]
    %v119 = vld [vmem:[%s0 + $0x248] sm:$0xf]
    %v120 = vld [vmem:[%s0 + $0x24c] sm:$0xff]
    %v121 = vld [vmem:[%s0 + $0x254] sm:$0xff]
    %v122 = vld [vmem:[%s0 + $0x25c] sm:$0xff]
    %v123 = vld [vmem:[%s0 + $0x264] sm:$0xf]
    %v124 = vld [vmem:[%s0 + $0x268] sm:$0xff]
    %v125 = vld [vmem:[%s0 + $0x270] sm:$0xff]
    %v126 = vld [vmem:[%s0 + $0x278] sm:$0xff]
    %v127 = vld [vmem:[%s0 + $0x280] sm:$0xf]
    %v128 = vld [vmem:[%s0 + $0x284] sm:$0xff]
    %v129 = vld [vmem:[%s0 + $0x28c] sm:$0xff]
    %v130 = vld [vmem:[%s0 + $0x294] sm:$0xff]
    %v131 = vld [vmem:[%s0 + $0x29c] sm:$0xf]
    %v132 = vld [vmem:[%s0 + $0x2a0] sm:$0xff]
    %v133 = vld [vmem:[%s0 + $0x2a8] sm:$0xff]
    %v134 = vld [vmem:[%s0 + $0x2b0] sm:$0xff]
    %v135 = vld [vmem:[%s0 + $0x2b8] sm:$0xf]
    %v136 = vld [vmem:[%s0 + $0x2bc] sm:$0xff]
    %v137 = vld [vmem:[%s0 + $0x2c4] sm:$0xff]
    %v138 = vld [vmem:[%s0 + $0x2cc] sm:$0xff]
    %v139 = vld [vmem:[%s0 + $0x2d4] sm:$0xf]
    %v140 = vld [vmem:[%s0 + $0x2d8] sm:$0xff]
    %v141 = vld [vmem:[%s0 + $0x2e0] sm:$0xff]
    %v142 = vld [vmem:[%s0 + $0x2e8] sm:$0xff]
    %v143 = vld [vmem:[%s0 + $0x2f0] sm:$0xf]
    %v144 = vld [vmem:[%s0 + $0x2f4] sm:$0xff]
    %v145 = vld [vmem:[%s0 + $0x2fc] sm:$0xff]
    %v146 = vld [vmem:[%s0 + $0x304] sm:$0xff]
    %v147 = vld [vmem:[%s0 + $0x30c] sm:$0xf]
    %v148 = vld [vmem:[%s0 + $0x310] sm:$0xff]
    %v149 = vld [vmem:[%s0 + $0x318] sm:$0xff]
    %v150 = vld [vmem:[%s0 + $0x320] sm:$0xff]
    %v151 = vld [vmem:[%s0 + $0x328] sm:$0xf]
    %v152 = vld [vmem:[%s0 + $0x32c] sm:$0xff]
    %v153 = vld [vmem:[%s0 + $0x334] sm:$0xff]
    %v154 = vld [vmem:[%s0 + $0x33c] sm:$0xff]
    %v155 = vld [vmem:[%s0 + $0x344] sm:$0xf]
    %v156 = vld [vmem:[%s0 + $0x348] sm:$0xff]
    %v157 = vld [vmem:[%s0 + $0x350] sm:$0xff]
    %v158 = vld [vmem:[%s0 + $0x358] sm:$0xff]
    %v159 = vld [vmem:[%s0 + $0x360] sm:$0xf]
    %v160 = vld [vmem:[%s0 + $0x364] sm:$0xff]
    %v161 = vld [vmem:[%s0 + $0x36c] sm:$0xff]
    %v162 = vld [vmem:[%s0 + $0x374] sm:$0xff]
    %v163 = vld [vmem:[%s0 + $0x37c] sm:$0xf]
    %v164 = vld [vmem:[%s1] sm:$0xff]
    %v165 = vld [vmem:[%s1 + $0x8] sm:$0xff]
    %v166 = vld [vmem:[%s1 + $0x10] sm:$0xff]
    %v167 = vld [vmem:[%s1 + $0x18] sm:$0xff]
    %v168 = vld [vmem:[%s1 + $0x20] sm:$0xff]
    %v169 = vld [vmem:[%s1 + $0x28] sm:$0xff]
    %v170 = vld [vmem:[%s1 + $0x30] sm:$0xff]
    %v171 = vld [vmem:[%s1 + $0x38] sm:$0xff]
    %v172 = vld [vmem:[%s1 + $0x40] sm:$0xff]
    %v173 = vld [vmem:[%s1 + $0x48] sm:$0xff]
    %v174 = vld [vmem:[%s1 + $0x50] sm:$0xff]
    %v175 = vld [vmem:[%s1 + $0x58] sm:$0xff]
    %v176 = vld [vmem:[%s1 + $0x60] sm:$0xff]
    %v177 = vld [vmem:[%s1 + $0x68] sm:$0xff]
    %v178 = vld [vmem:[%s1 + $0x70] sm:$0xff]
    %v179 = vld [vmem:[%s1 + $0x78] sm:$0xff]
    %v180 = vld [vmem:[%s1 + $0x80] sm:$0xff]
    %v181 = vld [vmem:[%s1 + $0x88] sm:$0xff]
    %v182 = vld [vmem:[%s1 + $0x90] sm:$0xff]
    %v183 = vld [vmem:[%s1 + $0x98] sm:$0xff]
    %v184 = vld [vmem:[%s1 + $0xa0] sm:$0xff]
    %v185 = vld [vmem:[%s1 + $0xa8] sm:$0xff]
    %v186 = vld [vmem:[%s1 + $0xb0] sm:$0xff]
    %v187 = vld [vmem:[%s1 + $0xb8] sm:$0xff]
    %v188 = vld [vmem:[%s1 + $0xc0] sm:$0xff]
    %v189 = vld [vmem:[%s1 + $0xc8] sm:$0xff]
    %v190 = vld [vmem:[%s1 + $0xd0] sm:$0xff]
    %v191 = vld [vmem:[%s1 + $0xd8] sm:$0xff]
    %v192 = vld [vmem:[%s1 + $0xe0] sm:$0xff]
    %v193 = vld [vmem:[%s1 + $0xe8] sm:$0xff]
    %v194 = vld [vmem:[%s1 + $0xf0] sm:$0xff]
    %v195 = vld [vmem:[%s1 + $0xf8] sm:$0xff]
    %v196 = vld [vmem:[%s1 + $0x100] sm:$0xff]
    %v197 = vld [vmem:[%s1 + $0x108] sm:$0xff]
    %v198 = vld [vmem:[%s1 + $0x110] sm:$0xff]
    %v199 = vld [vmem:[%s1 + $0x118] sm:$0xff]
    %v200 = vld [vmem:[%s1 + $0x120] sm:$0xff]
    %v201 = vld [vmem:[%s1 + $0x128] sm:$0xff]
    %v202 = vld [vmem:[%s1 + $0x130] sm:$0xff]
    %v203 = vld [vmem:[%s1 + $0x138] sm:$0xff]
    %v204 = vld [vmem:[%s1 + $0x140] sm:$0xff]
    %v205 = vld [vmem:[%s1 + $0x148] sm:$0xff]
    %v206 = vld [vmem:[%s1 + $0x150] sm:$0xff]
    %v207 = vld [vmem:[%s1 + $0x158] sm:$0xff]
    %v208 = vld [vmem:[%s1 + $0x160] sm:$0xff]
    %v209 = vld [vmem:[%s1 + $0x168] sm:$0xff]
    %v210 = vld [vmem:[%s1 + $0x170] sm:$0xff]
    %v211 = vld [vmem:[%s1 + $0x178] sm:$0xff]
    %v212 = vld [vmem:[%s1 + $0x180] sm:$0xff]
    %v213 = vld [vmem:[%s1 + $0x188] sm:$0xff]
    %v214 = vld [vmem:[%s1 + $0x190] sm:$0xff]
    %v215 = vld [vmem:[%s1 + $0x198] sm:$0xff]
    %v216 = vld [vmem:[%s1 + $0x1a0] sm:$0xff]
    %v217 = vld [vmem:[%s1 + $0x1a8] sm:$0xff]
    %v218 = vld [vmem:[%s1 + $0x1b0] sm:$0xff]
    %v219 = vld [vmem:[%s1 + $0x1b8] sm:$0xff]
    %v220 = vld [vmem:[%s1 + $0x1c0] sm:$0xff]
    %v221 = vld [vmem:[%s1 + $0x1c8] sm:$0xff]
    %v222 = vld [vmem:[%s1 + $0x1d0] sm:$0xff]
    %v223 = vld [vmem:[%s1 + $0x1d8] sm:$0xff]
    %v224 = vld [vmem:[%s1 + $0x1e0] sm:$0xff]
    %v225 = vld [vmem:[%s1 + $0x1e8] sm:$0xff]
    %v226 = vld [vmem:[%s1 + $0x1f0] sm:$0xff]
    %v227 = vld [vmem:[%s1 + $0x1f8] sm:$0xff]
    %v228 = vld [vmem:[%s1 + $0x200] sm:$0xff]
    %v229 = vld [vmem:[%s1 + $0x208] sm:$0xff]
    %v230 = vld [vmem:[%s1 + $0x210] sm:$0xff]
    %v231 = vld [vmem:[%s1 + $0x218] sm:$0xff]
    %v232 = vld [vmem:[%s1 + $0x220] sm:$0xff]
    %v233 = vld [vmem:[%s1 + $0x228] sm:$0xff]
    %v234 = vld [vmem:[%s1 + $0x230] sm:$0xff]
    %v235 = vld [vmem:[%s1 + $0x238] sm:$0xff]
    %v236 = vld [vmem:[%s1 + $0x240] sm:$0xff]
    %v237 = vld [vmem:[%s1 + $0x248] sm:$0xff]
    %v238 = vld [vmem:[%s1 + $0x250] sm:$0xff]
    %v239 = vld [vmem:[%s1 + $0x258] sm:$0xff]
    %v240 = vld [vmem:[%s1 + $0x260] sm:$0xff]
    %v241 = vld [vmem:[%s1 + $0x268] sm:$0xff]
    %v242 = vld [vmem:[%s1 + $0x270] sm:$0xff]
    %v243 = vld [vmem:[%s1 + $0x278] sm:$0xff]
    %v244 = vld [vmem:[%s1 + $0x280] sm:$0xff]
    %v245 = vld [vmem:[%s1 + $0x288] sm:$0xff]
    %v246 = vld [vmem:[%s1 + $0x290] sm:$0xff]
    %v247 = vld [vmem:[%s1 + $0x298] sm:$0xff]
    %v248 = vld [vmem:[%s1 + $0x2a0] sm:$0xff]
    %v249 = vld [vmem:[%s1 + $0x2a8] sm:$0xff]
    %v250 = vld [vmem:[%s1 + $0x2b0] sm:$0xff]
    %v251 = vld [vmem:[%s1 + $0x2b8] sm:$0xff]
    %v252 = vld [vmem:[%s1 + $0x2c0] sm:$0xff]
    %v253 = vld [vmem:[%s1 + $0x2c8] sm:$0xff]
    %v254 = vld [vmem:[%s1 + $0x2d0] sm:$0xff]
    %v255 = vld [vmem:[%s1 + $0x2d8] sm:$0xff]
    %v256 = vld [vmem:[%s1 + $0x2e0] sm:$0xff]
    %v257 = vld [vmem:[%s1 + $0x2e8] sm:$0xff]
    %v258 = vld [vmem:[%s1 + $0x2f0] sm:$0xff]
    %v259 = vld [vmem:[%s1 + $0x2f8] sm:$0xff]
    %v260 = vld [vmem:[%s1 + $0x300] sm:$0xff]
    %v261 = vld [vmem:[%s1 + $0x308] sm:$0xff]
    %v262 = vld [vmem:[%s1 + $0x310] sm:$0xff]
    %v263 = vld [vmem:[%s1 + $0x318] sm:$0xff]
    %v264 = vld [vmem:[%s1 + $0x320] sm:$0xff]
    %v265 = vld [vmem:[%s1 + $0x328] sm:$0xff]
    %v266 = vld [vmem:[%s1 + $0x330] sm:$0xff]
    %v267 = vld [vmem:[%s1 + $0x338] sm:$0xff]
    %v268 = vld [vmem:[%s1 + $0x340] sm:$0xff]
    %v269 = vld [vmem:[%s1 + $0x348] sm:$0xff]
    %v270 = vld [vmem:[%s1 + $0x350] sm:$0xff]
    %v271 = vld [vmem:[%s1 + $0x358] sm:$0xff]
    %v272 = vld [vmem:[%s1 + $0x360] sm:$0xff]
    %v273 = vld [vmem:[%s1 + $0x368] sm:$0xff]
    %v274 = vld [vmem:[%s1 + $0x370] sm:$0xff]
    %v275 = vld [vmem:[%s1 + $0x378] sm:$0xff]
    %v276 = vld [vmem:[%s1 + $0x380] sm:$0xff]
    %v277 = vld [vmem:[%s1 + $0x388] sm:$0xff]
    %v278 = vld [vmem:[%s1 + $0x390] sm:$0xff]
    %v279 = vld [vmem:[%s1 + $0x398] sm:$0xff]
    %v280 = vld [vmem:[%s1 + $0x3a0] sm:$0xff]
    %v281 = vld [vmem:[%s1 + $0x3a8] sm:$0xff]
    %v282 = vld [vmem:[%s1 + $0x3b0] sm:$0xff]
    %v283 = vld [vmem:[%s1 + $0x3b8] sm:$0xff]
    %v284 = vld [vmem:[%s1 + $0x3c0] sm:$0xff]
    %v285 = vld [vmem:[%s1 + $0x3c8] sm:$0xff]
    %v286 = vld [vmem:[%s1 + $0x3d0] sm:$0xff]
    %v287 = vld [vmem:[%s1 + $0x3d8] sm:$0xff]
    %v288 = vld [vmem:[%s1 + $0x3e0] sm:$0xff]
    %v289 = vld [vmem:[%s1 + $0x3e8] sm:$0xff]
    %v290 = vld [vmem:[%s1 + $0x3f0] sm:$0xff]
    %v291 = vld [vmem:[%s1 + $0x3f8] sm:$0xff]
    %v292 = vld [vmem:[%s1 + $0x400] sm:$0xff]
    %v293 = vld [vmem:[%s1 + $0x408] sm:$0xff]
    %v294 = vld [vmem:[%s1 + $0x410] sm:$0xff]
    %v295 = vld [vmem:[%s1 + $0x418] sm:$0xff]
    %v296 = vld [vmem:[%s1 + $0x420] sm:$0xff]
    %v297 = vld [vmem:[%s1 + $0x428] sm:$0xff]
    %v298 = vld [vmem:[%s1 + $0x430] sm:$0xff]
    %v299 = vld [vmem:[%s1 + $0x438] sm:$0xff]
    %v300 = vld [vmem:[%s1 + $0x440] sm:$0xff]
    %v301 = vld [vmem:[%s1 + $0x448] sm:$0xff]
    %v302 = vld [vmem:[%s1 + $0x450] sm:$0xff]
    %v303 = vld [vmem:[%s1 + $0x458] sm:$0xff]
    %v304 = vld [vmem:[%s1 + $0x460] sm:$0xff]
    %v305 = vld [vmem:[%s1 + $0x468] sm:$0xff]
    %v306 = vld [vmem:[%s1 + $0x470] sm:$0xff]
    %v307 = vld [vmem:[%s1 + $0x478] sm:$0xff]
    %v308 = vld [vmem:[%s1 + $0x480] sm:$0xff]
    %v309 = vld [vmem:[%s1 + $0x488] sm:$0xff]
    %v310 = vld [vmem:[%s1 + $0x490] sm:$0xff]
    %v311 = vld [vmem:[%s1 + $0x498] sm:$0xff]
    %v312 = vld [vmem:[%s1 + $0x4a0] sm:$0xff]
    %v313 = vld [vmem:[%s1 + $0x4a8] sm:$0xff]
    %v314 = vld [vmem:[%s1 + $0x4b0] sm:$0xff]
    %v315 = vld [vmem:[%s1 + $0x4b8] sm:$0xff]
    %v316 = vld [vmem:[%s1 + $0x4c0] sm:$0xff]
    %v317 = vld [vmem:[%s1 + $0x4c8] sm:$0xff]
    %v318 = vld [vmem:[%s1 + $0x4d0] sm:$0xff]
    %v319 = vld [vmem:[%s1 + $0x4d8] sm:$0xff]
    %v320 = vld [vmem:[%s1 + $0x4e0] sm:$0xff]
    %v321 = vld [vmem:[%s1 + $0x4e8] sm:$0xff]
    %v322 = vld [vmem:[%s1 + $0x4f0] sm:$0xff]
    %v323 = vld [vmem:[%s1 + $0x4f8] sm:$0xff]
    %v324 = vld [vmem:[%s1 + $0x500] sm:$0xff]
    %v325 = vld [vmem:[%s1 + $0x508] sm:$0xff]
    %v326 = vld [vmem:[%s1 + $0x510] sm:$0xff]
    %v327 = vld [vmem:[%s1 + $0x518] sm:$0xff]
    %v328 = vld [vmem:[%s1 + $0x520] sm:$0xff]
    %v329 = vld [vmem:[%s1 + $0x528] sm:$0xff]
    %v330 = vld [vmem:[%s1 + $0x530] sm:$0xff]
    %v331 = vld [vmem:[%s1 + $0x538] sm:$0xff]
    %v332 = vld [vmem:[%s1 + $0x540] sm:$0xff]
    %v333 = vld [vmem:[%s1 + $0x548] sm:$0xff]
    %v334 = vld [vmem:[%s1 + $0x550] sm:$0xff]
    %v335 = vld [vmem:[%s1 + $0x558] sm:$0xff]
    %v336 = vld [vmem:[%s1 + $0x560] sm:$0xff]
    %v337 = vld [vmem:[%s1 + $0x568] sm:$0xff]
    %v338 = vld [vmem:[%s1 + $0x570] sm:$0xff]
    %v339 = vld [vmem:[%s1 + $0x578] sm:$0xff]
    %v340 = vld [vmem:[%s1 + $0x580] sm:$0xff]
    %v341 = vld [vmem:[%s1 + $0x588] sm:$0xff]
    %v342 = vld [vmem:[%s1 + $0x590] sm:$0xff]
    %v343 = vld [vmem:[%s1 + $0x598] sm:$0xff]
    %v344 = vld [vmem:[%s1 + $0x5a0] sm:$0xff]
    %v345 = vld [vmem:[%s1 + $0x5a8] sm:$0xff]
    %v346 = vld [vmem:[%s1 + $0x5b0] sm:$0xff]
    %v347 = vld [vmem:[%s1 + $0x5b8] sm:$0xff]
    %v348 = vld [vmem:[%s1 + $0x5c0] sm:$0xff]
    %v349 = vld [vmem:[%s1 + $0x5c8] sm:$0xff]
    %v350 = vld [vmem:[%s1 + $0x5d0] sm:$0xff]
    %v351 = vld [vmem:[%s1 + $0x5d8] sm:$0xff]
    %v352 = vld [vmem:[%s1 + $0x5e0] sm:$0xff]
    %v353 = vld [vmem:[%s1 + $0x5e8] sm:$0xff]
    %v354 = vld [vmem:[%s1 + $0x5f0] sm:$0xff]
    %v355 = vld [vmem:[%s1 + $0x5f8] sm:$0xff]
    %v356 = vld [vmem:[%s1 + $0x600] sm:$0xff]
    %v357 = vld [vmem:[%s1 + $0x608] sm:$0xff]
    %v358 = vld [vmem:[%s1 + $0x610] sm:$0xff]
    %v359 = vld [vmem:[%s1 + $0x618] sm:$0xff]
    %v360 = vld [vmem:[%s2] sm:$0xf]
    %v362 = vlaneseq
    %v363 = vshrl.u32 %v362, 7
    %v364 = vsub.s32 0, %v363
    %v365 = vrot.slane %v360, %v364
    %v366 = vlaneseq
    %v367 = vshrl.u32 %v366, 7
    %v368 = vsub.s32 1, %v367
    %v369 = vrot.slane %v360, %v368
    %v370 = vlaneseq
    %v371 = vshrl.u32 %v370, 7
    %v372 = vsub.s32 2, %v371
    %v373 = vrot.slane %v360, %v372
    %v374 = vlaneseq
    %v375 = vshrl.u32 %v374, 7
    %v376 = vsub.s32 3, %v375
    %v377 = vrot.slane %v360, %v376
    %v510 = vunpack.c.l.b16 %v36
    %v511 = vunpack.c.h.b16 %v36
    %v512 = vunpack.c.l.b16 %v37
    %v513 = vunpack.c.h.b16 %v37
    %v514 = vunpack.c.l.b16 %v38
    %v515 = vunpack.c.h.b16 %v38
    %v516 = vunpack.c.l.b16 %v39
    %v517 = vunpack.c.l.b16 %v40
    %v518 = vunpack.c.h.b16 %v40
    %v519 = vunpack.c.l.b16 %v41
    %v520 = vunpack.c.h.b16 %v41
    %v521 = vunpack.c.l.b16 %v42
    %v522 = vunpack.c.h.b16 %v42
    %v523 = vunpack.c.l.b16 %v43
    %v524 = vunpack.c.l.b16 %v44
    %v525 = vunpack.c.h.b16 %v44
    %v526 = vunpack.c.l.b16 %v45
    %v527 = vunpack.c.h.b16 %v45
    %v528 = vunpack.c.l.b16 %v46
    %v529 = vunpack.c.h.b16 %v46
    %v530 = vunpack.c.l.b16 %v47
    %v531 = vunpack.c.l.b16 %v48
    %v532 = vunpack.c.h.b16 %v48
    %v533 = vunpack.c.l.b16 %v49
    %v534 = vunpack.c.h.b16 %v49
    %v535 = vunpack.c.l.b16 %v50
    %v536 = vunpack.c.h.b16 %v50
    %v537 = vunpack.c.l.b16 %v51
    %v538 = vunpack.c.l.b16 %v52
    %v539 = vunpack.c.h.b16 %v52
    %v540 = vunpack.c.l.b16 %v53
    %v541 = vunpack.c.h.b16 %v53
    %v542 = vunpack.c.l.b16 %v54
    %v543 = vunpack.c.h.b16 %v54
    %v544 = vunpack.c.l.b16 %v55
    %v545 = vunpack.c.l.b16 %v56
    %v546 = vunpack.c.h.b16 %v56
    %v547 = vunpack.c.l.b16 %v57
    %v548 = vunpack.c.h.b16 %v57
    %v549 = vunpack.c.l.b16 %v58
    %v550 = vunpack.c.h.b16 %v58
    %v551 = vunpack.c.l.b16 %v59
    %v552 = vunpack.c.l.b16 %v60
    %v553 = vunpack.c.h.b16 %v60
    %v554 = vunpack.c.l.b16 %v61
    %v555 = vunpack.c.h.b16 %v61
    %v556 = vunpack.c.l.b16 %v62
    %v557 = vunpack.c.h.b16 %v62
    %v558 = vunpack.c.l.b16 %v63
    %v559 = vunpack.c.l.b16 %v64
    %v560 = vunpack.c.h.b16 %v64
    %v561 = vunpack.c.l.b16 %v65
    %v562 = vunpack.c.h.b16 %v65
    %v563 = vunpack.c.l.b16 %v66
    %v564 = vunpack.c.h.b16 %v66
    %v565 = vunpack.c.l.b16 %v67
    %v566 = vunpack.c.l.b16 %v68
    %v567 = vunpack.c.h.b16 %v68
    %v568 = vunpack.c.l.b16 %v69
    %v569 = vunpack.c.h.b16 %v69
    %v570 = vunpack.c.l.b16 %v70
    %v571 = vunpack.c.h.b16 %v70
    %v572 = vunpack.c.l.b16 %v71
    %v573 = vunpack.c.l.b16 %v72
    %v574 = vunpack.c.h.b16 %v72
    %v575 = vunpack.c.l.b16 %v73
    %v576 = vunpack.c.h.b16 %v73
    %v577 = vunpack.c.l.b16 %v74
    %v578 = vunpack.c.h.b16 %v74
    %v579 = vunpack.c.l.b16 %v75
    %v580 = vunpack.c.l.b16 %v76
    %v581 = vunpack.c.h.b16 %v76
    %v582 = vunpack.c.l.b16 %v77
    %v583 = vunpack.c.h.b16 %v77
    %v584 = vunpack.c.l.b16 %v78
    %v585 = vunpack.c.h.b16 %v78
    %v586 = vunpack.c.l.b16 %v79
    %v587 = vunpack.c.l.b16 %v80
    %v588 = vunpack.c.h.b16 %v80
    %v589 = vunpack.c.l.b16 %v81
    %v590 = vunpack.c.h.b16 %v81
    %v591 = vunpack.c.l.b16 %v82
    %v592 = vunpack.c.h.b16 %v82
    %v593 = vunpack.c.l.b16 %v83
    %v594 = vunpack.c.l.b16 %v84
    %v595 = vunpack.c.h.b16 %v84
    %v596 = vunpack.c.l.b16 %v85
    %v597 = vunpack.c.h.b16 %v85
    %v598 = vunpack.c.l.b16 %v86
    %v599 = vunpack.c.h.b16 %v86
    %v600 = vunpack.c.l.b16 %v87
    %v601 = vunpack.c.l.b16 %v88
    %v602 = vunpack.c.h.b16 %v88
    %v603 = vunpack.c.l.b16 %v89
    %v604 = vunpack.c.h.b16 %v89
    %v605 = vunpack.c.l.b16 %v90
    %v606 = vunpack.c.h.b16 %v90
    %v607 = vunpack.c.l.b16 %v91
    %v608 = vunpack.c.l.b16 %v92
    %v609 = vunpack.c.h.b16 %v92
    %v610 = vunpack.c.l.b16 %v93
    %v611 = vunpack.c.h.b16 %v93
    %v612 = vunpack.c.l.b16 %v94
    %v613 = vunpack.c.h.b16 %v94
    %v614 = vunpack.c.l.b16 %v95
    %v615 = vunpack.c.l.b16 %v96
    %v616 = vunpack.c.h.b16 %v96
    %v617 = vunpack.c.l.b16 %v97
    %v618 = vunpack.c.h.b16 %v97
    %v619 = vunpack.c.l.b16 %v98
    %v620 = vunpack.c.h.b16 %v98
    %v621 = vunpack.c.l.b16 %v99
    %v622 = vunpack.c.l.b16 %v100
    %v623 = vunpack.c.h.b16 %v100
    %v624 = vunpack.c.l.b16 %v101
    %v625 = vunpack.c.h.b16 %v101
    %v626 = vunpack.c.l.b16 %v102
    %v627 = vunpack.c.h.b16 %v102
    %v628 = vunpack.c.l.b16 %v103
    %v629 = vunpack.c.l.b16 %v104
    %v630 = vunpack.c.h.b16 %v104
    %v631 = vunpack.c.l.b16 %v105
    %v632 = vunpack.c.h.b16 %v105
    %v633 = vunpack.c.l.b16 %v106
    %v634 = vunpack.c.h.b16 %v106
    %v635 = vunpack.c.l.b16 %v107
    %v636 = vunpack.c.l.b16 %v108
    %v637 = vunpack.c.h.b16 %v108
    %v638 = vunpack.c.l.b16 %v109
    %v639 = vunpack.c.h.b16 %v109
    %v640 = vunpack.c.l.b16 %v110
    %v641 = vunpack.c.h.b16 %v110
    %v642 = vunpack.c.l.b16 %v111
    %v643 = vunpack.c.l.b16 %v112
    %v644 = vunpack.c.h.b16 %v112
    %v645 = vunpack.c.l.b16 %v113
    %v646 = vunpack.c.h.b16 %v113
    %v647 = vunpack.c.l.b16 %v114
    %v648 = vunpack.c.h.b16 %v114
    %v649 = vunpack.c.l.b16 %v115
    %v650 = vunpack.c.l.b16 %v116
    %v651 = vunpack.c.h.b16 %v116
    %v652 = vunpack.c.l.b16 %v117
    %v653 = vunpack.c.h.b16 %v117
    %v654 = vunpack.c.l.b16 %v118
    %v655 = vunpack.c.h.b16 %v118
    %v656 = vunpack.c.l.b16 %v119
    %v657 = vunpack.c.l.b16 %v120
    %v658 = vunpack.c.h.b16 %v120
    %v659 = vunpack.c.l.b16 %v121
    %v660 = vunpack.c.h.b16 %v121
    %v661 = vunpack.c.l.b16 %v122
    %v662 = vunpack.c.h.b16 %v122
    %v663 = vunpack.c.l.b16 %v123
    %v664 = vunpack.c.l.b16 %v124
    %v665 = vunpack.c.h.b16 %v124
    %v666 = vunpack.c.l.b16 %v125
    %v667 = vunpack.c.h.b16 %v125
    %v668 = vunpack.c.l.b16 %v126
    %v669 = vunpack.c.h.b16 %v126
    %v670 = vunpack.c.l.b16 %v127
    %v671 = vunpack.c.l.b16 %v128
    %v672 = vunpack.c.h.b16 %v128
    %v673 = vunpack.c.l.b16 %v129
    %v674 = vunpack.c.h.b16 %v129
    %v675 = vunpack.c.l.b16 %v130
    %v676 = vunpack.c.h.b16 %v130
    %v677 = vunpack.c.l.b16 %v131
    %v678 = vunpack.c.l.b16 %v132
    %v679 = vunpack.c.h.b16 %v132
    %v680 = vunpack.c.l.b16 %v133
    %v681 = vunpack.c.h.b16 %v133
    %v682 = vunpack.c.l.b16 %v134
    %v683 = vunpack.c.h.b16 %v134
    %v684 = vunpack.c.l.b16 %v135
    %v685 = vunpack.c.l.b16 %v136
    %v686 = vunpack.c.h.b16 %v136
    %v687 = vunpack.c.l.b16 %v137
    %v688 = vunpack.c.h.b16 %v137
    %v689 = vunpack.c.l.b16 %v138
    %v690 = vunpack.c.h.b16 %v138
    %v691 = vunpack.c.l.b16 %v139
    %v692 = vunpack.c.l.b16 %v140
    %v693 = vunpack.c.h.b16 %v140
    %v694 = vunpack.c.l.b16 %v141
    %v695 = vunpack.c.h.b16 %v141
    %v696 = vunpack.c.l.b16 %v142
    %v697 = vunpack.c.h.b16 %v142
    %v698 = vunpack.c.l.b16 %v143
    %v699 = vunpack.c.l.b16 %v144
    %v700 = vunpack.c.h.b16 %v144
    %v701 = vunpack.c.l.b16 %v145
    %v702 = vunpack.c.h.b16 %v145
    %v703 = vunpack.c.l.b16 %v146
    %v704 = vunpack.c.h.b16 %v146
    %v705 = vunpack.c.l.b16 %v147
    %v706 = vunpack.c.l.b16 %v148
    %v707 = vunpack.c.h.b16 %v148
    %v708 = vunpack.c.l.b16 %v149
    %v709 = vunpack.c.h.b16 %v149
    %v710 = vunpack.c.l.b16 %v150
    %v711 = vunpack.c.h.b16 %v150
    %v712 = vunpack.c.l.b16 %v151
    %v713 = vunpack.c.l.b16 %v152
    %v714 = vunpack.c.h.b16 %v152
    %v715 = vunpack.c.l.b16 %v153
    %v716 = vunpack.c.h.b16 %v153
    %v717 = vunpack.c.l.b16 %v154
    %v718 = vunpack.c.h.b16 %v154
    %v719 = vunpack.c.l.b16 %v155
    %v720 = vunpack.c.l.b16 %v156
    %v721 = vunpack.c.h.b16 %v156
    %v722 = vunpack.c.l.b16 %v157
    %v723 = vunpack.c.h.b16 %v157
    %v724 = vunpack.c.l.b16 %v158
    %v725 = vunpack.c.h.b16 %v158
    %v726 = vunpack.c.l.b16 %v159
    %v727 = vunpack.c.l.b16 %v160
    %v728 = vunpack.c.h.b16 %v160
    %v729 = vunpack.c.l.b16 %v161
    %v730 = vunpack.c.h.b16 %v161
    %v731 = vunpack.c.l.b16 %v162
    %v732 = vunpack.c.h.b16 %v162
    %v733 = vunpack.c.l.b16 %v163
    %v734 = vpack.c.b16 %v517, %v510
    %v735 = vpack.c.b16 %v518, %v511
    %v736 = vpack.c.b16 %v519, %v512
    %v737 = vpack.c.b16 %v520, %v513
    %v738 = vpack.c.b16 %v521, %v514
    %v739 = vpack.c.b16 %v522, %v515
    %v740 = vpack.c.b16 %v523, %v516
    %v741 = vpack.c.b16 %v531, %v524
    %v742 = vpack.c.b16 %v532, %v525
    %v743 = vpack.c.b16 %v533, %v526
    %v744 = vpack.c.b16 %v534, %v527
    %v745 = vpack.c.b16 %v535, %v528
    %v746 = vpack.c.b16 %v536, %v529
    %v747 = vpack.c.b16 %v537, %v530
    %v748 = vpack.c.b16 %v545, %v538
    %v749 = vpack.c.b16 %v546, %v539
    %v750 = vpack.c.b16 %v547, %v540
    %v751 = vpack.c.b16 %v548, %v541
    %v752 = vpack.c.b16 %v549, %v542
    %v753 = vpack.c.b16 %v550, %v543
    %v754 = vpack.c.b16 %v551, %v544
    %v755 = vpack.c.b16 %v559, %v552
    %v756 = vpack.c.b16 %v560, %v553
    %v757 = vpack.c.b16 %v561, %v554
    %v758 = vpack.c.b16 %v562, %v555
    %v759 = vpack.c.b16 %v563, %v556
    %v760 = vpack.c.b16 %v564, %v557
    %v761 = vpack.c.b16 %v565, %v558
    %v762 = vpack.c.b16 %v573, %v566
    %v763 = vpack.c.b16 %v574, %v567
    %v764 = vpack.c.b16 %v575, %v568
    %v765 = vpack.c.b16 %v576, %v569
    %v766 = vpack.c.b16 %v577, %v570
    %v767 = vpack.c.b16 %v578, %v571
    %v768 = vpack.c.b16 %v579, %v572
    %v769 = vpack.c.b16 %v587, %v580
    %v770 = vpack.c.b16 %v588, %v581
    %v771 = vpack.c.b16 %v589, %v582
    %v772 = vpack.c.b16 %v590, %v583
    %v773 = vpack.c.b16 %v591, %v584
    %v774 = vpack.c.b16 %v592, %v585
    %v775 = vpack.c.b16 %v593, %v586
    %v776 = vpack.c.b16 %v601, %v594
    %v777 = vpack.c.b16 %v602, %v595
    %v778 = vpack.c.b16 %v603, %v596
    %v779 = vpack.c.b16 %v604, %v597
    %v780 = vpack.c.b16 %v605, %v598
    %v781 = vpack.c.b16 %v606, %v599
    %v782 = vpack.c.b16 %v607, %v600
    %v783 = vpack.c.b16 %v615, %v608
    %v784 = vpack.c.b16 %v616, %v609
    %v785 = vpack.c.b16 %v617, %v610
    %v786 = vpack.c.b16 %v618, %v611
    %v787 = vpack.c.b16 %v619, %v612
    %v788 = vpack.c.b16 %v620, %v613
    %v789 = vpack.c.b16 %v621, %v614
    %v790 = vpack.c.b16 %v629, %v622
    %v791 = vpack.c.b16 %v630, %v623
    %v792 = vpack.c.b16 %v631, %v624
    %v793 = vpack.c.b16 %v632, %v625
    %v794 = vpack.c.b16 %v633, %v626
    %v795 = vpack.c.b16 %v634, %v627
    %v796 = vpack.c.b16 %v635, %v628
    %v797 = vpack.c.b16 %v643, %v636
    %v798 = vpack.c.b16 %v644, %v637
    %v799 = vpack.c.b16 %v645, %v638
    %v800 = vpack.c.b16 %v646, %v639
    %v801 = vpack.c.b16 %v647, %v640
    %v802 = vpack.c.b16 %v648, %v641
    %v803 = vpack.c.b16 %v649, %v642
    %v804 = vpack.c.b16 %v657, %v650
    %v805 = vpack.c.b16 %v658, %v651
    %v806 = vpack.c.b16 %v659, %v652
    %v807 = vpack.c.b16 %v660, %v653
    %v808 = vpack.c.b16 %v661, %v654
    %v809 = vpack.c.b16 %v662, %v655
    %v810 = vpack.c.b16 %v663, %v656
    %v811 = vpack.c.b16 %v671, %v664
    %v812 = vpack.c.b16 %v672, %v665
    %v813 = vpack.c.b16 %v673, %v666
    %v814 = vpack.c.b16 %v674, %v667
    %v815 = vpack.c.b16 %v675, %v668
    %v816 = vpack.c.b16 %v676, %v669
    %v817 = vpack.c.b16 %v677, %v670
    %v818 = vpack.c.b16 %v685, %v678
    %v819 = vpack.c.b16 %v686, %v679
    %v820 = vpack.c.b16 %v687, %v680
    %v821 = vpack.c.b16 %v688, %v681
    %v822 = vpack.c.b16 %v689, %v682
    %v823 = vpack.c.b16 %v690, %v683
    %v824 = vpack.c.b16 %v691, %v684
    %v825 = vpack.c.b16 %v699, %v692
    %v826 = vpack.c.b16 %v700, %v693
    %v827 = vpack.c.b16 %v701, %v694
    %v828 = vpack.c.b16 %v702, %v695
    %v829 = vpack.c.b16 %v703, %v696
    %v830 = vpack.c.b16 %v704, %v697
    %v831 = vpack.c.b16 %v705, %v698
    %v832 = vpack.c.b16 %v713, %v706
    %v833 = vpack.c.b16 %v714, %v707
    %v834 = vpack.c.b16 %v715, %v708
    %v835 = vpack.c.b16 %v716, %v709
    %v836 = vpack.c.b16 %v717, %v710
    %v837 = vpack.c.b16 %v718, %v711
    %v838 = vpack.c.b16 %v719, %v712
    %v839 = vpack.c.b16 %v727, %v720
    %v840 = vpack.c.b16 %v728, %v721
    %v841 = vpack.c.b16 %v729, %v722
    %v842 = vpack.c.b16 %v730, %v723
    %v843 = vpack.c.b16 %v731, %v724
    %v844 = vpack.c.b16 %v732, %v725
    %v845 = vpack.c.b16 %v733, %v726
    %v1138 = vunpack.c.l.b16 %v164
    %v1139 = vunpack.c.h.b16 %v164
    %v1140 = vunpack.c.l.b16 %v165
    %v1141 = vunpack.c.h.b16 %v165
    %v1142 = vunpack.c.l.b16 %v166
    %v1143 = vunpack.c.h.b16 %v166
    %v1144 = vunpack.c.l.b16 %v167
    %v1145 = vunpack.c.h.b16 %v167
    %v1146 = vunpack.c.l.b16 %v168
    %v1147 = vunpack.c.h.b16 %v168
    %v1148 = vunpack.c.l.b16 %v169
    %v1149 = vunpack.c.h.b16 %v169
    %v1150 = vunpack.c.l.b16 %v170
    %v1151 = vunpack.c.h.b16 %v170
    %v1152 = vunpack.c.l.b16 %v171
    %v1153 = vunpack.c.h.b16 %v171
    %v1154 = vunpack.c.l.b16 %v172
    %v1155 = vunpack.c.h.b16 %v172
    %v1156 = vunpack.c.l.b16 %v173
    %v1157 = vunpack.c.h.b16 %v173
    %v1158 = vunpack.c.l.b16 %v174
    %v1159 = vunpack.c.h.b16 %v174
    %v1160 = vunpack.c.l.b16 %v175
    %v1161 = vunpack.c.h.b16 %v175
    %v1162 = vunpack.c.l.b16 %v176
    %v1163 = vunpack.c.h.b16 %v176
    %v1164 = vunpack.c.l.b16 %v177
    %v1165 = vunpack.c.h.b16 %v177
    %v1166 = vunpack.c.l.b16 %v178
    %v1167 = vunpack.c.h.b16 %v178
    %v1168 = vunpack.c.l.b16 %v179
    %v1169 = vunpack.c.h.b16 %v179
    %v1170 = vunpack.c.l.b16 %v180
    %v1171 = vunpack.c.h.b16 %v180
    %v1172 = vunpack.c.l.b16 %v181
    %v1173 = vunpack.c.h.b16 %v181
    %v1174 = vunpack.c.l.b16 %v182
    %v1175 = vunpack.c.h.b16 %v182
    %v1176 = vunpack.c.l.b16 %v183
    %v1177 = vunpack.c.h.b16 %v183
    %v1178 = vunpack.c.l.b16 %v184
    %v1179 = vunpack.c.h.b16 %v184
    %v1180 = vunpack.c.l.b16 %v185
    %v1181 = vunpack.c.h.b16 %v185
    %v1182 = vunpack.c.l.b16 %v186
    %v1183 = vunpack.c.h.b16 %v186
    %v1184 = vunpack.c.l.b16 %v187
    %v1185 = vunpack.c.h.b16 %v187
    %v1186 = vunpack.c.l.b16 %v188
    %v1187 = vunpack.c.h.b16 %v188
    %v1188 = vunpack.c.l.b16 %v189
    %v1189 = vunpack.c.h.b16 %v189
    %v1190 = vunpack.c.l.b16 %v190
    %v1191 = vunpack.c.h.b16 %v190
    %v1192 = vunpack.c.l.b16 %v191
    %v1193 = vunpack.c.h.b16 %v191
    %v1194 = vunpack.c.l.b16 %v192
    %v1195 = vunpack.c.h.b16 %v192
    %v1196 = vunpack.c.l.b16 %v193
    %v1197 = vunpack.c.h.b16 %v193
    %v1198 = vunpack.c.l.b16 %v194
    %v1199 = vunpack.c.h.b16 %v194
    %v1200 = vunpack.c.l.b16 %v195
    %v1201 = vunpack.c.h.b16 %v195
    %v1202 = vunpack.c.l.b16 %v196
    %v1203 = vunpack.c.h.b16 %v196
    %v1204 = vunpack.c.l.b16 %v197
    %v1205 = vunpack.c.h.b16 %v197
    %v1206 = vunpack.c.l.b16 %v198
    %v1207 = vunpack.c.h.b16 %v198
    %v1208 = vunpack.c.l.b16 %v199
    %v1209 = vunpack.c.h.b16 %v199
    %v1210 = vunpack.c.l.b16 %v200
    %v1211 = vunpack.c.h.b16 %v200
    %v1212 = vunpack.c.l.b16 %v201
    %v1213 = vunpack.c.h.b16 %v201
    %v1214 = vunpack.c.l.b16 %v202
    %v1215 = vunpack.c.h.b16 %v202
    %v1216 = vunpack.c.l.b16 %v203
    %v1217 = vunpack.c.h.b16 %v203
    %v1218 = vunpack.c.l.b16 %v204
    %v1219 = vunpack.c.h.b16 %v204
    %v1220 = vunpack.c.l.b16 %v205
    %v1221 = vunpack.c.h.b16 %v205
    %v1222 = vunpack.c.l.b16 %v206
    %v1223 = vunpack.c.h.b16 %v206
    %v1224 = vunpack.c.l.b16 %v207
    %v1225 = vunpack.c.h.b16 %v207
    %v1226 = vunpack.c.l.b16 %v208
    %v1227 = vunpack.c.h.b16 %v208
    %v1228 = vunpack.c.l.b16 %v209
    %v1229 = vunpack.c.h.b16 %v209
    %v1230 = vunpack.c.l.b16 %v210
    %v1231 = vunpack.c.h.b16 %v210
    %v1232 = vunpack.c.l.b16 %v211
    %v1233 = vunpack.c.h.b16 %v211
    %v1234 = vunpack.c.l.b16 %v212
    %v1235 = vunpack.c.h.b16 %v212
    %v1236 = vunpack.c.l.b16 %v213
    %v1237 = vunpack.c.h.b16 %v213
    %v1238 = vunpack.c.l.b16 %v214
    %v1239 = vunpack.c.h.b16 %v214
    %v1240 = vunpack.c.l.b16 %v215
    %v1241 = vunpack.c.h.b16 %v215
    %v1242 = vunpack.c.l.b16 %v216
    %v1243 = vunpack.c.h.b16 %v216
    %v1244 = vunpack.c.l.b16 %v217
    %v1245 = vunpack.c.h.b16 %v217
    %v1246 = vunpack.c.l.b16 %v218
    %v1247 = vunpack.c.h.b16 %v218
    %v1248 = vunpack.c.l.b16 %v219
    %v1249 = vunpack.c.h.b16 %v219
    %v1250 = vunpack.c.l.b16 %v220
    %v1251 = vunpack.c.h.b16 %v220
    %v1252 = vunpack.c.l.b16 %v221
    %v1253 = vunpack.c.h.b16 %v221
    %v1254 = vunpack.c.l.b16 %v222
    %v1255 = vunpack.c.h.b16 %v222
    %v1256 = vunpack.c.l.b16 %v223
    %v1257 = vunpack.c.h.b16 %v223
    %v1258 = vunpack.c.l.b16 %v224
    %v1259 = vunpack.c.h.b16 %v224
    %v1260 = vunpack.c.l.b16 %v225
    %v1261 = vunpack.c.h.b16 %v225
    %v1262 = vunpack.c.l.b16 %v226
    %v1263 = vunpack.c.h.b16 %v226
    %v1264 = vunpack.c.l.b16 %v227
    %v1265 = vunpack.c.h.b16 %v227
    %v1266 = vunpack.c.l.b16 %v228
    %v1267 = vunpack.c.h.b16 %v228
    %v1268 = vunpack.c.l.b16 %v229
    %v1269 = vunpack.c.h.b16 %v229
    %v1270 = vunpack.c.l.b16 %v230
    %v1271 = vunpack.c.h.b16 %v230
    %v1272 = vunpack.c.l.b16 %v231
    %v1273 = vunpack.c.h.b16 %v231
    %v1274 = vunpack.c.l.b16 %v232
    %v1275 = vunpack.c.h.b16 %v232
    %v1276 = vunpack.c.l.b16 %v233
    %v1277 = vunpack.c.h.b16 %v233
    %v1278 = vunpack.c.l.b16 %v234
    %v1279 = vunpack.c.h.b16 %v234
    %v1280 = vunpack.c.l.b16 %v235
    %v1281 = vunpack.c.h.b16 %v235
    %v1282 = vunpack.c.l.b16 %v236
    %v1283 = vunpack.c.h.b16 %v236
    %v1284 = vunpack.c.l.b16 %v237
    %v1285 = vunpack.c.h.b16 %v237
    %v1286 = vunpack.c.l.b16 %v238
    %v1287 = vunpack.c.h.b16 %v238
    %v1288 = vunpack.c.l.b16 %v239
    %v1289 = vunpack.c.h.b16 %v239
    %v1290 = vunpack.c.l.b16 %v240
    %v1291 = vunpack.c.h.b16 %v240
    %v1292 = vunpack.c.l.b16 %v241
    %v1293 = vunpack.c.h.b16 %v241
    %v1294 = vunpack.c.l.b16 %v242
    %v1295 = vunpack.c.h.b16 %v242
    %v1296 = vunpack.c.l.b16 %v243
    %v1297 = vunpack.c.h.b16 %v243
    %v1298 = vunpack.c.l.b16 %v244
    %v1299 = vunpack.c.h.b16 %v244
    %v1300 = vunpack.c.l.b16 %v245
    %v1301 = vunpack.c.h.b16 %v245
    %v1302 = vunpack.c.l.b16 %v246
    %v1303 = vunpack.c.h.b16 %v246
    %v1304 = vunpack.c.l.b16 %v247
    %v1305 = vunpack.c.h.b16 %v247
    %v1306 = vunpack.c.l.b16 %v248
    %v1307 = vunpack.c.h.b16 %v248
    %v1308 = vunpack.c.l.b16 %v249
    %v1309 = vunpack.c.h.b16 %v249
    %v1310 = vunpack.c.l.b16 %v250
    %v1311 = vunpack.c.h.b16 %v250
    %v1312 = vunpack.c.l.b16 %v251
    %v1313 = vunpack.c.h.b16 %v251
    %v1314 = vunpack.c.l.b16 %v252
    %v1315 = vunpack.c.h.b16 %v252
    %v1316 = vunpack.c.l.b16 %v253
    %v1317 = vunpack.c.h.b16 %v253
    %v1318 = vunpack.c.l.b16 %v254
    %v1319 = vunpack.c.h.b16 %v254
    %v1320 = vunpack.c.l.b16 %v255
    %v1321 = vunpack.c.h.b16 %v255
    %v1322 = vunpack.c.l.b16 %v256
    %v1323 = vunpack.c.h.b16 %v256
    %v1324 = vunpack.c.l.b16 %v257
    %v1325 = vunpack.c.h.b16 %v257
    %v1326 = vunpack.c.l.b16 %v258
    %v1327 = vunpack.c.h.b16 %v258
    %v1328 = vunpack.c.l.b16 %v259
    %v1329 = vunpack.c.h.b16 %v259
    %v1330 = vunpack.c.l.b16 %v260
    %v1331 = vunpack.c.h.b16 %v260
    %v1332 = vunpack.c.l.b16 %v261
    %v1333 = vunpack.c.h.b16 %v261
    %v1334 = vunpack.c.l.b16 %v262
    %v1335 = vunpack.c.h.b16 %v262
    %v1336 = vunpack.c.l.b16 %v263
    %v1337 = vunpack.c.h.b16 %v263
    %v1338 = vunpack.c.l.b16 %v264
    %v1339 = vunpack.c.h.b16 %v264
    %v1340 = vunpack.c.l.b16 %v265
    %v1341 = vunpack.c.h.b16 %v265
    %v1342 = vunpack.c.l.b16 %v266
    %v1343 = vunpack.c.h.b16 %v266
    %v1344 = vunpack.c.l.b16 %v267
    %v1345 = vunpack.c.h.b16 %v267
    %v1346 = vunpack.c.l.b16 %v268
    %v1347 = vunpack.c.h.b16 %v268
    %v1348 = vunpack.c.l.b16 %v269
    %v1349 = vunpack.c.h.b16 %v269
    %v1350 = vunpack.c.l.b16 %v270
    %v1351 = vunpack.c.h.b16 %v270
    %v1352 = vunpack.c.l.b16 %v271
    %v1353 = vunpack.c.h.b16 %v271
    %v1354 = vunpack.c.l.b16 %v272
    %v1355 = vunpack.c.h.b16 %v272
    %v1356 = vunpack.c.l.b16 %v273
    %v1357 = vunpack.c.h.b16 %v273
    %v1358 = vunpack.c.l.b16 %v274
    %v1359 = vunpack.c.h.b16 %v274
    %v1360 = vunpack.c.l.b16 %v275
    %v1361 = vunpack.c.h.b16 %v275
    %v1362 = vunpack.c.l.b16 %v276
    %v1363 = vunpack.c.h.b16 %v276
    %v1364 = vunpack.c.l.b16 %v277
    %v1365 = vunpack.c.h.b16 %v277
    %v1366 = vunpack.c.l.b16 %v278
    %v1367 = vunpack.c.h.b16 %v278
    %v1368 = vunpack.c.l.b16 %v279
    %v1369 = vunpack.c.h.b16 %v279
    %v1370 = vunpack.c.l.b16 %v280
    %v1371 = vunpack.c.h.b16 %v280
    %v1372 = vunpack.c.l.b16 %v281
    %v1373 = vunpack.c.h.b16 %v281
    %v1374 = vunpack.c.l.b16 %v282
    %v1375 = vunpack.c.h.b16 %v282
    %v1376 = vunpack.c.l.b16 %v283
    %v1377 = vunpack.c.h.b16 %v283
    %v1378 = vunpack.c.l.b16 %v284
    %v1379 = vunpack.c.h.b16 %v284
    %v1380 = vunpack.c.l.b16 %v285
    %v1381 = vunpack.c.h.b16 %v285
    %v1382 = vunpack.c.l.b16 %v286
    %v1383 = vunpack.c.h.b16 %v286
    %v1384 = vunpack.c.l.b16 %v287
    %v1385 = vunpack.c.h.b16 %v287
    %v1386 = vunpack.c.l.b16 %v288
    %v1387 = vunpack.c.h.b16 %v288
    %v1388 = vunpack.c.l.b16 %v289
    %v1389 = vunpack.c.h.b16 %v289
    %v1390 = vunpack.c.l.b16 %v290
    %v1391 = vunpack.c.h.b16 %v290
    %v1392 = vunpack.c.l.b16 %v291
    %v1393 = vunpack.c.h.b16 %v291
    %v1394 = vunpack.c.l.b16 %v292
    %v1395 = vunpack.c.h.b16 %v292
    %v1396 = vunpack.c.l.b16 %v293
    %v1397 = vunpack.c.h.b16 %v293
    %v1398 = vunpack.c.l.b16 %v294
    %v1399 = vunpack.c.h.b16 %v294
    %v1400 = vunpack.c.l.b16 %v295
    %v1401 = vunpack.c.h.b16 %v295
    %v1402 = vunpack.c.l.b16 %v296
    %v1403 = vunpack.c.h.b16 %v296
    %v1404 = vunpack.c.l.b16 %v297
    %v1405 = vunpack.c.h.b16 %v297
    %v1406 = vunpack.c.l.b16 %v298
    %v1407 = vunpack.c.h.b16 %v298
    %v1408 = vunpack.c.l.b16 %v299
    %v1409 = vunpack.c.h.b16 %v299
    %v1410 = vunpack.c.l.b16 %v300
    %v1411 = vunpack.c.h.b16 %v300
    %v1412 = vunpack.c.l.b16 %v301
    %v1413 = vunpack.c.h.b16 %v301
    %v1414 = vunpack.c.l.b16 %v302
    %v1415 = vunpack.c.h.b16 %v302
    %v1416 = vunpack.c.l.b16 %v303
    %v1417 = vunpack.c.h.b16 %v303
    %v1418 = vunpack.c.l.b16 %v304
    %v1419 = vunpack.c.h.b16 %v304
    %v1420 = vunpack.c.l.b16 %v305
    %v1421 = vunpack.c.h.b16 %v305
    %v1422 = vunpack.c.l.b16 %v306
    %v1423 = vunpack.c.h.b16 %v306
    %v1424 = vunpack.c.l.b16 %v307
    %v1425 = vunpack.c.h.b16 %v307
    %v1426 = vunpack.c.l.b16 %v308
    %v1427 = vunpack.c.h.b16 %v308
    %v1428 = vunpack.c.l.b16 %v309
    %v1429 = vunpack.c.h.b16 %v309
    %v1430 = vunpack.c.l.b16 %v310
    %v1431 = vunpack.c.h.b16 %v310
    %v1432 = vunpack.c.l.b16 %v311
    %v1433 = vunpack.c.h.b16 %v311
    %v1434 = vunpack.c.l.b16 %v312
    %v1435 = vunpack.c.h.b16 %v312
    %v1436 = vunpack.c.l.b16 %v313
    %v1437 = vunpack.c.h.b16 %v313
    %v1438 = vunpack.c.l.b16 %v314
    %v1439 = vunpack.c.h.b16 %v314
    %v1440 = vunpack.c.l.b16 %v315
    %v1441 = vunpack.c.h.b16 %v315
    %v1442 = vunpack.c.l.b16 %v316
    %v1443 = vunpack.c.h.b16 %v316
    %v1444 = vunpack.c.l.b16 %v317
    %v1445 = vunpack.c.h.b16 %v317
    %v1446 = vunpack.c.l.b16 %v318
    %v1447 = vunpack.c.h.b16 %v318
    %v1448 = vunpack.c.l.b16 %v319
    %v1449 = vunpack.c.h.b16 %v319
    %v1450 = vunpack.c.l.b16 %v320
    %v1451 = vunpack.c.h.b16 %v320
    %v1452 = vunpack.c.l.b16 %v321
    %v1453 = vunpack.c.h.b16 %v321
    %v1454 = vunpack.c.l.b16 %v322
    %v1455 = vunpack.c.h.b16 %v322
    %v1456 = vunpack.c.l.b16 %v323
    %v1457 = vunpack.c.h.b16 %v323
    %v1458 = vunpack.c.l.b16 %v324
    %v1459 = vunpack.c.h.b16 %v324
    %v1460 = vunpack.c.l.b16 %v325
    %v1461 = vunpack.c.h.b16 %v325
    %v1462 = vunpack.c.l.b16 %v326
    %v1463 = vunpack.c.h.b16 %v326
    %v1464 = vunpack.c.l.b16 %v327
    %v1465 = vunpack.c.h.b16 %v327
    %v1466 = vunpack.c.l.b16 %v328
    %v1467 = vunpack.c.h.b16 %v328
    %v1468 = vunpack.c.l.b16 %v329
    %v1469 = vunpack.c.h.b16 %v329
    %v1470 = vunpack.c.l.b16 %v330
    %v1471 = vunpack.c.h.b16 %v330
    %v1472 = vunpack.c.l.b16 %v331
    %v1473 = vunpack.c.h.b16 %v331
    %v1474 = vunpack.c.l.b16 %v332
    %v1475 = vunpack.c.h.b16 %v332
    %v1476 = vunpack.c.l.b16 %v333
    %v1477 = vunpack.c.h.b16 %v333
    %v1478 = vunpack.c.l.b16 %v334
    %v1479 = vunpack.c.h.b16 %v334
    %v1480 = vunpack.c.l.b16 %v335
    %v1481 = vunpack.c.h.b16 %v335
    %v1482 = vunpack.c.l.b16 %v336
    %v1483 = vunpack.c.h.b16 %v336
    %v1484 = vunpack.c.l.b16 %v337
    %v1485 = vunpack.c.h.b16 %v337
    %v1486 = vunpack.c.l.b16 %v338
    %v1487 = vunpack.c.h.b16 %v338
    %v1488 = vunpack.c.l.b16 %v339
    %v1489 = vunpack.c.h.b16 %v339
    %v1490 = vunpack.c.l.b16 %v340
    %v1491 = vunpack.c.h.b16 %v340
    %v1492 = vunpack.c.l.b16 %v341
    %v1493 = vunpack.c.h.b16 %v341
    %v1494 = vunpack.c.l.b16 %v342
    %v1495 = vunpack.c.h.b16 %v342
    %v1496 = vunpack.c.l.b16 %v343
    %v1497 = vunpack.c.h.b16 %v343
    %v1498 = vunpack.c.l.b16 %v344
    %v1499 = vunpack.c.h.b16 %v344
    %v1500 = vunpack.c.l.b16 %v345
    %v1501 = vunpack.c.h.b16 %v345
    %v1502 = vunpack.c.l.b16 %v346
    %v1503 = vunpack.c.h.b16 %v346
    %v1504 = vunpack.c.l.b16 %v347
    %v1505 = vunpack.c.h.b16 %v347
    %v1506 = vunpack.c.l.b16 %v348
    %v1507 = vunpack.c.h.b16 %v348
    %v1508 = vunpack.c.l.b16 %v349
    %v1509 = vunpack.c.h.b16 %v349
    %v1510 = vunpack.c.l.b16 %v350
    %v1511 = vunpack.c.h.b16 %v350
    %v1512 = vunpack.c.l.b16 %v351
    %v1513 = vunpack.c.h.b16 %v351
    %v1514 = vunpack.c.l.b16 %v352
    %v1515 = vunpack.c.h.b16 %v352
    %v1516 = vunpack.c.l.b16 %v353
    %v1517 = vunpack.c.h.b16 %v353
    %v1518 = vunpack.c.l.b16 %v354
    %v1519 = vunpack.c.h.b16 %v354
    %v1520 = vunpack.c.l.b16 %v355
    %v1521 = vunpack.c.h.b16 %v355
    %v1522 = vunpack.c.l.b16 %v356
    %v1523 = vunpack.c.h.b16 %v356
    %v1524 = vunpack.c.l.b16 %v357
    %v1525 = vunpack.c.h.b16 %v357
    %v1526 = vunpack.c.l.b16 %v358
    %v1527 = vunpack.c.h.b16 %v358
    %v1528 = vunpack.c.l.b16 %v359
    %v1529 = vunpack.c.h.b16 %v359
    %v1530 = vpack.c.b16 %v1142, %v1138
    %v1531 = vpack.c.b16 %v1143, %v1139
    %v1532 = vpack.c.b16 %v1144, %v1140
    %v1533 = vpack.c.b16 %v1145, %v1141
    %v1534 = vpack.c.b16 %v1150, %v1146
    %v1535 = vpack.c.b16 %v1151, %v1147
    %v1536 = vpack.c.b16 %v1152, %v1148
    %v1537 = vpack.c.b16 %v1153, %v1149
    %v1538 = vpack.c.b16 %v1158, %v1154
    %v1539 = vpack.c.b16 %v1159, %v1155
    %v1540 = vpack.c.b16 %v1160, %v1156
    %v1541 = vpack.c.b16 %v1161, %v1157
    %v1542 = vpack.c.b16 %v1166, %v1162
    %v1543 = vpack.c.b16 %v1167, %v1163
    %v1544 = vpack.c.b16 %v1168, %v1164
    %v1545 = vpack.c.b16 %v1169, %v1165
    %v1546 = vpack.c.b16 %v1174, %v1170
    %v1547 = vpack.c.b16 %v1175, %v1171
    %v1548 = vpack.c.b16 %v1176, %v1172
    %v1549 = vpack.c.b16 %v1177, %v1173
    %v1550 = vpack.c.b16 %v1182, %v1178
    %v1551 = vpack.c.b16 %v1183, %v1179
    %v1552 = vpack.c.b16 %v1184, %v1180
    %v1553 = vpack.c.b16 %v1185, %v1181
    %v1554 = vpack.c.b16 %v1190, %v1186
    %v1555 = vpack.c.b16 %v1191, %v1187
    %v1556 = vpack.c.b16 %v1192, %v1188
    %v1557 = vpack.c.b16 %v1193, %v1189
    %v1558 = vpack.c.b16 %v1198, %v1194
    %v1559 = vpack.c.b16 %v1199, %v1195
    %v1560 = vpack.c.b16 %v1200, %v1196
    %v1561 = vpack.c.b16 %v1201, %v1197
    %v1562 = vpack.c.b16 %v1206, %v1202
    %v1563 = vpack.c.b16 %v1207, %v1203
    %v1564 = vpack.c.b16 %v1208, %v1204
    %v1565 = vpack.c.b16 %v1209, %v1205
    %v1566 = vpack.c.b16 %v1214, %v1210
    %v1567 = vpack.c.b16 %v1215, %v1211
    %v1568 = vpack.c.b16 %v1216, %v1212
    %v1569 = vpack.c.b16 %v1217, %v1213
    %v1570 = vpack.c.b16 %v1222, %v1218
    %v1571 = vpack.c.b16 %v1223, %v1219
    %v1572 = vpack.c.b16 %v1224, %v1220
    %v1573 = vpack.c.b16 %v1225, %v1221
    %v1574 = vpack.c.b16 %v1230, %v1226
    %v1575 = vpack.c.b16 %v1231, %v1227
    %v1576 = vpack.c.b16 %v1232, %v1228
    %v1577 = vpack.c.b16 %v1233, %v1229
    %v1578 = vpack.c.b16 %v1238, %v1234
    %v1579 = vpack.c.b16 %v1239, %v1235
    %v1580 = vpack.c.b16 %v1240, %v1236
    %v1581 = vpack.c.b16 %v1241, %v1237
    %v1582 = vpack.c.b16 %v1246, %v1242
    %v1583 = vpack.c.b16 %v1247, %v1243
    %v1584 = vpack.c.b16 %v1248, %v1244
    %v1585 = vpack.c.b16 %v1249, %v1245
    %v1586 = vpack.c.b16 %v1254, %v1250
    %v1587 = vpack.c.b16 %v1255, %v1251
    %v1588 = vpack.c.b16 %v1256, %v1252
    %v1589 = vpack.c.b16 %v1257, %v1253
    %v1590 = vpack.c.b16 %v1262, %v1258
    %v1591 = vpack.c.b16 %v1263, %v1259
    %v1592 = vpack.c.b16 %v1264, %v1260
    %v1593 = vpack.c.b16 %v1265, %v1261
    %v1594 = vpack.c.b16 %v1270, %v1266
    %v1595 = vpack.c.b16 %v1271, %v1267
    %v1596 = vpack.c.b16 %v1272, %v1268
    %v1597 = vpack.c.b16 %v1273, %v1269
    %v1598 = vpack.c.b16 %v1278, %v1274
    %v1599 = vpack.c.b16 %v1279, %v1275
    %v1600 = vpack.c.b16 %v1280, %v1276
    %v1601 = vpack.c.b16 %v1281, %v1277
    %v1602 = vpack.c.b16 %v1286, %v1282
    %v1603 = vpack.c.b16 %v1287, %v1283
    %v1604 = vpack.c.b16 %v1288, %v1284
    %v1605 = vpack.c.b16 %v1289, %v1285
    %v1606 = vpack.c.b16 %v1294, %v1290
    %v1607 = vpack.c.b16 %v1295, %v1291
    %v1608 = vpack.c.b16 %v1296, %v1292
    %v1609 = vpack.c.b16 %v1297, %v1293
    %v1610 = vpack.c.b16 %v1302, %v1298
    %v1611 = vpack.c.b16 %v1303, %v1299
    %v1612 = vpack.c.b16 %v1304, %v1300
    %v1613 = vpack.c.b16 %v1305, %v1301
    %v1614 = vpack.c.b16 %v1310, %v1306
    %v1615 = vpack.c.b16 %v1311, %v1307
    %v1616 = vpack.c.b16 %v1312, %v1308
    %v1617 = vpack.c.b16 %v1313, %v1309
    %v1618 = vpack.c.b16 %v1318, %v1314
    %v1619 = vpack.c.b16 %v1319, %v1315
    %v1620 = vpack.c.b16 %v1320, %v1316
    %v1621 = vpack.c.b16 %v1321, %v1317
    %v1622 = vpack.c.b16 %v1326, %v1322
    %v1623 = vpack.c.b16 %v1327, %v1323
    %v1624 = vpack.c.b16 %v1328, %v1324
    %v1625 = vpack.c.b16 %v1329, %v1325
    %v1626 = vpack.c.b16 %v1334, %v1330
    %v1627 = vpack.c.b16 %v1335, %v1331
    %v1628 = vpack.c.b16 %v1336, %v1332
    %v1629 = vpack.c.b16 %v1337, %v1333
    %v1630 = vpack.c.b16 %v1342, %v1338
    %v1631 = vpack.c.b16 %v1343, %v1339
    %v1632 = vpack.c.b16 %v1344, %v1340
    %v1633 = vpack.c.b16 %v1345, %v1341
    %v1634 = vpack.c.b16 %v1350, %v1346
    %v1635 = vpack.c.b16 %v1351, %v1347
    %v1636 = vpack.c.b16 %v1352, %v1348
    %v1637 = vpack.c.b16 %v1353, %v1349
    %v1638 = vpack.c.b16 %v1358, %v1354
    %v1639 = vpack.c.b16 %v1359, %v1355
    %v1640 = vpack.c.b16 %v1360, %v1356
    %v1641 = vpack.c.b16 %v1361, %v1357
    %v1642 = vpack.c.b16 %v1366, %v1362
    %v1643 = vpack.c.b16 %v1367, %v1363
    %v1644 = vpack.c.b16 %v1368, %v1364
    %v1645 = vpack.c.b16 %v1369, %v1365
    %v1646 = vpack.c.b16 %v1374, %v1370
    %v1647 = vpack.c.b16 %v1375, %v1371
    %v1648 = vpack.c.b16 %v1376, %v1372
    %v1649 = vpack.c.b16 %v1377, %v1373
    %v1650 = vpack.c.b16 %v1382, %v1378
    %v1651 = vpack.c.b16 %v1383, %v1379
    %v1652 = vpack.c.b16 %v1384, %v1380
    %v1653 = vpack.c.b16 %v1385, %v1381
    %v1654 = vpack.c.b16 %v1390, %v1386
    %v1655 = vpack.c.b16 %v1391, %v1387
    %v1656 = vpack.c.b16 %v1392, %v1388
    %v1657 = vpack.c.b16 %v1393, %v1389
    %v1658 = vpack.c.b16 %v1398, %v1394
    %v1659 = vpack.c.b16 %v1399, %v1395
    %v1660 = vpack.c.b16 %v1400, %v1396
    %v1661 = vpack.c.b16 %v1401, %v1397
    %v1662 = vpack.c.b16 %v1406, %v1402
    %v1663 = vpack.c.b16 %v1407, %v1403
    %v1664 = vpack.c.b16 %v1408, %v1404
    %v1665 = vpack.c.b16 %v1409, %v1405
    %v1666 = vpack.c.b16 %v1414, %v1410
    %v1667 = vpack.c.b16 %v1415, %v1411
    %v1668 = vpack.c.b16 %v1416, %v1412
    %v1669 = vpack.c.b16 %v1417, %v1413
    %v1670 = vpack.c.b16 %v1422, %v1418
    %v1671 = vpack.c.b16 %v1423, %v1419
    %v1672 = vpack.c.b16 %v1424, %v1420
    %v1673 = vpack.c.b16 %v1425, %v1421
    %v1674 = vpack.c.b16 %v1430, %v1426
    %v1675 = vpack.c.b16 %v1431, %v1427
    %v1676 = vpack.c.b16 %v1432, %v1428
    %v1677 = vpack.c.b16 %v1433, %v1429
    %v1678 = vpack.c.b16 %v1438, %v1434
    %v1679 = vpack.c.b16 %v1439, %v1435
    %v1680 = vpack.c.b16 %v1440, %v1436
    %v1681 = vpack.c.b16 %v1441, %v1437
    %v1682 = vpack.c.b16 %v1446, %v1442
    %v1683 = vpack.c.b16 %v1447, %v1443
    %v1684 = vpack.c.b16 %v1448, %v1444
    %v1685 = vpack.c.b16 %v1449, %v1445
    %v1686 = vpack.c.b16 %v1454, %v1450
    %v1687 = vpack.c.b16 %v1455, %v1451
    %v1688 = vpack.c.b16 %v1456, %v1452
    %v1689 = vpack.c.b16 %v1457, %v1453
    %v1690 = vpack.c.b16 %v1462, %v1458
    %v1691 = vpack.c.b16 %v1463, %v1459
    %v1692 = vpack.c.b16 %v1464, %v1460
    %v1693 = vpack.c.b16 %v1465, %v1461
    %v1694 = vpack.c.b16 %v1470, %v1466
    %v1695 = vpack.c.b16 %v1471, %v1467
    %v1696 = vpack.c.b16 %v1472, %v1468
    %v1697 = vpack.c.b16 %v1473, %v1469
    %v1698 = vpack.c.b16 %v1478, %v1474
    %v1699 = vpack.c.b16 %v1479, %v1475
    %v1700 = vpack.c.b16 %v1480, %v1476
    %v1701 = vpack.c.b16 %v1481, %v1477
    %v1702 = vpack.c.b16 %v1486, %v1482
    %v1703 = vpack.c.b16 %v1487, %v1483
    %v1704 = vpack.c.b16 %v1488, %v1484
    %v1705 = vpack.c.b16 %v1489, %v1485
    %v1706 = vpack.c.b16 %v1494, %v1490
    %v1707 = vpack.c.b16 %v1495, %v1491
    %v1708 = vpack.c.b16 %v1496, %v1492
    %v1709 = vpack.c.b16 %v1497, %v1493
    %v1710 = vpack.c.b16 %v1502, %v1498
    %v1711 = vpack.c.b16 %v1503, %v1499
    %v1712 = vpack.c.b16 %v1504, %v1500
    %v1713 = vpack.c.b16 %v1505, %v1501
    %v1714 = vpack.c.b16 %v1510, %v1506
    %v1715 = vpack.c.b16 %v1511, %v1507
    %v1716 = vpack.c.b16 %v1512, %v1508
    %v1717 = vpack.c.b16 %v1513, %v1509
    %v1718 = vpack.c.b16 %v1518, %v1514
    %v1719 = vpack.c.b16 %v1519, %v1515
    %v1720 = vpack.c.b16 %v1520, %v1516
    %v1721 = vpack.c.b16 %v1521, %v1517
    %v1722 = vpack.c.b16 %v1526, %v1522
    %v1723 = vpack.c.b16 %v1527, %v1523
    %v1724 = vpack.c.b16 %v1528, %v1524
    %v1725 = vpack.c.b16 %v1529, %v1525
    %vm1922 = vcmask 130048
    %v1924 = vsel %vm1922, %v740, 0
    %v1927 = vsel %vm1922, %v747, 0
    %v1930 = vsel %vm1922, %v754, 0
    %v1933 = vsel %vm1922, %v761, 0
    %v1936 = vsel %vm1922, %v768, 0
    %v1939 = vsel %vm1922, %v775, 0
    %v1942 = vsel %vm1922, %v782, 0
    %v1945 = vsel %vm1922, %v789, 0
    %v1948 = vsel %vm1922, %v796, 0
    %v1951 = vsel %vm1922, %v803, 0
    %v1954 = vsel %vm1922, %v810, 0
    %v1957 = vsel %vm1922, %v817, 0
    %v1960 = vsel %vm1922, %v824, 0
    %v1963 = vsel %vm1922, %v831, 0
    %v1966 = vsel %vm1922, %v838, 0
    %v1969 = vsel %vm1922, %v845, 0
    %1971 = vmatprep.subr.bf16.mxu0 %v1559
    %1972 = vmatpush1.bf16.msra.mxu0 %v1558
    %1973 = vmatprep.subr.bf16.mxu0 %v1555
    %1974 = vmatpush1.bf16.msra.mxu0 %v1554
    %1975 = vmatprep.subr.bf16.mxu0 %v1551
    %1976 = vmatpush1.bf16.msra.mxu0 %v1550
    %1977 = vmatprep.subr.bf16.mxu0 %v1547
    %1978 = vmatpush1.bf16.msra.mxu0 %v1546
    %1979 = vmatprep.subr.bf16.mxu0 %v1543
    %1980 = vmatpush1.bf16.msra.mxu0 %v1542
    %1981 = vmatprep.subr.bf16.mxu0 %v1539
    %1982 = vmatpush1.bf16.msra.mxu0 %v1538
    %1983 = vmatprep.subr.bf16.mxu0 %v1535
    %1984 = vmatpush1.bf16.msra.mxu0 %v1534
    %1985 = vmatprep.subr.bf16.mxu0 %v1531
    %1986 = vmatpush1.bf16.msra.mxu0 %v1530
    %1987 = vmatprep.subr.bf16.mxu0 %v1591
    %1988 = vmatpush2.bf16.msra.mxu0 %v1590
    %1989 = vmatprep.subr.bf16.mxu0 %v1587
    %1990 = vmatpush2.bf16.msra.mxu0 %v1586
    %1991 = vmatprep.subr.bf16.mxu0 %v1583
    %1992 = vmatpush2.bf16.msra.mxu0 %v1582
    %1993 = vmatprep.subr.bf16.mxu0 %v1579
    %1994 = vmatpush2.bf16.msra.mxu0 %v1578
    %1995 = vmatprep.subr.bf16.mxu0 %v1575
    %1996 = vmatpush2.bf16.msra.mxu0 %v1574
    %1997 = vmatprep.subr.bf16.mxu0 %v1571
    %1998 = vmatpush2.bf16.msra.mxu0 %v1570
    %1999 = vmatprep.subr.bf16.mxu0 %v1567
    %2000 = vmatpush2.bf16.msra.mxu0 %v1566
    %2001 = vmatprep.subr.bf16.mxu0 %v1563
    %2002 = vmatpush2.bf16.msra.mxu0 %v1562
    %2003 = vmatprep.mubr.bf16.mxu0 %v735
    %2004 = vmatmul.mubr.bf16.gmra.mxu0 %v734
    %v2005 = vpop.f32.mrf.mxu0
    %v2006 = vadd.f32 %v365, %v2005
    %v2007 = vpop.f32.mrf.mxu0
    %v2008 = vadd.f32 %v369, %v2007
    %v2009 = vpop.f32.mrf.mxu0
    %v2010 = vadd.f32 %v365, %v2009
    %v2011 = vpop.f32.mrf.mxu0
    %v2012 = vadd.f32 %v369, %v2011
    %2013 = vmatprep.mubr.bf16.mxu0 %v742
    %2014 = vmatmul.mubr.bf16.gmra.mxu0 %v741
    %v2015 = vpop.f32.mrf.mxu0
    %v2016 = vadd.f32 %v365, %v2015
    %v2017 = vpop.f32.mrf.mxu0
    %v2018 = vadd.f32 %v369, %v2017
    %v2019 = vpop.f32.mrf.mxu0
    %v2020 = vadd.f32 %v365, %v2019
    %v2021 = vpop.f32.mrf.mxu0
    %v2022 = vadd.f32 %v369, %v2021
    %2023 = vmatprep.mubr.bf16.mxu0 %v749
    %2024 = vmatmul.mubr.bf16.gmra.mxu0 %v748
    %v2025 = vpop.f32.mrf.mxu0
    %v2026 = vadd.f32 %v365, %v2025
    %v2027 = vpop.f32.mrf.mxu0
    %v2028 = vadd.f32 %v369, %v2027
    %v2029 = vpop.f32.mrf.mxu0
    %v2030 = vadd.f32 %v365, %v2029
    %v2031 = vpop.f32.mrf.mxu0
    %v2032 = vadd.f32 %v369, %v2031
    %2033 = vmatprep.mubr.bf16.mxu0 %v756
    %2034 = vmatmul.mubr.bf16.gmra.mxu0 %v755
    %v2035 = vpop.f32.mrf.mxu0
    %v2036 = vadd.f32 %v365, %v2035
    %v2037 = vpop.f32.mrf.mxu0
    %v2038 = vadd.f32 %v369, %v2037
    %v2039 = vpop.f32.mrf.mxu0
    %v2040 = vadd.f32 %v365, %v2039
    %v2041 = vpop.f32.mrf.mxu0
    %v2042 = vadd.f32 %v369, %v2041
    %2043 = vmatprep.mubr.bf16.mxu0 %v763
    %2044 = vmatmul.mubr.bf16.gmra.mxu0 %v762
    %v2045 = vpop.f32.mrf.mxu0
    %v2046 = vadd.f32 %v365, %v2045
    %v2047 = vpop.f32.mrf.mxu0
    %v2048 = vadd.f32 %v369, %v2047
    %v2049 = vpop.f32.mrf.mxu0
    %v2050 = vadd.f32 %v365, %v2049
    %v2051 = vpop.f32.mrf.mxu0
    %v2052 = vadd.f32 %v369, %v2051
    %2053 = vmatprep.mubr.bf16.mxu0 %v770
    %2054 = vmatmul.mubr.bf16.gmra.mxu0 %v769
    %v2055 = vpop.f32.mrf.mxu0
    %v2056 = vadd.f32 %v365, %v2055
    %v2057 = vpop.f32.mrf.mxu0
    %v2058 = vadd.f32 %v369, %v2057
    %v2059 = vpop.f32.mrf.mxu0
    %v2060 = vadd.f32 %v365, %v2059
    %v2061 = vpop.f32.mrf.mxu0
    %v2062 = vadd.f32 %v369, %v2061
    %2063 = vmatprep.mubr.bf16.mxu0 %v777
    %2064 = vmatmul.mubr.bf16.gmra.mxu0 %v776
    %v2065 = vpop.f32.mrf.mxu0
    %v2066 = vadd.f32 %v365, %v2065
    %v2067 = vpop.f32.mrf.mxu0
    %v2068 = vadd.f32 %v369, %v2067
    %v2069 = vpop.f32.mrf.mxu0
    %v2070 = vadd.f32 %v365, %v2069
    %v2071 = vpop.f32.mrf.mxu0
    %v2072 = vadd.f32 %v369, %v2071
    %2073 = vmatprep.mubr.bf16.mxu0 %v784
    %2074 = vmatmul.mubr.bf16.gmra.mxu0 %v783
    %v2075 = vpop.f32.mrf.mxu0
    %v2076 = vadd.f32 %v365, %v2075
    %v2077 = vpop.f32.mrf.mxu0
    %v2078 = vadd.f32 %v369, %v2077
    %v2079 = vpop.f32.mrf.mxu0
    %v2080 = vadd.f32 %v365, %v2079
    %v2081 = vpop.f32.mrf.mxu0
    %v2082 = vadd.f32 %v369, %v2081
    %2083 = vmatprep.mubr.bf16.mxu0 %v791
    %2084 = vmatmul.mubr.bf16.gmra.mxu0 %v790
    %v2085 = vpop.f32.mrf.mxu0
    %v2086 = vadd.f32 %v365, %v2085
    %v2087 = vpop.f32.mrf.mxu0
    %v2088 = vadd.f32 %v369, %v2087
    %v2089 = vpop.f32.mrf.mxu0
    %v2090 = vadd.f32 %v365, %v2089
    %v2091 = vpop.f32.mrf.mxu0
    %v2092 = vadd.f32 %v369, %v2091
    %2093 = vmatprep.mubr.bf16.mxu0 %v798
    %2094 = vmatmul.mubr.bf16.gmra.mxu0 %v797
    %v2095 = vpop.f32.mrf.mxu0
    %v2096 = vadd.f32 %v365, %v2095
    %v2097 = vpop.f32.mrf.mxu0
    %v2098 = vadd.f32 %v369, %v2097
    %v2099 = vpop.f32.mrf.mxu0
    %v2100 = vadd.f32 %v365, %v2099
    %v2101 = vpop.f32.mrf.mxu0
    %v2102 = vadd.f32 %v369, %v2101
    %2103 = vmatprep.mubr.bf16.mxu0 %v805
    %2104 = vmatmul.mubr.bf16.gmra.mxu0 %v804
    %v2105 = vpop.f32.mrf.mxu0
    %v2106 = vadd.f32 %v365, %v2105
    %v2107 = vpop.f32.mrf.mxu0
    %v2108 = vadd.f32 %v369, %v2107
    %v2109 = vpop.f32.mrf.mxu0
    %v2110 = vadd.f32 %v365, %v2109
    %v2111 = vpop.f32.mrf.mxu0
    %v2112 = vadd.f32 %v369, %v2111
    %2113 = vmatprep.mubr.bf16.mxu0 %v812
    %2114 = vmatmul.mubr.bf16.gmra.mxu0 %v811
    %v2115 = vpop.f32.mrf.mxu0
    %v2116 = vadd.f32 %v365, %v2115
    %v2117 = vpop.f32.mrf.mxu0
    %v2118 = vadd.f32 %v369, %v2117
    %v2119 = vpop.f32.mrf.mxu0
    %v2120 = vadd.f32 %v365, %v2119
    %v2121 = vpop.f32.mrf.mxu0
    %v2122 = vadd.f32 %v369, %v2121
    %2123 = vmatprep.mubr.bf16.mxu0 %v819
    %2124 = vmatmul.mubr.bf16.gmra.mxu0 %v818
    %v2125 = vpop.f32.mrf.mxu0
    %v2126 = vadd.f32 %v365, %v2125
    %v2127 = vpop.f32.mrf.mxu0
    %v2128 = vadd.f32 %v369, %v2127
    %v2129 = vpop.f32.mrf.mxu0
    %v2130 = vadd.f32 %v365, %v2129
    %v2131 = vpop.f32.mrf.mxu0
    %v2132 = vadd.f32 %v369, %v2131
    %2133 = vmatprep.mubr.bf16.mxu0 %v826
    %2134 = vmatmul.mubr.bf16.gmra.mxu0 %v825
    %v2135 = vpop.f32.mrf.mxu0
    %v2136 = vadd.f32 %v365, %v2135
    %v2137 = vpop.f32.mrf.mxu0
    %v2138 = vadd.f32 %v369, %v2137
    %v2139 = vpop.f32.mrf.mxu0
    %v2140 = vadd.f32 %v365, %v2139
    %v2141 = vpop.f32.mrf.mxu0
    %v2142 = vadd.f32 %v369, %v2141
    %2143 = vmatprep.mubr.bf16.mxu0 %v833
    %2144 = vmatmul.mubr.bf16.gmra.mxu0 %v832
    %v2145 = vpop.f32.mrf.mxu0
    %v2146 = vadd.f32 %v365, %v2145
    %v2147 = vpop.f32.mrf.mxu0
    %v2148 = vadd.f32 %v369, %v2147
    %v2149 = vpop.f32.mrf.mxu0
    %v2150 = vadd.f32 %v365, %v2149
    %v2151 = vpop.f32.mrf.mxu0
    %v2152 = vadd.f32 %v369, %v2151
    %2153 = vmatprep.mubr.bf16.mxu0 %v840
    %2154 = vmatmul.mubr.bf16.gmra.mxu0 %v839
    %v2155 = vpop.f32.mrf.mxu0
    %v2156 = vadd.f32 %v365, %v2155
    %v2157 = vpop.f32.mrf.mxu0
    %v2158 = vadd.f32 %v369, %v2157
    %v2159 = vpop.f32.mrf.mxu0
    %v2160 = vadd.f32 %v365, %v2159
    %v2161 = vpop.f32.mrf.mxu0
    %v2162 = vadd.f32 %v369, %v2161
    %2163 = vdwg.mxu0
    %2164 = vmatprep.subr.bf16.mxu0 %v1623
    %2165 = vmatpush1.bf16.msra.mxu0 %v1622
    %2166 = vmatprep.subr.bf16.mxu0 %v1619
    %2167 = vmatpush1.bf16.msra.mxu0 %v1618
    %2168 = vmatprep.subr.bf16.mxu0 %v1615
    %2169 = vmatpush1.bf16.msra.mxu0 %v1614
    %2170 = vmatprep.subr.bf16.mxu0 %v1611
    %2171 = vmatpush1.bf16.msra.mxu0 %v1610
    %2172 = vmatprep.subr.bf16.mxu0 %v1607
    %2173 = vmatpush1.bf16.msra.mxu0 %v1606
    %2174 = vmatprep.subr.bf16.mxu0 %v1603
    %2175 = vmatpush1.bf16.msra.mxu0 %v1602
    %2176 = vmatprep.subr.bf16.mxu0 %v1599
    %2177 = vmatpush1.bf16.msra.mxu0 %v1598
    %2178 = vmatprep.subr.bf16.mxu0 %v1595
    %2179 = vmatpush1.bf16.msra.mxu0 %v1594
    %2180 = vmatprep.subr.bf16.mxu0 %v1655
    %2181 = vmatpush2.bf16.msra.mxu0 %v1654
    %2182 = vmatprep.subr.bf16.mxu0 %v1651
    %2183 = vmatpush2.bf16.msra.mxu0 %v1650
    %2184 = vmatprep.subr.bf16.mxu0 %v1647
    %2185 = vmatpush2.bf16.msra.mxu0 %v1646
    %2186 = vmatprep.subr.bf16.mxu0 %v1643
    %2187 = vmatpush2.bf16.msra.mxu0 %v1642
    %2188 = vmatprep.subr.bf16.mxu0 %v1639
    %2189 = vmatpush2.bf16.msra.mxu0 %v1638
    %2190 = vmatprep.subr.bf16.mxu0 %v1635
    %2191 = vmatpush2.bf16.msra.mxu0 %v1634
    %2192 = vmatprep.subr.bf16.mxu0 %v1631
    %2193 = vmatpush2.bf16.msra.mxu0 %v1630
    %2194 = vmatprep.subr.bf16.mxu0 %v1627
    %2195 = vmatpush2.bf16.msra.mxu0 %v1626
    %2196 = vmatprep.mubr.bf16.mxu0 %v737
    %2197 = vmatmul.mubr.bf16.gmra.mxu0 %v736
    %v2198 = vpop.f32.mrf.mxu0
    %v2199 = vadd.f32 %v2006, %v2198
    %v2200 = vpop.f32.mrf.mxu0
    %v2201 = vadd.f32 %v2008, %v2200
    %v2202 = vpop.f32.mrf.mxu0
    %v2203 = vadd.f32 %v2010, %v2202
    %v2204 = vpop.f32.mrf.mxu0
    %v2205 = vadd.f32 %v2012, %v2204
    %2206 = vmatprep.mubr.bf16.mxu0 %v744
    %2207 = vmatmul.mubr.bf16.gmra.mxu0 %v743
    %v2208 = vpop.f32.mrf.mxu0
    %v2209 = vadd.f32 %v2016, %v2208
    %v2210 = vpop.f32.mrf.mxu0
    %v2211 = vadd.f32 %v2018, %v2210
    %v2212 = vpop.f32.mrf.mxu0
    %v2213 = vadd.f32 %v2020, %v2212
    %v2214 = vpop.f32.mrf.mxu0
    %v2215 = vadd.f32 %v2022, %v2214
    %2216 = vmatprep.mubr.bf16.mxu0 %v751
    %2217 = vmatmul.mubr.bf16.gmra.mxu0 %v750
    %v2218 = vpop.f32.mrf.mxu0
    %v2219 = vadd.f32 %v2026, %v2218
    %v2220 = vpop.f32.mrf.mxu0
    %v2221 = vadd.f32 %v2028, %v2220
    %v2222 = vpop.f32.mrf.mxu0
    %v2223 = vadd.f32 %v2030, %v2222
    %v2224 = vpop.f32.mrf.mxu0
    %v2225 = vadd.f32 %v2032, %v2224
    %2226 = vmatprep.mubr.bf16.mxu0 %v758
    %2227 = vmatmul.mubr.bf16.gmra.mxu0 %v757
    %v2228 = vpop.f32.mrf.mxu0
    %v2229 = vadd.f32 %v2036, %v2228
    %v2230 = vpop.f32.mrf.mxu0
    %v2231 = vadd.f32 %v2038, %v2230
    %v2232 = vpop.f32.mrf.mxu0
    %v2233 = vadd.f32 %v2040, %v2232
    %v2234 = vpop.f32.mrf.mxu0
    %v2235 = vadd.f32 %v2042, %v2234
    %2236 = vmatprep.mubr.bf16.mxu0 %v765
    %2237 = vmatmul.mubr.bf16.gmra.mxu0 %v764
    %v2238 = vpop.f32.mrf.mxu0
    %v2239 = vadd.f32 %v2046, %v2238
    %v2240 = vpop.f32.mrf.mxu0
    %v2241 = vadd.f32 %v2048, %v2240
    %v2242 = vpop.f32.mrf.mxu0
    %v2243 = vadd.f32 %v2050, %v2242
    %v2244 = vpop.f32.mrf.mxu0
    %v2245 = vadd.f32 %v2052, %v2244
    %2246 = vmatprep.mubr.bf16.mxu0 %v772
    %2247 = vmatmul.mubr.bf16.gmra.mxu0 %v771
    %v2248 = vpop.f32.mrf.mxu0
    %v2249 = vadd.f32 %v2056, %v2248
    %v2250 = vpop.f32.mrf.mxu0
    %v2251 = vadd.f32 %v2058, %v2250
    %v2252 = vpop.f32.mrf.mxu0
    %v2253 = vadd.f32 %v2060, %v2252
    %v2254 = vpop.f32.mrf.mxu0
    %v2255 = vadd.f32 %v2062, %v2254
    %2256 = vmatprep.mubr.bf16.mxu0 %v779
    %2257 = vmatmul.mubr.bf16.gmra.mxu0 %v778
    %v2258 = vpop.f32.mrf.mxu0
    %v2259 = vadd.f32 %v2066, %v2258
    %v2260 = vpop.f32.mrf.mxu0
    %v2261 = vadd.f32 %v2068, %v2260
    %v2262 = vpop.f32.mrf.mxu0
    %v2263 = vadd.f32 %v2070, %v2262
    %v2264 = vpop.f32.mrf.mxu0
    %v2265 = vadd.f32 %v2072, %v2264
    %2266 = vmatprep.mubr.bf16.mxu0 %v786
    %2267 = vmatmul.mubr.bf16.gmra.mxu0 %v785
    %v2268 = vpop.f32.mrf.mxu0
    %v2269 = vadd.f32 %v2076, %v2268
    %v2270 = vpop.f32.mrf.mxu0
    %v2271 = vadd.f32 %v2078, %v2270
    %v2272 = vpop.f32.mrf.mxu0
    %v2273 = vadd.f32 %v2080, %v2272
    %v2274 = vpop.f32.mrf.mxu0
    %v2275 = vadd.f32 %v2082, %v2274
    %2276 = vmatprep.mubr.bf16.mxu0 %v793
    %2277 = vmatmul.mubr.bf16.gmra.mxu0 %v792
    %v2278 = vpop.f32.mrf.mxu0
    %v2279 = vadd.f32 %v2086, %v2278
    %v2280 = vpop.f32.mrf.mxu0
    %v2281 = vadd.f32 %v2088, %v2280
    %v2282 = vpop.f32.mrf.mxu0
    %v2283 = vadd.f32 %v2090, %v2282
    %v2284 = vpop.f32.mrf.mxu0
    %v2285 = vadd.f32 %v2092, %v2284
    %2286 = vmatprep.mubr.bf16.mxu0 %v800
    %2287 = vmatmul.mubr.bf16.gmra.mxu0 %v799
    %v2288 = vpop.f32.mrf.mxu0
    %v2289 = vadd.f32 %v2096, %v2288
    %v2290 = vpop.f32.mrf.mxu0
    %v2291 = vadd.f32 %v2098, %v2290
    %v2292 = vpop.f32.mrf.mxu0
    %v2293 = vadd.f32 %v2100, %v2292
    %v2294 = vpop.f32.mrf.mxu0
    %v2295 = vadd.f32 %v2102, %v2294
    %2296 = vmatprep.mubr.bf16.mxu0 %v807
    %2297 = vmatmul.mubr.bf16.gmra.mxu0 %v806
    %v2298 = vpop.f32.mrf.mxu0
    %v2299 = vadd.f32 %v2106, %v2298
    %v2300 = vpop.f32.mrf.mxu0
    %v2301 = vadd.f32 %v2108, %v2300
    %v2302 = vpop.f32.mrf.mxu0
    %v2303 = vadd.f32 %v2110, %v2302
    %v2304 = vpop.f32.mrf.mxu0
    %v2305 = vadd.f32 %v2112, %v2304
    %2306 = vmatprep.mubr.bf16.mxu0 %v814
    %2307 = vmatmul.mubr.bf16.gmra.mxu0 %v813
    %v2308 = vpop.f32.mrf.mxu0
    %v2309 = vadd.f32 %v2116, %v2308
    %v2310 = vpop.f32.mrf.mxu0
    %v2311 = vadd.f32 %v2118, %v2310
    %v2312 = vpop.f32.mrf.mxu0
    %v2313 = vadd.f32 %v2120, %v2312
    %v2314 = vpop.f32.mrf.mxu0
    %v2315 = vadd.f32 %v2122, %v2314
    %2316 = vmatprep.mubr.bf16.mxu0 %v821
    %2317 = vmatmul.mubr.bf16.gmra.mxu0 %v820
    %v2318 = vpop.f32.mrf.mxu0
    %v2319 = vadd.f32 %v2126, %v2318
    %v2320 = vpop.f32.mrf.mxu0
    %v2321 = vadd.f32 %v2128, %v2320
    %v2322 = vpop.f32.mrf.mxu0
    %v2323 = vadd.f32 %v2130, %v2322
    %v2324 = vpop.f32.mrf.mxu0
    %v2325 = vadd.f32 %v2132, %v2324
    %2326 = vmatprep.mubr.bf16.mxu0 %v828
    %2327 = vmatmul.mubr.bf16.gmra.mxu0 %v827
    %v2328 = vpop.f32.mrf.mxu0
    %v2329 = vadd.f32 %v2136, %v2328
    %v2330 = vpop.f32.mrf.mxu0
    %v2331 = vadd.f32 %v2138, %v2330
    %v2332 = vpop.f32.mrf.mxu0
    %v2333 = vadd.f32 %v2140, %v2332
    %v2334 = vpop.f32.mrf.mxu0
    %v2335 = vadd.f32 %v2142, %v2334
    %2336 = vmatprep.mubr.bf16.mxu0 %v835
    %2337 = vmatmul.mubr.bf16.gmra.mxu0 %v834
    %v2338 = vpop.f32.mrf.mxu0
    %v2339 = vadd.f32 %v2146, %v2338
    %v2340 = vpop.f32.mrf.mxu0
    %v2341 = vadd.f32 %v2148, %v2340
    %v2342 = vpop.f32.mrf.mxu0
    %v2343 = vadd.f32 %v2150, %v2342
    %v2344 = vpop.f32.mrf.mxu0
    %v2345 = vadd.f32 %v2152, %v2344
    %2346 = vmatprep.mubr.bf16.mxu0 %v842
    %2347 = vmatmul.mubr.bf16.gmra.mxu0 %v841
    %v2348 = vpop.f32.mrf.mxu0
    %v2349 = vadd.f32 %v2156, %v2348
    %v2350 = vpop.f32.mrf.mxu0
    %v2351 = vadd.f32 %v2158, %v2350
    %v2352 = vpop.f32.mrf.mxu0
    %v2353 = vadd.f32 %v2160, %v2352
    %v2354 = vpop.f32.mrf.mxu0
    %v2355 = vadd.f32 %v2162, %v2354
    %2356 = vdwg.mxu0
    %2357 = vmatprep.subr.bf16.mxu0 %v1687
    %2358 = vmatpush1.bf16.msra.mxu0 %v1686
    %2359 = vmatprep.subr.bf16.mxu0 %v1683
    %2360 = vmatpush1.bf16.msra.mxu0 %v1682
    %2361 = vmatprep.subr.bf16.mxu0 %v1679
    %2362 = vmatpush1.bf16.msra.mxu0 %v1678
    %2363 = vmatprep.subr.bf16.mxu0 %v1675
    %2364 = vmatpush1.bf16.msra.mxu0 %v1674
    %2365 = vmatprep.subr.bf16.mxu0 %v1671
    %2366 = vmatpush1.bf16.msra.mxu0 %v1670
    %2367 = vmatprep.subr.bf16.mxu0 %v1667
    %2368 = vmatpush1.bf16.msra.mxu0 %v1666
    %2369 = vmatprep.subr.bf16.mxu0 %v1663
    %2370 = vmatpush1.bf16.msra.mxu0 %v1662
    %2371 = vmatprep.subr.bf16.mxu0 %v1659
    %2372 = vmatpush1.bf16.msra.mxu0 %v1658
    %2373 = vmatprep.subr.bf16.mxu0 %v1719
    %2374 = vmatpush2.bf16.msra.mxu0 %v1718
    %2375 = vmatprep.subr.bf16.mxu0 %v1715
    %2376 = vmatpush2.bf16.msra.mxu0 %v1714
    %2377 = vmatprep.subr.bf16.mxu0 %v1711
    %2378 = vmatpush2.bf16.msra.mxu0 %v1710
    %2379 = vmatprep.subr.bf16.mxu0 %v1707
    %2380 = vmatpush2.bf16.msra.mxu0 %v1706
    %2381 = vmatprep.subr.bf16.mxu0 %v1703
    %2382 = vmatpush2.bf16.msra.mxu0 %v1702
    %2383 = vmatprep.subr.bf16.mxu0 %v1699
    %2384 = vmatpush2.bf16.msra.mxu0 %v1698
    %2385 = vmatprep.subr.bf16.mxu0 %v1695
    %2386 = vmatpush2.bf16.msra.mxu0 %v1694
    %2387 = vmatprep.subr.bf16.mxu0 %v1691
    %2388 = vmatpush2.bf16.msra.mxu0 %v1690
    %2389 = vmatprep.mubr.bf16.mxu0 %v739
    %2390 = vmatmul.mubr.bf16.gmra.mxu0 %v738
    %v2391 = vpop.f32.mrf.mxu0
    %v2392 = vadd.f32 %v2199, %v2391
    %v2393 = vpop.f32.mrf.mxu0
    %v2394 = vadd.f32 %v2201, %v2393
    %v2395 = vpop.f32.mrf.mxu0
    %v2396 = vadd.f32 %v2203, %v2395
    %v2397 = vpop.f32.mrf.mxu0
    %v2398 = vadd.f32 %v2205, %v2397
    %2399 = vmatprep.mubr.bf16.mxu0 %v746
    %2400 = vmatmul.mubr.bf16.gmra.mxu0 %v745
    %v2401 = vpop.f32.mrf.mxu0
    %v2402 = vadd.f32 %v2209, %v2401
    %v2403 = vpop.f32.mrf.mxu0
    %v2404 = vadd.f32 %v2211, %v2403
    %v2405 = vpop.f32.mrf.mxu0
    %v2406 = vadd.f32 %v2213, %v2405
    %v2407 = vpop.f32.mrf.mxu0
    %v2408 = vadd.f32 %v2215, %v2407
    %2409 = vmatprep.mubr.bf16.mxu0 %v753
    %2410 = vmatmul.mubr.bf16.gmra.mxu0 %v752
    %v2411 = vpop.f32.mrf.mxu0
    %v2412 = vadd.f32 %v2219, %v2411
    %v2413 = vpop.f32.mrf.mxu0
    %v2414 = vadd.f32 %v2221, %v2413
    %v2415 = vpop.f32.mrf.mxu0
    %v2416 = vadd.f32 %v2223, %v2415
    %v2417 = vpop.f32.mrf.mxu0
    %v2418 = vadd.f32 %v2225, %v2417
    %2419 = vmatprep.mubr.bf16.mxu0 %v760
    %2420 = vmatmul.mubr.bf16.gmra.mxu0 %v759
    %v2421 = vpop.f32.mrf.mxu0
    %v2422 = vadd.f32 %v2229, %v2421
    %v2423 = vpop.f32.mrf.mxu0
    %v2424 = vadd.f32 %v2231, %v2423
    %v2425 = vpop.f32.mrf.mxu0
    %v2426 = vadd.f32 %v2233, %v2425
    %v2427 = vpop.f32.mrf.mxu0
    %v2428 = vadd.f32 %v2235, %v2427
    %2429 = vmatprep.mubr.bf16.mxu0 %v767
    %2430 = vmatmul.mubr.bf16.gmra.mxu0 %v766
    %v2431 = vpop.f32.mrf.mxu0
    %v2432 = vadd.f32 %v2239, %v2431
    %v2433 = vpop.f32.mrf.mxu0
    %v2434 = vadd.f32 %v2241, %v2433
    %v2435 = vpop.f32.mrf.mxu0
    %v2436 = vadd.f32 %v2243, %v2435
    %v2437 = vpop.f32.mrf.mxu0
    %v2438 = vadd.f32 %v2245, %v2437
    %2439 = vmatprep.mubr.bf16.mxu0 %v774
    %2440 = vmatmul.mubr.bf16.gmra.mxu0 %v773
    %v2441 = vpop.f32.mrf.mxu0
    %v2442 = vadd.f32 %v2249, %v2441
    %v2443 = vpop.f32.mrf.mxu0
    %v2444 = vadd.f32 %v2251, %v2443
    %v2445 = vpop.f32.mrf.mxu0
    %v2446 = vadd.f32 %v2253, %v2445
    %v2447 = vpop.f32.mrf.mxu0
    %v2448 = vadd.f32 %v2255, %v2447
    %2449 = vmatprep.mubr.bf16.mxu0 %v781
    %2450 = vmatmul.mubr.bf16.gmra.mxu0 %v780
    %v2451 = vpop.f32.mrf.mxu0
    %v2452 = vadd.f32 %v2259, %v2451
    %v2453 = vpop.f32.mrf.mxu0
    %v2454 = vadd.f32 %v2261, %v2453
    %v2455 = vpop.f32.mrf.mxu0
    %v2456 = vadd.f32 %v2263, %v2455
    %v2457 = vpop.f32.mrf.mxu0
    %v2458 = vadd.f32 %v2265, %v2457
    %2459 = vmatprep.mubr.bf16.mxu0 %v788
    %2460 = vmatmul.mubr.bf16.gmra.mxu0 %v787
    %v2461 = vpop.f32.mrf.mxu0
    %v2462 = vadd.f32 %v2269, %v2461
    %v2463 = vpop.f32.mrf.mxu0
    %v2464 = vadd.f32 %v2271, %v2463
    %v2465 = vpop.f32.mrf.mxu0
    %v2466 = vadd.f32 %v2273, %v2465
    %v2467 = vpop.f32.mrf.mxu0
    %v2468 = vadd.f32 %v2275, %v2467
    %2469 = vmatprep.mubr.bf16.mxu0 %v795
    %2470 = vmatmul.mubr.bf16.gmra.mxu0 %v794
    %v2471 = vpop.f32.mrf.mxu0
    %v2472 = vadd.f32 %v2279, %v2471
    %v2473 = vpop.f32.mrf.mxu0
    %v2474 = vadd.f32 %v2281, %v2473
    %v2475 = vpop.f32.mrf.mxu0
    %v2476 = vadd.f32 %v2283, %v2475
    %v2477 = vpop.f32.mrf.mxu0
    %v2478 = vadd.f32 %v2285, %v2477
    %2479 = vmatprep.mubr.bf16.mxu0 %v802
    %2480 = vmatmul.mubr.bf16.gmra.mxu0 %v801
    %v2481 = vpop.f32.mrf.mxu0
    %v2482 = vadd.f32 %v2289, %v2481
    %v2483 = vpop.f32.mrf.mxu0
    %v2484 = vadd.f32 %v2291, %v2483
    %v2485 = vpop.f32.mrf.mxu0
    %v2486 = vadd.f32 %v2293, %v2485
    %v2487 = vpop.f32.mrf.mxu0
    %v2488 = vadd.f32 %v2295, %v2487
    %2489 = vmatprep.mubr.bf16.mxu0 %v809
    %2490 = vmatmul.mubr.bf16.gmra.mxu0 %v808
    %v2491 = vpop.f32.mrf.mxu0
    %v2492 = vadd.f32 %v2299, %v2491
    %v2493 = vpop.f32.mrf.mxu0
    %v2494 = vadd.f32 %v2301, %v2493
    %v2495 = vpop.f32.mrf.mxu0
    %v2496 = vadd.f32 %v2303, %v2495
    %v2497 = vpop.f32.mrf.mxu0
    %v2498 = vadd.f32 %v2305, %v2497
    %2499 = vmatprep.mubr.bf16.mxu0 %v816
    %2500 = vmatmul.mubr.bf16.gmra.mxu0 %v815
    %v2501 = vpop.f32.mrf.mxu0
    %v2502 = vadd.f32 %v2309, %v2501
    %v2503 = vpop.f32.mrf.mxu0
    %v2504 = vadd.f32 %v2311, %v2503
    %v2505 = vpop.f32.mrf.mxu0
    %v2506 = vadd.f32 %v2313, %v2505
    %v2507 = vpop.f32.mrf.mxu0
    %v2508 = vadd.f32 %v2315, %v2507
    %2509 = vmatprep.mubr.bf16.mxu0 %v823
    %2510 = vmatmul.mubr.bf16.gmra.mxu0 %v822
    %v2511 = vpop.f32.mrf.mxu0
    %v2512 = vadd.f32 %v2319, %v2511
    %v2513 = vpop.f32.mrf.mxu0
    %v2514 = vadd.f32 %v2321, %v2513
    %v2515 = vpop.f32.mrf.mxu0
    %v2516 = vadd.f32 %v2323, %v2515
    %v2517 = vpop.f32.mrf.mxu0
    %v2518 = vadd.f32 %v2325, %v2517
    %2519 = vmatprep.mubr.bf16.mxu0 %v830
    %2520 = vmatmul.mubr.bf16.gmra.mxu0 %v829
    %v2521 = vpop.f32.mrf.mxu0
    %v2522 = vadd.f32 %v2329, %v2521
    %v2523 = vpop.f32.mrf.mxu0
    %v2524 = vadd.f32 %v2331, %v2523
    %v2525 = vpop.f32.mrf.mxu0
    %v2526 = vadd.f32 %v2333, %v2525
    %v2527 = vpop.f32.mrf.mxu0
    %v2528 = vadd.f32 %v2335, %v2527
    %2529 = vmatprep.mubr.bf16.mxu0 %v837
    %2530 = vmatmul.mubr.bf16.gmra.mxu0 %v836
    %v2531 = vpop.f32.mrf.mxu0
    %v2532 = vadd.f32 %v2339, %v2531
    %v2533 = vpop.f32.mrf.mxu0
    %v2534 = vadd.f32 %v2341, %v2533
    %v2535 = vpop.f32.mrf.mxu0
    %v2536 = vadd.f32 %v2343, %v2535
    %v2537 = vpop.f32.mrf.mxu0
    %v2538 = vadd.f32 %v2345, %v2537
    %2539 = vmatprep.mubr.bf16.mxu0 %v844
    %2540 = vmatmul.mubr.bf16.gmra.mxu0 %v843
    %v2541 = vpop.f32.mrf.mxu0
    %v2542 = vadd.f32 %v2349, %v2541
    %v2543 = vpop.f32.mrf.mxu0
    %v2544 = vadd.f32 %v2351, %v2543
    %v2545 = vpop.f32.mrf.mxu0
    %v2546 = vadd.f32 %v2353, %v2545
    %v2547 = vpop.f32.mrf.mxu0
    %v2548 = vadd.f32 %v2355, %v2547
    %2549 = vdwg.mxu0
    %2550 = vmatprep.subr.bf16.mxu0 0
    %2551 = vmatpush1.bf16.msra.mxu0 0
    %2552 = vmatprep.subr.bf16.mxu0 0
    %2553 = vmatpush1.bf16.msra.mxu0 0
    %2554 = vmatprep.subr.bf16.mxu0 0
    %2555 = vmatpush1.bf16.msra.mxu0 0
    %2556 = vmatprep.subr.bf16.mxu0 0
    %2557 = vmatpush1.bf16.msra.mxu0 0
    %2558 = vmatprep.subr.bf16.mxu0 0
    %2559 = vmatpush1.bf16.msra.mxu0 0
    %2560 = vmatprep.subr.bf16.mxu0 0
    %2561 = vmatpush1.bf16.msra.mxu0 0
    %2562 = vmatprep.subr.bf16.mxu0 0
    %2563 = vmatpush1.bf16.msra.mxu0 0
    %2564 = vmatprep.subr.bf16.mxu0 %v1723
    %2565 = vmatpush1.bf16.msra.mxu0 %v1722
    %2566 = vmatprep.subr.bf16.mxu0 0
    %2567 = vmatpush2.bf16.msra.mxu0 0
    %2568 = vmatprep.subr.bf16.mxu0 0
    %2569 = vmatpush2.bf16.msra.mxu0 0
    %2570 = vmatprep.subr.bf16.mxu0 0
    %2571 = vmatpush2.bf16.msra.mxu0 0
    %2572 = vmatprep.subr.bf16.mxu0 0
    %2573 = vmatpush2.bf16.msra.mxu0 0
    %2574 = vmatprep.subr.bf16.mxu0 0
    %2575 = vmatpush2.bf16.msra.mxu0 0
    %2576 = vmatprep.subr.bf16.mxu0 0
    %2577 = vmatpush2.bf16.msra.mxu0 0
    %2578 = vmatprep.subr.bf16.mxu0 0
    %2579 = vmatpush2.bf16.msra.mxu0 0
    %2580 = vmatprep.subr.bf16.mxu0 0
    %2581 = vmatpush2.bf16.msra.mxu0 0
    %2582 = vmatprep.mubr.bf16.mxu0 0
    %2583 = vmatmul.mubr.bf16.gmra.mxu0 %v1924
    %v2584 = vpop.f32.mrf.mxu0
    %v2585 = vadd.f32 %v2392, %v2584
    %v2586 = vpop.f32.mrf.mxu0
    %v2587 = vadd.f32 %v2394, %v2586
    %v2588 = vpop.f32.mrf.mxu0
    %v2589 = vadd.f32 %v2396, %v2588
    %v2590 = vpop.f32.mrf.mxu0
    %v2591 = vadd.f32 %v2398, %v2590
    %2592 = vmatprep.mubr.bf16.mxu0 0
    %2593 = vmatmul.mubr.bf16.gmra.mxu0 %v1927
    %v2594 = vpop.f32.mrf.mxu0
    %v2595 = vadd.f32 %v2402, %v2594
    %v2596 = vpop.f32.mrf.mxu0
    %v2597 = vadd.f32 %v2404, %v2596
    %v2598 = vpop.f32.mrf.mxu0
    %v2599 = vadd.f32 %v2406, %v2598
    %v2600 = vpop.f32.mrf.mxu0
    %v2601 = vadd.f32 %v2408, %v2600
    %2602 = vmatprep.mubr.bf16.mxu0 0
    %2603 = vmatmul.mubr.bf16.gmra.mxu0 %v1930
    %v2604 = vpop.f32.mrf.mxu0
    %v2605 = vadd.f32 %v2412, %v2604
    %v2606 = vpop.f32.mrf.mxu0
    %v2607 = vadd.f32 %v2414, %v2606
    %v2608 = vpop.f32.mrf.mxu0
    %v2609 = vadd.f32 %v2416, %v2608
    %v2610 = vpop.f32.mrf.mxu0
    %v2611 = vadd.f32 %v2418, %v2610
    %2612 = vmatprep.mubr.bf16.mxu0 0
    %2613 = vmatmul.mubr.bf16.gmra.mxu0 %v1933
    %v2614 = vpop.f32.mrf.mxu0
    %v2615 = vadd.f32 %v2422, %v2614
    %v2616 = vpop.f32.mrf.mxu0
    %v2617 = vadd.f32 %v2424, %v2616
    %v2618 = vpop.f32.mrf.mxu0
    %v2619 = vadd.f32 %v2426, %v2618
    %v2620 = vpop.f32.mrf.mxu0
    %v2621 = vadd.f32 %v2428, %v2620
    %2622 = vmatprep.mubr.bf16.mxu0 0
    %2623 = vmatmul.mubr.bf16.gmra.mxu0 %v1936
    %v2624 = vpop.f32.mrf.mxu0
    %v2625 = vadd.f32 %v2432, %v2624
    %v2626 = vpop.f32.mrf.mxu0
    %v2627 = vadd.f32 %v2434, %v2626
    %v2628 = vpop.f32.mrf.mxu0
    %v2629 = vadd.f32 %v2436, %v2628
    %v2630 = vpop.f32.mrf.mxu0
    %v2631 = vadd.f32 %v2438, %v2630
    %2632 = vmatprep.mubr.bf16.mxu0 0
    %2633 = vmatmul.mubr.bf16.gmra.mxu0 %v1939
    %v2634 = vpop.f32.mrf.mxu0
    %v2635 = vadd.f32 %v2442, %v2634
    %v2636 = vpop.f32.mrf.mxu0
    %v2637 = vadd.f32 %v2444, %v2636
    %v2638 = vpop.f32.mrf.mxu0
    %v2639 = vadd.f32 %v2446, %v2638
    %v2640 = vpop.f32.mrf.mxu0
    %v2641 = vadd.f32 %v2448, %v2640
    %2642 = vmatprep.mubr.bf16.mxu0 0
    %2643 = vmatmul.mubr.bf16.gmra.mxu0 %v1942
    %v2644 = vpop.f32.mrf.mxu0
    %v2645 = vadd.f32 %v2452, %v2644
    %v2646 = vpop.f32.mrf.mxu0
    %v2647 = vadd.f32 %v2454, %v2646
    %v2648 = vpop.f32.mrf.mxu0
    %v2649 = vadd.f32 %v2456, %v2648
    %v2650 = vpop.f32.mrf.mxu0
    %v2651 = vadd.f32 %v2458, %v2650
    %2652 = vmatprep.mubr.bf16.mxu0 0
    %2653 = vmatmul.mubr.bf16.gmra.mxu0 %v1945
    %v2654 = vpop.f32.mrf.mxu0
    %v2655 = vadd.f32 %v2462, %v2654
    %v2656 = vpop.f32.mrf.mxu0
    %v2657 = vadd.f32 %v2464, %v2656
    %v2658 = vpop.f32.mrf.mxu0
    %v2659 = vadd.f32 %v2466, %v2658
    %v2660 = vpop.f32.mrf.mxu0
    %v2661 = vadd.f32 %v2468, %v2660
    %2662 = vmatprep.mubr.bf16.mxu0 0
    %2663 = vmatmul.mubr.bf16.gmra.mxu0 %v1948
    %v2664 = vpop.f32.mrf.mxu0
    %v2665 = vadd.f32 %v2472, %v2664
    %v2666 = vpop.f32.mrf.mxu0
    %v2667 = vadd.f32 %v2474, %v2666
    %v2668 = vpop.f32.mrf.mxu0
    %v2669 = vadd.f32 %v2476, %v2668
    %v2670 = vpop.f32.mrf.mxu0
    %v2671 = vadd.f32 %v2478, %v2670
    %2672 = vmatprep.mubr.bf16.mxu0 0
    %2673 = vmatmul.mubr.bf16.gmra.mxu0 %v1951
    %v2674 = vpop.f32.mrf.mxu0
    %v2675 = vadd.f32 %v2482, %v2674
    %v2676 = vpop.f32.mrf.mxu0
    %v2677 = vadd.f32 %v2484, %v2676
    %v2678 = vpop.f32.mrf.mxu0
    %v2679 = vadd.f32 %v2486, %v2678
    %v2680 = vpop.f32.mrf.mxu0
    %v2681 = vadd.f32 %v2488, %v2680
    %2682 = vmatprep.mubr.bf16.mxu0 0
    %2683 = vmatmul.mubr.bf16.gmra.mxu0 %v1954
    %v2684 = vpop.f32.mrf.mxu0
    %v2685 = vadd.f32 %v2492, %v2684
    %v2686 = vpop.f32.mrf.mxu0
    %v2687 = vadd.f32 %v2494, %v2686
    %v2688 = vpop.f32.mrf.mxu0
    %v2689 = vadd.f32 %v2496, %v2688
    %v2690 = vpop.f32.mrf.mxu0
    %v2691 = vadd.f32 %v2498, %v2690
    %2692 = vmatprep.mubr.bf16.mxu0 0
    %2693 = vmatmul.mubr.bf16.gmra.mxu0 %v1957
    %v2694 = vpop.f32.mrf.mxu0
    %v2695 = vadd.f32 %v2502, %v2694
    %v2696 = vpop.f32.mrf.mxu0
    %v2697 = vadd.f32 %v2504, %v2696
    %v2698 = vpop.f32.mrf.mxu0
    %v2699 = vadd.f32 %v2506, %v2698
    %v2700 = vpop.f32.mrf.mxu0
    %v2701 = vadd.f32 %v2508, %v2700
    %2702 = vmatprep.mubr.bf16.mxu0 0
    %2703 = vmatmul.mubr.bf16.gmra.mxu0 %v1960
    %v2704 = vpop.f32.mrf.mxu0
    %v2705 = vadd.f32 %v2512, %v2704
    %v2706 = vpop.f32.mrf.mxu0
    %v2707 = vadd.f32 %v2514, %v2706
    %v2708 = vpop.f32.mrf.mxu0
    %v2709 = vadd.f32 %v2516, %v2708
    %v2710 = vpop.f32.mrf.mxu0
    %v2711 = vadd.f32 %v2518, %v2710
    %2712 = vmatprep.mubr.bf16.mxu0 0
    %2713 = vmatmul.mubr.bf16.gmra.mxu0 %v1963
    %v2714 = vpop.f32.mrf.mxu0
    %v2715 = vadd.f32 %v2522, %v2714
    %v2716 = vpop.f32.mrf.mxu0
    %v2717 = vadd.f32 %v2524, %v2716
    %v2718 = vpop.f32.mrf.mxu0
    %v2719 = vadd.f32 %v2526, %v2718
    %v2720 = vpop.f32.mrf.mxu0
    %v2721 = vadd.f32 %v2528, %v2720
    %2722 = vmatprep.mubr.bf16.mxu0 0
    %2723 = vmatmul.mubr.bf16.gmra.mxu0 %v1966
    %v2724 = vpop.f32.mrf.mxu0
    %v2725 = vadd.f32 %v2532, %v2724
    %v2726 = vpop.f32.mrf.mxu0
    %v2727 = vadd.f32 %v2534, %v2726
    %v2728 = vpop.f32.mrf.mxu0
    %v2729 = vadd.f32 %v2536, %v2728
    %v2730 = vpop.f32.mrf.mxu0
    %v2731 = vadd.f32 %v2538, %v2730
    %2732 = vmatprep.mubr.bf16.mxu0 0
    %2733 = vmatmul.mubr.bf16.gmra.mxu0 %v1969
    %v2734 = vpop.f32.mrf.mxu0
    %v2735 = vadd.f32 %v2542, %v2734
    %v2736 = vpop.f32.mrf.mxu0
    %v2737 = vadd.f32 %v2544, %v2736
    %v2738 = vpop.f32.mrf.mxu0
    %v2739 = vadd.f32 %v2546, %v2738
    %v2740 = vpop.f32.mrf.mxu0
    %v2741 = vadd.f32 %v2548, %v2740
    %2742 = vdwg.mxu0
    %2743 = vmatprep.subr.bf16.mxu0 %v1561
    %2744 = vmatpush1.bf16.msra.mxu0 %v1560
    %2745 = vmatprep.subr.bf16.mxu0 %v1557
    %2746 = vmatpush1.bf16.msra.mxu0 %v1556
    %2747 = vmatprep.subr.bf16.mxu0 %v1553
    %2748 = vmatpush1.bf16.msra.mxu0 %v1552
    %2749 = vmatprep.subr.bf16.mxu0 %v1549
    %2750 = vmatpush1.bf16.msra.mxu0 %v1548
    %2751 = vmatprep.subr.bf16.mxu0 %v1545
    %2752 = vmatpush1.bf16.msra.mxu0 %v1544
    %2753 = vmatprep.subr.bf16.mxu0 %v1541
    %2754 = vmatpush1.bf16.msra.mxu0 %v1540
    %2755 = vmatprep.subr.bf16.mxu0 %v1537
    %2756 = vmatpush1.bf16.msra.mxu0 %v1536
    %2757 = vmatprep.subr.bf16.mxu0 %v1533
    %2758 = vmatpush1.bf16.msra.mxu0 %v1532
    %2759 = vmatprep.subr.bf16.mxu0 %v1593
    %2760 = vmatpush2.bf16.msra.mxu0 %v1592
    %2761 = vmatprep.subr.bf16.mxu0 %v1589
    %2762 = vmatpush2.bf16.msra.mxu0 %v1588
    %2763 = vmatprep.subr.bf16.mxu0 %v1585
    %2764 = vmatpush2.bf16.msra.mxu0 %v1584
    %2765 = vmatprep.subr.bf16.mxu0 %v1581
    %2766 = vmatpush2.bf16.msra.mxu0 %v1580
    %2767 = vmatprep.subr.bf16.mxu0 %v1577
    %2768 = vmatpush2.bf16.msra.mxu0 %v1576
    %2769 = vmatprep.subr.bf16.mxu0 %v1573
    %2770 = vmatpush2.bf16.msra.mxu0 %v1572
    %2771 = vmatprep.subr.bf16.mxu0 %v1569
    %2772 = vmatpush2.bf16.msra.mxu0 %v1568
    %2773 = vmatprep.subr.bf16.mxu0 %v1565
    %2774 = vmatpush2.bf16.msra.mxu0 %v1564
    %2775 = vmatprep.mubr.bf16.mxu0 %v735
    %2776 = vmatmul.mubr.bf16.gmra.mxu0 %v734
    %v2777 = vpop.f32.mrf.mxu0
    %v2778 = vadd.f32 %v373, %v2777
    %v2779 = vpop.f32.mrf.mxu0
    %v2780 = vadd.f32 %v377, %v2779
    %v2781 = vpop.f32.mrf.mxu0
    %v2782 = vadd.f32 %v373, %v2781
    %v2783 = vpop.f32.mrf.mxu0
    %v2784 = vadd.f32 %v377, %v2783
    %2785 = vmatprep.mubr.bf16.mxu0 %v742
    %2786 = vmatmul.mubr.bf16.gmra.mxu0 %v741
    %v2787 = vpop.f32.mrf.mxu0
    %v2788 = vadd.f32 %v373, %v2787
    %v2789 = vpop.f32.mrf.mxu0
    %v2790 = vadd.f32 %v377, %v2789
    %v2791 = vpop.f32.mrf.mxu0
    %v2792 = vadd.f32 %v373, %v2791
    %v2793 = vpop.f32.mrf.mxu0
    %v2794 = vadd.f32 %v377, %v2793
    %2795 = vmatprep.mubr.bf16.mxu0 %v749
    %2796 = vmatmul.mubr.bf16.gmra.mxu0 %v748
    %v2797 = vpop.f32.mrf.mxu0
    %v2798 = vadd.f32 %v373, %v2797
    %v2799 = vpop.f32.mrf.mxu0
    %v2800 = vadd.f32 %v377, %v2799
    %v2801 = vpop.f32.mrf.mxu0
    %v2802 = vadd.f32 %v373, %v2801
    %v2803 = vpop.f32.mrf.mxu0
    %v2804 = vadd.f32 %v377, %v2803
    %2805 = vmatprep.mubr.bf16.mxu0 %v756
    %2806 = vmatmul.mubr.bf16.gmra.mxu0 %v755
    %v2807 = vpop.f32.mrf.mxu0
    %v2808 = vadd.f32 %v373, %v2807
    %v2809 = vpop.f32.mrf.mxu0
    %v2810 = vadd.f32 %v377, %v2809
    %v2811 = vpop.f32.mrf.mxu0
    %v2812 = vadd.f32 %v373, %v2811
    %v2813 = vpop.f32.mrf.mxu0
    %v2814 = vadd.f32 %v377, %v2813
    %2815 = vmatprep.mubr.bf16.mxu0 %v763
    %2816 = vmatmul.mubr.bf16.gmra.mxu0 %v762
    %v2817 = vpop.f32.mrf.mxu0
    %v2818 = vadd.f32 %v373, %v2817
    %v2819 = vpop.f32.mrf.mxu0
    %v2820 = vadd.f32 %v377, %v2819
    %v2821 = vpop.f32.mrf.mxu0
    %v2822 = vadd.f32 %v373, %v2821
    %v2823 = vpop.f32.mrf.mxu0
    %v2824 = vadd.f32 %v377, %v2823
    %2825 = vmatprep.mubr.bf16.mxu0 %v770
    %2826 = vmatmul.mubr.bf16.gmra.mxu0 %v769
    %v2827 = vpop.f32.mrf.mxu0
    %v2828 = vadd.f32 %v373, %v2827
    %v2829 = vpop.f32.mrf.mxu0
    %v2830 = vadd.f32 %v377, %v2829
    %v2831 = vpop.f32.mrf.mxu0
    %v2832 = vadd.f32 %v373, %v2831
    %v2833 = vpop.f32.mrf.mxu0
    %v2834 = vadd.f32 %v377, %v2833
    %2835 = vmatprep.mubr.bf16.mxu0 %v777
    %2836 = vmatmul.mubr.bf16.gmra.mxu0 %v776
    %v2837 = vpop.f32.mrf.mxu0
    %v2838 = vadd.f32 %v373, %v2837
    %v2839 = vpop.f32.mrf.mxu0
    %v2840 = vadd.f32 %v377, %v2839
    %v2841 = vpop.f32.mrf.mxu0
    %v2842 = vadd.f32 %v373, %v2841
    %v2843 = vpop.f32.mrf.mxu0
    %v2844 = vadd.f32 %v377, %v2843
    %2845 = vmatprep.mubr.bf16.mxu0 %v784
    %2846 = vmatmul.mubr.bf16.gmra.mxu0 %v783
    %v2847 = vpop.f32.mrf.mxu0
    %v2848 = vadd.f32 %v373, %v2847
    %v2849 = vpop.f32.mrf.mxu0
    %v2850 = vadd.f32 %v377, %v2849
    %v2851 = vpop.f32.mrf.mxu0
    %v2852 = vadd.f32 %v373, %v2851
    %v2853 = vpop.f32.mrf.mxu0
    %v2854 = vadd.f32 %v377, %v2853
    %2855 = vmatprep.mubr.bf16.mxu0 %v791
    %2856 = vmatmul.mubr.bf16.gmra.mxu0 %v790
    %v2857 = vpop.f32.mrf.mxu0
    %v2858 = vadd.f32 %v373, %v2857
    %v2859 = vpop.f32.mrf.mxu0
    %v2860 = vadd.f32 %v377, %v2859
    %v2861 = vpop.f32.mrf.mxu0
    %v2862 = vadd.f32 %v373, %v2861
    %v2863 = vpop.f32.mrf.mxu0
    %v2864 = vadd.f32 %v377, %v2863
    %2865 = vmatprep.mubr.bf16.mxu0 %v798
    %2866 = vmatmul.mubr.bf16.gmra.mxu0 %v797
    %v2867 = vpop.f32.mrf.mxu0
    %v2868 = vadd.f32 %v373, %v2867
    %v2869 = vpop.f32.mrf.mxu0
    %v2870 = vadd.f32 %v377, %v2869
    %v2871 = vpop.f32.mrf.mxu0
    %v2872 = vadd.f32 %v373, %v2871
    %v2873 = vpop.f32.mrf.mxu0
    %v2874 = vadd.f32 %v377, %v2873
    %2875 = vmatprep.mubr.bf16.mxu0 %v805
    %2876 = vmatmul.mubr.bf16.gmra.mxu0 %v804
    %v2877 = vpop.f32.mrf.mxu0
    %v2878 = vadd.f32 %v373, %v2877
    %v2879 = vpop.f32.mrf.mxu0
    %v2880 = vadd.f32 %v377, %v2879
    %v2881 = vpop.f32.mrf.mxu0
    %v2882 = vadd.f32 %v373, %v2881
    %v2883 = vpop.f32.mrf.mxu0
    %v2884 = vadd.f32 %v377, %v2883
    %2885 = vmatprep.mubr.bf16.mxu0 %v812
    %2886 = vmatmul.mubr.bf16.gmra.mxu0 %v811
    %v2887 = vpop.f32.mrf.mxu0
    %v2888 = vadd.f32 %v373, %v2887
    %v2889 = vpop.f32.mrf.mxu0
    %v2890 = vadd.f32 %v377, %v2889
    %v2891 = vpop.f32.mrf.mxu0
    %v2892 = vadd.f32 %v373, %v2891
    %v2893 = vpop.f32.mrf.mxu0
    %v2894 = vadd.f32 %v377, %v2893
    %2895 = vmatprep.mubr.bf16.mxu0 %v819
    %2896 = vmatmul.mubr.bf16.gmra.mxu0 %v818
    %v2897 = vpop.f32.mrf.mxu0
    %v2898 = vadd.f32 %v373, %v2897
    %v2899 = vpop.f32.mrf.mxu0
    %v2900 = vadd.f32 %v377, %v2899
    %v2901 = vpop.f32.mrf.mxu0
    %v2902 = vadd.f32 %v373, %v2901
    %v2903 = vpop.f32.mrf.mxu0
    %v2904 = vadd.f32 %v377, %v2903
    %2905 = vmatprep.mubr.bf16.mxu0 %v826
    %2906 = vmatmul.mubr.bf16.gmra.mxu0 %v825
    %v2907 = vpop.f32.mrf.mxu0
    %v2908 = vadd.f32 %v373, %v2907
    %v2909 = vpop.f32.mrf.mxu0
    %v2910 = vadd.f32 %v377, %v2909
    %v2911 = vpop.f32.mrf.mxu0
    %v2912 = vadd.f32 %v373, %v2911
    %v2913 = vpop.f32.mrf.mxu0
    %v2914 = vadd.f32 %v377, %v2913
    %2915 = vmatprep.mubr.bf16.mxu0 %v833
    %2916 = vmatmul.mubr.bf16.gmra.mxu0 %v832
    %v2917 = vpop.f32.mrf.mxu0
    %v2918 = vadd.f32 %v373, %v2917
    %v2919 = vpop.f32.mrf.mxu0
    %v2920 = vadd.f32 %v377, %v2919
    %v2921 = vpop.f32.mrf.mxu0
    %v2922 = vadd.f32 %v373, %v2921
    %v2923 = vpop.f32.mrf.mxu0
    %v2924 = vadd.f32 %v377, %v2923
    %2925 = vmatprep.mubr.bf16.mxu0 %v840
    %2926 = vmatmul.mubr.bf16.gmra.mxu0 %v839
    %v2927 = vpop.f32.mrf.mxu0
    %v2928 = vadd.f32 %v373, %v2927
    %v2929 = vpop.f32.mrf.mxu0
    %v2930 = vadd.f32 %v377, %v2929
    %v2931 = vpop.f32.mrf.mxu0
    %v2932 = vadd.f32 %v373, %v2931
    %v2933 = vpop.f32.mrf.mxu0
    %v2934 = vadd.f32 %v377, %v2933
    %2935 = vdwg.mxu0
    %2936 = vmatprep.subr.bf16.mxu0 %v1625
    %2937 = vmatpush1.bf16.msra.mxu0 %v1624
    %2938 = vmatprep.subr.bf16.mxu0 %v1621
    %2939 = vmatpush1.bf16.msra.mxu0 %v1620
    %2940 = vmatprep.subr.bf16.mxu0 %v1617
    %2941 = vmatpush1.bf16.msra.mxu0 %v1616
    %2942 = vmatprep.subr.bf16.mxu0 %v1613
    %2943 = vmatpush1.bf16.msra.mxu0 %v1612
    %2944 = vmatprep.subr.bf16.mxu0 %v1609
    %2945 = vmatpush1.bf16.msra.mxu0 %v1608
    %2946 = vmatprep.subr.bf16.mxu0 %v1605
    %2947 = vmatpush1.bf16.msra.mxu0 %v1604
    %2948 = vmatprep.subr.bf16.mxu0 %v1601
    %2949 = vmatpush1.bf16.msra.mxu0 %v1600
    %2950 = vmatprep.subr.bf16.mxu0 %v1597
    %2951 = vmatpush1.bf16.msra.mxu0 %v1596
    %2952 = vmatprep.subr.bf16.mxu0 %v1657
    %2953 = vmatpush2.bf16.msra.mxu0 %v1656
    %2954 = vmatprep.subr.bf16.mxu0 %v1653
    %2955 = vmatpush2.bf16.msra.mxu0 %v1652
    %2956 = vmatprep.subr.bf16.mxu0 %v1649
    %2957 = vmatpush2.bf16.msra.mxu0 %v1648
    %2958 = vmatprep.subr.bf16.mxu0 %v1645
    %2959 = vmatpush2.bf16.msra.mxu0 %v1644
    %2960 = vmatprep.subr.bf16.mxu0 %v1641
    %2961 = vmatpush2.bf16.msra.mxu0 %v1640
    %2962 = vmatprep.subr.bf16.mxu0 %v1637
    %2963 = vmatpush2.bf16.msra.mxu0 %v1636
    %2964 = vmatprep.subr.bf16.mxu0 %v1633
    %2965 = vmatpush2.bf16.msra.mxu0 %v1632
    %2966 = vmatprep.subr.bf16.mxu0 %v1629
    %2967 = vmatpush2.bf16.msra.mxu0 %v1628
    %2968 = vmatprep.mubr.bf16.mxu0 %v737
    %2969 = vmatmul.mubr.bf16.gmra.mxu0 %v736
    %v2970 = vpop.f32.mrf.mxu0
    %v2971 = vadd.f32 %v2778, %v2970
    %v2972 = vpop.f32.mrf.mxu0
    %v2973 = vadd.f32 %v2780, %v2972
    %v2974 = vpop.f32.mrf.mxu0
    %v2975 = vadd.f32 %v2782, %v2974
    %v2976 = vpop.f32.mrf.mxu0
    %v2977 = vadd.f32 %v2784, %v2976
    %2978 = vmatprep.mubr.bf16.mxu0 %v744
    %2979 = vmatmul.mubr.bf16.gmra.mxu0 %v743
    %v2980 = vpop.f32.mrf.mxu0
    %v2981 = vadd.f32 %v2788, %v2980
    %v2982 = vpop.f32.mrf.mxu0
    %v2983 = vadd.f32 %v2790, %v2982
    %v2984 = vpop.f32.mrf.mxu0
    %v2985 = vadd.f32 %v2792, %v2984
    %v2986 = vpop.f32.mrf.mxu0
    %v2987 = vadd.f32 %v2794, %v2986
    %2988 = vmatprep.mubr.bf16.mxu0 %v751
    %2989 = vmatmul.mubr.bf16.gmra.mxu0 %v750
    %v2990 = vpop.f32.mrf.mxu0
    %v2991 = vadd.f32 %v2798, %v2990
    %v2992 = vpop.f32.mrf.mxu0
    %v2993 = vadd.f32 %v2800, %v2992
    %v2994 = vpop.f32.mrf.mxu0
    %v2995 = vadd.f32 %v2802, %v2994
    %v2996 = vpop.f32.mrf.mxu0
    %v2997 = vadd.f32 %v2804, %v2996
    %2998 = vmatprep.mubr.bf16.mxu0 %v758
    %2999 = vmatmul.mubr.bf16.gmra.mxu0 %v757
    %v3000 = vpop.f32.mrf.mxu0
    %v3001 = vadd.f32 %v2808, %v3000
    %v3002 = vpop.f32.mrf.mxu0
    %v3003 = vadd.f32 %v2810, %v3002
    %v3004 = vpop.f32.mrf.mxu0
    %v3005 = vadd.f32 %v2812, %v3004
    %v3006 = vpop.f32.mrf.mxu0
    %v3007 = vadd.f32 %v2814, %v3006
    %3008 = vmatprep.mubr.bf16.mxu0 %v765
    %3009 = vmatmul.mubr.bf16.gmra.mxu0 %v764
    %v3010 = vpop.f32.mrf.mxu0
    %v3011 = vadd.f32 %v2818, %v3010
    %v3012 = vpop.f32.mrf.mxu0
    %v3013 = vadd.f32 %v2820, %v3012
    %v3014 = vpop.f32.mrf.mxu0
    %v3015 = vadd.f32 %v2822, %v3014
    %v3016 = vpop.f32.mrf.mxu0
    %v3017 = vadd.f32 %v2824, %v3016
    %3018 = vmatprep.mubr.bf16.mxu0 %v772
    %3019 = vmatmul.mubr.bf16.gmra.mxu0 %v771
    %v3020 = vpop.f32.mrf.mxu0
    %v3021 = vadd.f32 %v2828, %v3020
    %v3022 = vpop.f32.mrf.mxu0
    %v3023 = vadd.f32 %v2830, %v3022
    %v3024 = vpop.f32.mrf.mxu0
    %v3025 = vadd.f32 %v2832, %v3024
    %v3026 = vpop.f32.mrf.mxu0
    %v3027 = vadd.f32 %v2834, %v3026
    %3028 = vmatprep.mubr.bf16.mxu0 %v779
    %3029 = vmatmul.mubr.bf16.gmra.mxu0 %v778
    %v3030 = vpop.f32.mrf.mxu0
    %v3031 = vadd.f32 %v2838, %v3030
    %v3032 = vpop.f32.mrf.mxu0
    %v3033 = vadd.f32 %v2840, %v3032
    %v3034 = vpop.f32.mrf.mxu0
    %v3035 = vadd.f32 %v2842, %v3034
    %v3036 = vpop.f32.mrf.mxu0
    %v3037 = vadd.f32 %v2844, %v3036
    %3038 = vmatprep.mubr.bf16.mxu0 %v786
    %3039 = vmatmul.mubr.bf16.gmra.mxu0 %v785
    %v3040 = vpop.f32.mrf.mxu0
    %v3041 = vadd.f32 %v2848, %v3040
    %v3042 = vpop.f32.mrf.mxu0
    %v3043 = vadd.f32 %v2850, %v3042
    %v3044 = vpop.f32.mrf.mxu0
    %v3045 = vadd.f32 %v2852, %v3044
    %v3046 = vpop.f32.mrf.mxu0
    %v3047 = vadd.f32 %v2854, %v3046
    %3048 = vmatprep.mubr.bf16.mxu0 %v793
    %3049 = vmatmul.mubr.bf16.gmra.mxu0 %v792
    %v3050 = vpop.f32.mrf.mxu0
    %v3051 = vadd.f32 %v2858, %v3050
    %v3052 = vpop.f32.mrf.mxu0
    %v3053 = vadd.f32 %v2860, %v3052
    %v3054 = vpop.f32.mrf.mxu0
    %v3055 = vadd.f32 %v2862, %v3054
    %v3056 = vpop.f32.mrf.mxu0
    %v3057 = vadd.f32 %v2864, %v3056
    %3058 = vmatprep.mubr.bf16.mxu0 %v800
    %3059 = vmatmul.mubr.bf16.gmra.mxu0 %v799
    %v3060 = vpop.f32.mrf.mxu0
    %v3061 = vadd.f32 %v2868, %v3060
    %v3062 = vpop.f32.mrf.mxu0
    %v3063 = vadd.f32 %v2870, %v3062
    %v3064 = vpop.f32.mrf.mxu0
    %v3065 = vadd.f32 %v2872, %v3064
    %v3066 = vpop.f32.mrf.mxu0
    %v3067 = vadd.f32 %v2874, %v3066
    %3068 = vmatprep.mubr.bf16.mxu0 %v807
    %3069 = vmatmul.mubr.bf16.gmra.mxu0 %v806
    %v3070 = vpop.f32.mrf.mxu0
    %v3071 = vadd.f32 %v2878, %v3070
    %v3072 = vpop.f32.mrf.mxu0
    %v3073 = vadd.f32 %v2880, %v3072
    %v3074 = vpop.f32.mrf.mxu0
    %v3075 = vadd.f32 %v2882, %v3074
    %v3076 = vpop.f32.mrf.mxu0
    %v3077 = vadd.f32 %v2884, %v3076
    %3078 = vmatprep.mubr.bf16.mxu0 %v814
    %3079 = vmatmul.mubr.bf16.gmra.mxu0 %v813
    %v3080 = vpop.f32.mrf.mxu0
    %v3081 = vadd.f32 %v2888, %v3080
    %v3082 = vpop.f32.mrf.mxu0
    %v3083 = vadd.f32 %v2890, %v3082
    %v3084 = vpop.f32.mrf.mxu0
    %v3085 = vadd.f32 %v2892, %v3084
    %v3086 = vpop.f32.mrf.mxu0
    %v3087 = vadd.f32 %v2894, %v3086
    %3088 = vmatprep.mubr.bf16.mxu0 %v821
    %3089 = vmatmul.mubr.bf16.gmra.mxu0 %v820
    %v3090 = vpop.f32.mrf.mxu0
    %v3091 = vadd.f32 %v2898, %v3090
    %v3092 = vpop.f32.mrf.mxu0
    %v3093 = vadd.f32 %v2900, %v3092
    %v3094 = vpop.f32.mrf.mxu0
    %v3095 = vadd.f32 %v2902, %v3094
    %v3096 = vpop.f32.mrf.mxu0
    %v3097 = vadd.f32 %v2904, %v3096
    %3098 = vmatprep.mubr.bf16.mxu0 %v828
    %3099 = vmatmul.mubr.bf16.gmra.mxu0 %v827
    %v3100 = vpop.f32.mrf.mxu0
    %v3101 = vadd.f32 %v2908, %v3100
    %v3102 = vpop.f32.mrf.mxu0
    %v3103 = vadd.f32 %v2910, %v3102
    %v3104 = vpop.f32.mrf.mxu0
    %v3105 = vadd.f32 %v2912, %v3104
    %v3106 = vpop.f32.mrf.mxu0
    %v3107 = vadd.f32 %v2914, %v3106
    %3108 = vmatprep.mubr.bf16.mxu0 %v835
    %3109 = vmatmul.mubr.bf16.gmra.mxu0 %v834
    %v3110 = vpop.f32.mrf.mxu0
    %v3111 = vadd.f32 %v2918, %v3110
    %v3112 = vpop.f32.mrf.mxu0
    %v3113 = vadd.f32 %v2920, %v3112
    %v3114 = vpop.f32.mrf.mxu0
    %v3115 = vadd.f32 %v2922, %v3114
    %v3116 = vpop.f32.mrf.mxu0
    %v3117 = vadd.f32 %v2924, %v3116
    %3118 = vmatprep.mubr.bf16.mxu0 %v842
    %3119 = vmatmul.mubr.bf16.gmra.mxu0 %v841
    %v3120 = vpop.f32.mrf.mxu0
    %v3121 = vadd.f32 %v2928, %v3120
    %v3122 = vpop.f32.mrf.mxu0
    %v3123 = vadd.f32 %v2930, %v3122
    %v3124 = vpop.f32.mrf.mxu0
    %v3125 = vadd.f32 %v2932, %v3124
    %v3126 = vpop.f32.mrf.mxu0
    %v3127 = vadd.f32 %v2934, %v3126
    %3128 = vdwg.mxu0
    %3129 = vmatprep.subr.bf16.mxu0 %v1689
    %3130 = vmatpush1.bf16.msra.mxu0 %v1688
    %3131 = vmatprep.subr.bf16.mxu0 %v1685
    %3132 = vmatpush1.bf16.msra.mxu0 %v1684
    %3133 = vmatprep.subr.bf16.mxu0 %v1681
    %3134 = vmatpush1.bf16.msra.mxu0 %v1680
    %3135 = vmatprep.subr.bf16.mxu0 %v1677
    %3136 = vmatpush1.bf16.msra.mxu0 %v1676
    %3137 = vmatprep.subr.bf16.mxu0 %v1673
    %3138 = vmatpush1.bf16.msra.mxu0 %v1672
    %3139 = vmatprep.subr.bf16.mxu0 %v1669
    %3140 = vmatpush1.bf16.msra.mxu0 %v1668
    %3141 = vmatprep.subr.bf16.mxu0 %v1665
    %3142 = vmatpush1.bf16.msra.mxu0 %v1664
    %3143 = vmatprep.subr.bf16.mxu0 %v1661
    %3144 = vmatpush1.bf16.msra.mxu0 %v1660
    %3145 = vmatprep.subr.bf16.mxu0 %v1721
    %3146 = vmatpush2.bf16.msra.mxu0 %v1720
    %3147 = vmatprep.subr.bf16.mxu0 %v1717
    %3148 = vmatpush2.bf16.msra.mxu0 %v1716
    %3149 = vmatprep.subr.bf16.mxu0 %v1713
    %3150 = vmatpush2.bf16.msra.mxu0 %v1712
    %3151 = vmatprep.subr.bf16.mxu0 %v1709
    %3152 = vmatpush2.bf16.msra.mxu0 %v1708
    %3153 = vmatprep.subr.bf16.mxu0 %v1705
    %3154 = vmatpush2.bf16.msra.mxu0 %v1704
    %3155 = vmatprep.subr.bf16.mxu0 %v1701
    %3156 = vmatpush2.bf16.msra.mxu0 %v1700
    %3157 = vmatprep.subr.bf16.mxu0 %v1697
    %3158 = vmatpush2.bf16.msra.mxu0 %v1696
    %3159 = vmatprep.subr.bf16.mxu0 %v1693
    %3160 = vmatpush2.bf16.msra.mxu0 %v1692
    %3161 = vmatprep.mubr.bf16.mxu0 %v739
    %3162 = vmatmul.mubr.bf16.gmra.mxu0 %v738
    %v3163 = vpop.f32.mrf.mxu0
    %v3164 = vadd.f32 %v2971, %v3163
    %v3165 = vpop.f32.mrf.mxu0
    %v3166 = vadd.f32 %v2973, %v3165
    %v3167 = vpop.f32.mrf.mxu0
    %v3168 = vadd.f32 %v2975, %v3167
    %v3169 = vpop.f32.mrf.mxu0
    %v3170 = vadd.f32 %v2977, %v3169
    %3171 = vmatprep.mubr.bf16.mxu0 %v746
    %3172 = vmatmul.mubr.bf16.gmra.mxu0 %v745
    %v3173 = vpop.f32.mrf.mxu0
    %v3174 = vadd.f32 %v2981, %v3173
    %v3175 = vpop.f32.mrf.mxu0
    %v3176 = vadd.f32 %v2983, %v3175
    %v3177 = vpop.f32.mrf.mxu0
    %v3178 = vadd.f32 %v2985, %v3177
    %v3179 = vpop.f32.mrf.mxu0
    %v3180 = vadd.f32 %v2987, %v3179
    %3181 = vmatprep.mubr.bf16.mxu0 %v753
    %3182 = vmatmul.mubr.bf16.gmra.mxu0 %v752
    %v3183 = vpop.f32.mrf.mxu0
    %v3184 = vadd.f32 %v2991, %v3183
    %v3185 = vpop.f32.mrf.mxu0
    %v3186 = vadd.f32 %v2993, %v3185
    %v3187 = vpop.f32.mrf.mxu0
    %v3188 = vadd.f32 %v2995, %v3187
    %v3189 = vpop.f32.mrf.mxu0
    %v3190 = vadd.f32 %v2997, %v3189
    %3191 = vmatprep.mubr.bf16.mxu0 %v760
    %3192 = vmatmul.mubr.bf16.gmra.mxu0 %v759
    %v3193 = vpop.f32.mrf.mxu0
    %v3194 = vadd.f32 %v3001, %v3193
    %v3195 = vpop.f32.mrf.mxu0
    %v3196 = vadd.f32 %v3003, %v3195
    %v3197 = vpop.f32.mrf.mxu0
    %v3198 = vadd.f32 %v3005, %v3197
    %v3199 = vpop.f32.mrf.mxu0
    %v3200 = vadd.f32 %v3007, %v3199
    %3201 = vmatprep.mubr.bf16.mxu0 %v767
    %3202 = vmatmul.mubr.bf16.gmra.mxu0 %v766
    %v3203 = vpop.f32.mrf.mxu0
    %v3204 = vadd.f32 %v3011, %v3203
    %v3205 = vpop.f32.mrf.mxu0
    %v3206 = vadd.f32 %v3013, %v3205
    %v3207 = vpop.f32.mrf.mxu0
    %v3208 = vadd.f32 %v3015, %v3207
    %v3209 = vpop.f32.mrf.mxu0
    %v3210 = vadd.f32 %v3017, %v3209
    %3211 = vmatprep.mubr.bf16.mxu0 %v774
    %3212 = vmatmul.mubr.bf16.gmra.mxu0 %v773
    %v3213 = vpop.f32.mrf.mxu0
    %v3214 = vadd.f32 %v3021, %v3213
    %v3215 = vpop.f32.mrf.mxu0
    %v3216 = vadd.f32 %v3023, %v3215
    %v3217 = vpop.f32.mrf.mxu0
    %v3218 = vadd.f32 %v3025, %v3217
    %v3219 = vpop.f32.mrf.mxu0
    %v3220 = vadd.f32 %v3027, %v3219
    %3221 = vmatprep.mubr.bf16.mxu0 %v781
    %3222 = vmatmul.mubr.bf16.gmra.mxu0 %v780
    %v3223 = vpop.f32.mrf.mxu0
    %v3224 = vadd.f32 %v3031, %v3223
    %v3225 = vpop.f32.mrf.mxu0
    %v3226 = vadd.f32 %v3033, %v3225
    %v3227 = vpop.f32.mrf.mxu0
    %v3228 = vadd.f32 %v3035, %v3227
    %v3229 = vpop.f32.mrf.mxu0
    %v3230 = vadd.f32 %v3037, %v3229
    %3231 = vmatprep.mubr.bf16.mxu0 %v788
    %3232 = vmatmul.mubr.bf16.gmra.mxu0 %v787
    %v3233 = vpop.f32.mrf.mxu0
    %v3234 = vadd.f32 %v3041, %v3233
    %v3235 = vpop.f32.mrf.mxu0
    %v3236 = vadd.f32 %v3043, %v3235
    %v3237 = vpop.f32.mrf.mxu0
    %v3238 = vadd.f32 %v3045, %v3237
    %v3239 = vpop.f32.mrf.mxu0
    %v3240 = vadd.f32 %v3047, %v3239
    %3241 = vmatprep.mubr.bf16.mxu0 %v795
    %3242 = vmatmul.mubr.bf16.gmra.mxu0 %v794
    %v3243 = vpop.f32.mrf.mxu0
    %v3244 = vadd.f32 %v3051, %v3243
    %v3245 = vpop.f32.mrf.mxu0
    %v3246 = vadd.f32 %v3053, %v3245
    %v3247 = vpop.f32.mrf.mxu0
    %v3248 = vadd.f32 %v3055, %v3247
    %v3249 = vpop.f32.mrf.mxu0
    %v3250 = vadd.f32 %v3057, %v3249
    %3251 = vmatprep.mubr.bf16.mxu0 %v802
    %3252 = vmatmul.mubr.bf16.gmra.mxu0 %v801
    %v3253 = vpop.f32.mrf.mxu0
    %v3254 = vadd.f32 %v3061, %v3253
    %v3255 = vpop.f32.mrf.mxu0
    %v3256 = vadd.f32 %v3063, %v3255
    %v3257 = vpop.f32.mrf.mxu0
    %v3258 = vadd.f32 %v3065, %v3257
    %v3259 = vpop.f32.mrf.mxu0
    %v3260 = vadd.f32 %v3067, %v3259
    %3261 = vmatprep.mubr.bf16.mxu0 %v809
    %3262 = vmatmul.mubr.bf16.gmra.mxu0 %v808
    %v3263 = vpop.f32.mrf.mxu0
    %v3264 = vadd.f32 %v3071, %v3263
    %v3265 = vpop.f32.mrf.mxu0
    %v3266 = vadd.f32 %v3073, %v3265
    %v3267 = vpop.f32.mrf.mxu0
    %v3268 = vadd.f32 %v3075, %v3267
    %v3269 = vpop.f32.mrf.mxu0
    %v3270 = vadd.f32 %v3077, %v3269
    %3271 = vmatprep.mubr.bf16.mxu0 %v816
    %3272 = vmatmul.mubr.bf16.gmra.mxu0 %v815
    %v3273 = vpop.f32.mrf.mxu0
    %v3274 = vadd.f32 %v3081, %v3273
    %v3275 = vpop.f32.mrf.mxu0
    %v3276 = vadd.f32 %v3083, %v3275
    %v3277 = vpop.f32.mrf.mxu0
    %v3278 = vadd.f32 %v3085, %v3277
    %v3279 = vpop.f32.mrf.mxu0
    %v3280 = vadd.f32 %v3087, %v3279
    %3281 = vmatprep.mubr.bf16.mxu0 %v823
    %3282 = vmatmul.mubr.bf16.gmra.mxu0 %v822
    %v3283 = vpop.f32.mrf.mxu0
    %v3284 = vadd.f32 %v3091, %v3283
    %v3285 = vpop.f32.mrf.mxu0
    %v3286 = vadd.f32 %v3093, %v3285
    %v3287 = vpop.f32.mrf.mxu0
    %v3288 = vadd.f32 %v3095, %v3287
    %v3289 = vpop.f32.mrf.mxu0
    %v3290 = vadd.f32 %v3097, %v3289
    %3291 = vmatprep.mubr.bf16.mxu0 %v830
    %3292 = vmatmul.mubr.bf16.gmra.mxu0 %v829
    %v3293 = vpop.f32.mrf.mxu0
    %v3294 = vadd.f32 %v3101, %v3293
    %v3295 = vpop.f32.mrf.mxu0
    %v3296 = vadd.f32 %v3103, %v3295
    %v3297 = vpop.f32.mrf.mxu0
    %v3298 = vadd.f32 %v3105, %v3297
    %v3299 = vpop.f32.mrf.mxu0
    %v3300 = vadd.f32 %v3107, %v3299
    %3301 = vmatprep.mubr.bf16.mxu0 %v837
    %3302 = vmatmul.mubr.bf16.gmra.mxu0 %v836
    %v3303 = vpop.f32.mrf.mxu0
    %v3304 = vadd.f32 %v3111, %v3303
    %v3305 = vpop.f32.mrf.mxu0
    %v3306 = vadd.f32 %v3113, %v3305
    %v3307 = vpop.f32.mrf.mxu0
    %v3308 = vadd.f32 %v3115, %v3307
    %v3309 = vpop.f32.mrf.mxu0
    %v3310 = vadd.f32 %v3117, %v3309
    %3311 = vmatprep.mubr.bf16.mxu0 %v844
    %3312 = vmatmul.mubr.bf16.gmra.mxu0 %v843
    %v3313 = vpop.f32.mrf.mxu0
    %v3314 = vadd.f32 %v3121, %v3313
    %v3315 = vpop.f32.mrf.mxu0
    %v3316 = vadd.f32 %v3123, %v3315
    %v3317 = vpop.f32.mrf.mxu0
    %v3318 = vadd.f32 %v3125, %v3317
    %v3319 = vpop.f32.mrf.mxu0
    %v3320 = vadd.f32 %v3127, %v3319
    %3321 = vdwg.mxu0
    %3322 = vmatprep.subr.bf16.mxu0 0
    %3323 = vmatpush1.bf16.msra.mxu0 0
    %3324 = vmatprep.subr.bf16.mxu0 0
    %3325 = vmatpush1.bf16.msra.mxu0 0
    %3326 = vmatprep.subr.bf16.mxu0 0
    %3327 = vmatpush1.bf16.msra.mxu0 0
    %3328 = vmatprep.subr.bf16.mxu0 0
    %3329 = vmatpush1.bf16.msra.mxu0 0
    %3330 = vmatprep.subr.bf16.mxu0 0
    %3331 = vmatpush1.bf16.msra.mxu0 0
    %3332 = vmatprep.subr.bf16.mxu0 0
    %3333 = vmatpush1.bf16.msra.mxu0 0
    %3334 = vmatprep.subr.bf16.mxu0 0
    %3335 = vmatpush1.bf16.msra.mxu0 0
    %3336 = vmatprep.subr.bf16.mxu0 %v1725
    %3337 = vmatpush1.bf16.msra.mxu0 %v1724
    %3338 = vmatprep.subr.bf16.mxu0 0
    %3339 = vmatpush2.bf16.msra.mxu0 0
    %3340 = vmatprep.subr.bf16.mxu0 0
    %3341 = vmatpush2.bf16.msra.mxu0 0
    %3342 = vmatprep.subr.bf16.mxu0 0
    %3343 = vmatpush2.bf16.msra.mxu0 0
    %3344 = vmatprep.subr.bf16.mxu0 0
    %3345 = vmatpush2.bf16.msra.mxu0 0
    %3346 = vmatprep.subr.bf16.mxu0 0
    %3347 = vmatpush2.bf16.msra.mxu0 0
    %3348 = vmatprep.subr.bf16.mxu0 0
    %3349 = vmatpush2.bf16.msra.mxu0 0
    %3350 = vmatprep.subr.bf16.mxu0 0
    %3351 = vmatpush2.bf16.msra.mxu0 0
    %3352 = vmatprep.subr.bf16.mxu0 0
    %3353 = vmatpush2.bf16.msra.mxu0 0
    %3354 = vmatprep.mubr.bf16.mxu0 0
    %3355 = vmatmul.mubr.bf16.gmra.mxu0 %v1924
    %v3356 = vpop.f32.mrf.mxu0
    %v3357 = vadd.f32 %v3164, %v3356
    %v3358 = vpop.f32.mrf.mxu0
    %v3359 = vadd.f32 %v3166, %v3358
    %v3360 = vpop.f32.mrf.mxu0
    %v3361 = vadd.f32 %v3168, %v3360
    %v3362 = vpop.f32.mrf.mxu0
    %v3363 = vadd.f32 %v3170, %v3362
    %3364 = vmatprep.mubr.bf16.mxu0 0
    %3365 = vmatmul.mubr.bf16.gmra.mxu0 %v1927
    %v3366 = vpop.f32.mrf.mxu0
    %v3367 = vadd.f32 %v3174, %v3366
    %v3368 = vpop.f32.mrf.mxu0
    %v3369 = vadd.f32 %v3176, %v3368
    %v3370 = vpop.f32.mrf.mxu0
    %v3371 = vadd.f32 %v3178, %v3370
    %v3372 = vpop.f32.mrf.mxu0
    %v3373 = vadd.f32 %v3180, %v3372
    %3374 = vmatprep.mubr.bf16.mxu0 0
    %3375 = vmatmul.mubr.bf16.gmra.mxu0 %v1930
    %v3376 = vpop.f32.mrf.mxu0
    %v3377 = vadd.f32 %v3184, %v3376
    %v3378 = vpop.f32.mrf.mxu0
    %v3379 = vadd.f32 %v3186, %v3378
    %v3380 = vpop.f32.mrf.mxu0
    %v3381 = vadd.f32 %v3188, %v3380
    %v3382 = vpop.f32.mrf.mxu0
    %v3383 = vadd.f32 %v3190, %v3382
    %3384 = vmatprep.mubr.bf16.mxu0 0
    %3385 = vmatmul.mubr.bf16.gmra.mxu0 %v1933
    %v3386 = vpop.f32.mrf.mxu0
    %v3387 = vadd.f32 %v3194, %v3386
    %v3388 = vpop.f32.mrf.mxu0
    %v3389 = vadd.f32 %v3196, %v3388
    %v3390 = vpop.f32.mrf.mxu0
    %v3391 = vadd.f32 %v3198, %v3390
    %v3392 = vpop.f32.mrf.mxu0
    %v3393 = vadd.f32 %v3200, %v3392
    %3394 = vmatprep.mubr.bf16.mxu0 0
    %3395 = vmatmul.mubr.bf16.gmra.mxu0 %v1936
    %v3396 = vpop.f32.mrf.mxu0
    %v3397 = vadd.f32 %v3204, %v3396
    %v3398 = vpop.f32.mrf.mxu0
    %v3399 = vadd.f32 %v3206, %v3398
    %v3400 = vpop.f32.mrf.mxu0
    %v3401 = vadd.f32 %v3208, %v3400
    %v3402 = vpop.f32.mrf.mxu0
    %v3403 = vadd.f32 %v3210, %v3402
    %3404 = vmatprep.mubr.bf16.mxu0 0
    %3405 = vmatmul.mubr.bf16.gmra.mxu0 %v1939
    %v3406 = vpop.f32.mrf.mxu0
    %v3407 = vadd.f32 %v3214, %v3406
    %v3408 = vpop.f32.mrf.mxu0
    %v3409 = vadd.f32 %v3216, %v3408
    %v3410 = vpop.f32.mrf.mxu0
    %v3411 = vadd.f32 %v3218, %v3410
    %v3412 = vpop.f32.mrf.mxu0
    %v3413 = vadd.f32 %v3220, %v3412
    %3414 = vmatprep.mubr.bf16.mxu0 0
    %3415 = vmatmul.mubr.bf16.gmra.mxu0 %v1942
    %v3416 = vpop.f32.mrf.mxu0
    %v3417 = vadd.f32 %v3224, %v3416
    %v3418 = vpop.f32.mrf.mxu0
    %v3419 = vadd.f32 %v3226, %v3418
    %v3420 = vpop.f32.mrf.mxu0
    %v3421 = vadd.f32 %v3228, %v3420
    %v3422 = vpop.f32.mrf.mxu0
    %v3423 = vadd.f32 %v3230, %v3422
    %3424 = vmatprep.mubr.bf16.mxu0 0
    %3425 = vmatmul.mubr.bf16.gmra.mxu0 %v1945
    %v3426 = vpop.f32.mrf.mxu0
    %v3427 = vadd.f32 %v3234, %v3426
    %v3428 = vpop.f32.mrf.mxu0
    %v3429 = vadd.f32 %v3236, %v3428
    %v3430 = vpop.f32.mrf.mxu0
    %v3431 = vadd.f32 %v3238, %v3430
    %v3432 = vpop.f32.mrf.mxu0
    %v3433 = vadd.f32 %v3240, %v3432
    %3434 = vmatprep.mubr.bf16.mxu0 0
    %3435 = vmatmul.mubr.bf16.gmra.mxu0 %v1948
    %v3436 = vpop.f32.mrf.mxu0
    %v3437 = vadd.f32 %v3244, %v3436
    %v3438 = vpop.f32.mrf.mxu0
    %v3439 = vadd.f32 %v3246, %v3438
    %v3440 = vpop.f32.mrf.mxu0
    %v3441 = vadd.f32 %v3248, %v3440
    %v3442 = vpop.f32.mrf.mxu0
    %v3443 = vadd.f32 %v3250, %v3442
    %3444 = vmatprep.mubr.bf16.mxu0 0
    %3445 = vmatmul.mubr.bf16.gmra.mxu0 %v1951
    %v3446 = vpop.f32.mrf.mxu0
    %v3447 = vadd.f32 %v3254, %v3446
    %v3448 = vpop.f32.mrf.mxu0
    %v3449 = vadd.f32 %v3256, %v3448
    %v3450 = vpop.f32.mrf.mxu0
    %v3451 = vadd.f32 %v3258, %v3450
    %v3452 = vpop.f32.mrf.mxu0
    %v3453 = vadd.f32 %v3260, %v3452
    %3454 = vmatprep.mubr.bf16.mxu0 0
    %3455 = vmatmul.mubr.bf16.gmra.mxu0 %v1954
    %v3456 = vpop.f32.mrf.mxu0
    %v3457 = vadd.f32 %v3264, %v3456
    %v3458 = vpop.f32.mrf.mxu0
    %v3459 = vadd.f32 %v3266, %v3458
    %v3460 = vpop.f32.mrf.mxu0
    %v3461 = vadd.f32 %v3268, %v3460
    %v3462 = vpop.f32.mrf.mxu0
    %v3463 = vadd.f32 %v3270, %v3462
    %3464 = vmatprep.mubr.bf16.mxu0 0
    %3465 = vmatmul.mubr.bf16.gmra.mxu0 %v1957
    %v3466 = vpop.f32.mrf.mxu0
    %v3467 = vadd.f32 %v3274, %v3466
    %v3468 = vpop.f32.mrf.mxu0
    %v3469 = vadd.f32 %v3276, %v3468
    %v3470 = vpop.f32.mrf.mxu0
    %v3471 = vadd.f32 %v3278, %v3470
    %v3472 = vpop.f32.mrf.mxu0
    %v3473 = vadd.f32 %v3280, %v3472
    %3474 = vmatprep.mubr.bf16.mxu0 0
    %3475 = vmatmul.mubr.bf16.gmra.mxu0 %v1960
    %v3476 = vpop.f32.mrf.mxu0
    %v3477 = vadd.f32 %v3284, %v3476
    %v3478 = vpop.f32.mrf.mxu0
    %v3479 = vadd.f32 %v3286, %v3478
    %v3480 = vpop.f32.mrf.mxu0
    %v3481 = vadd.f32 %v3288, %v3480
    %v3482 = vpop.f32.mrf.mxu0
    %v3483 = vadd.f32 %v3290, %v3482
    %3484 = vmatprep.mubr.bf16.mxu0 0
    %3485 = vmatmul.mubr.bf16.gmra.mxu0 %v1963
    %v3486 = vpop.f32.mrf.mxu0
    %v3487 = vadd.f32 %v3294, %v3486
    %v3488 = vpop.f32.mrf.mxu0
    %v3489 = vadd.f32 %v3296, %v3488
    %v3490 = vpop.f32.mrf.mxu0
    %v3491 = vadd.f32 %v3298, %v3490
    %v3492 = vpop.f32.mrf.mxu0
    %v3493 = vadd.f32 %v3300, %v3492
    %3494 = vmatprep.mubr.bf16.mxu0 0
    %3495 = vmatmul.mubr.bf16.gmra.mxu0 %v1966
    %v3496 = vpop.f32.mrf.mxu0
    %v3497 = vadd.f32 %v3304, %v3496
    %v3498 = vpop.f32.mrf.mxu0
    %v3499 = vadd.f32 %v3306, %v3498
    %v3500 = vpop.f32.mrf.mxu0
    %v3501 = vadd.f32 %v3308, %v3500
    %v3502 = vpop.f32.mrf.mxu0
    %v3503 = vadd.f32 %v3310, %v3502
    %3504 = vmatprep.mubr.bf16.mxu0 0
    %3505 = vmatmul.mubr.bf16.gmra.mxu0 %v1969
    %v3506 = vpop.f32.mrf.mxu0
    %v3507 = vadd.f32 %v3314, %v3506
    %v3508 = vpop.f32.mrf.mxu0
    %v3509 = vadd.f32 %v3316, %v3508
    %v3510 = vpop.f32.mrf.mxu0
    %v3511 = vadd.f32 %v3318, %v3510
    %v3512 = vpop.f32.mrf.mxu0
    %v3513 = vadd.f32 %v3320, %v3512
    %3514 = vdwg.mxu0
    %v3515 = vmax.f32 %v2585, 0.0
    %v3516 = vmax.f32 %v2587, 0.0
    %v3517 = vmax.f32 %v3357, 0.0
    %v3518 = vmax.f32 %v3359, 0.0
    %v3519 = vmax.f32 %v2589, 0.0
    %v3520 = vmax.f32 %v2591, 0.0
    %v3521 = vmax.f32 %v3361, 0.0
    %v3522 = vmax.f32 %v3363, 0.0
    %v3523 = vmax.f32 %v2595, 0.0
    %v3524 = vmax.f32 %v2597, 0.0
    %v3525 = vmax.f32 %v3367, 0.0
    %v3526 = vmax.f32 %v3369, 0.0
    %v3527 = vmax.f32 %v2599, 0.0
    %v3528 = vmax.f32 %v2601, 0.0
    %v3529 = vmax.f32 %v3371, 0.0
    %v3530 = vmax.f32 %v3373, 0.0
    %v3531 = vmax.f32 %v2605, 0.0
    %v3532 = vmax.f32 %v2607, 0.0
    %v3533 = vmax.f32 %v3377, 0.0
    %v3534 = vmax.f32 %v3379, 0.0
    %v3535 = vmax.f32 %v2609, 0.0
    %v3536 = vmax.f32 %v2611, 0.0
    %v3537 = vmax.f32 %v3381, 0.0
    %v3538 = vmax.f32 %v3383, 0.0
    %v3539 = vmax.f32 %v2615, 0.0
    %v3540 = vmax.f32 %v2617, 0.0
    %v3541 = vmax.f32 %v3387, 0.0
    %v3542 = vmax.f32 %v3389, 0.0
    %v3543 = vmax.f32 %v2619, 0.0
    %v3544 = vmax.f32 %v2621, 0.0
    %v3545 = vmax.f32 %v3391, 0.0
    %v3546 = vmax.f32 %v3393, 0.0
    %v3547 = vmax.f32 %v2625, 0.0
    %v3548 = vmax.f32 %v2627, 0.0
    %v3549 = vmax.f32 %v3397, 0.0
    %v3550 = vmax.f32 %v3399, 0.0
    %v3551 = vmax.f32 %v2629, 0.0
    %v3552 = vmax.f32 %v2631, 0.0
    %v3553 = vmax.f32 %v3401, 0.0
    %v3554 = vmax.f32 %v3403, 0.0
    %v3555 = vmax.f32 %v2635, 0.0
    %v3556 = vmax.f32 %v2637, 0.0
    %v3557 = vmax.f32 %v3407, 0.0
    %v3558 = vmax.f32 %v3409, 0.0
    %v3559 = vmax.f32 %v2639, 0.0
    %v3560 = vmax.f32 %v2641, 0.0
    %v3561 = vmax.f32 %v3411, 0.0
    %v3562 = vmax.f32 %v3413, 0.0
    %v3563 = vmax.f32 %v2645, 0.0
    %v3564 = vmax.f32 %v2647, 0.0
    %v3565 = vmax.f32 %v3417, 0.0
    %v3566 = vmax.f32 %v3419, 0.0
    %v3567 = vmax.f32 %v2649, 0.0
    %v3568 = vmax.f32 %v2651, 0.0
    %v3569 = vmax.f32 %v3421, 0.0
    %v3570 = vmax.f32 %v3423, 0.0
    %v3571 = vmax.f32 %v2655, 0.0
    %v3572 = vmax.f32 %v2657, 0.0
    %v3573 = vmax.f32 %v3427, 0.0
    %v3574 = vmax.f32 %v3429, 0.0
    %v3575 = vmax.f32 %v2659, 0.0
    %v3576 = vmax.f32 %v2661, 0.0
    %v3577 = vmax.f32 %v3431, 0.0
    %v3578 = vmax.f32 %v3433, 0.0
    %v3579 = vmax.f32 %v2665, 0.0
    %v3580 = vmax.f32 %v2667, 0.0
    %v3581 = vmax.f32 %v3437, 0.0
    %v3582 = vmax.f32 %v3439, 0.0
    %v3583 = vmax.f32 %v2669, 0.0
    %v3584 = vmax.f32 %v2671, 0.0
    %v3585 = vmax.f32 %v3441, 0.0
    %v3586 = vmax.f32 %v3443, 0.0
    %v3587 = vmax.f32 %v2675, 0.0
    %v3588 = vmax.f32 %v2677, 0.0
    %v3589 = vmax.f32 %v3447, 0.0
    %v3590 = vmax.f32 %v3449, 0.0
    %v3591 = vmax.f32 %v2679, 0.0
    %v3592 = vmax.f32 %v2681, 0.0
    %v3593 = vmax.f32 %v3451, 0.0
    %v3594 = vmax.f32 %v3453, 0.0
    %v3595 = vmax.f32 %v2685, 0.0
    %v3596 = vmax.f32 %v2687, 0.0
    %v3597 = vmax.f32 %v3457, 0.0
    %v3598 = vmax.f32 %v3459, 0.0
    %v3599 = vmax.f32 %v2689, 0.0
    %v3600 = vmax.f32 %v2691, 0.0
    %v3601 = vmax.f32 %v3461, 0.0
    %v3602 = vmax.f32 %v3463, 0.0
    %v3603 = vmax.f32 %v2695, 0.0
    %v3604 = vmax.f32 %v2697, 0.0
    %v3605 = vmax.f32 %v3467, 0.0
    %v3606 = vmax.f32 %v3469, 0.0
    %v3607 = vmax.f32 %v2699, 0.0
    %v3608 = vmax.f32 %v2701, 0.0
    %v3609 = vmax.f32 %v3471, 0.0
    %v3610 = vmax.f32 %v3473, 0.0
    %v3611 = vmax.f32 %v2705, 0.0
    %v3612 = vmax.f32 %v2707, 0.0
    %v3613 = vmax.f32 %v3477, 0.0
    %v3614 = vmax.f32 %v3479, 0.0
    %v3615 = vmax.f32 %v2709, 0.0
    %v3616 = vmax.f32 %v2711, 0.0
    %v3617 = vmax.f32 %v3481, 0.0
    %v3618 = vmax.f32 %v3483, 0.0
    %v3619 = vmax.f32 %v2715, 0.0
    %v3620 = vmax.f32 %v2717, 0.0
    %v3621 = vmax.f32 %v3487, 0.0
    %v3622 = vmax.f32 %v3489, 0.0
    %v3623 = vmax.f32 %v2719, 0.0
    %v3624 = vmax.f32 %v2721, 0.0
    %v3625 = vmax.f32 %v3491, 0.0
    %v3626 = vmax.f32 %v3493, 0.0
    %v3627 = vmax.f32 %v2725, 0.0
    %v3628 = vmax.f32 %v2727, 0.0
    %v3629 = vmax.f32 %v3497, 0.0
    %v3630 = vmax.f32 %v3499, 0.0
    %v3631 = vmax.f32 %v2729, 0.0
    %v3632 = vmax.f32 %v2731, 0.0
    %v3633 = vmax.f32 %v3501, 0.0
    %v3634 = vmax.f32 %v3503, 0.0
    %v3635 = vmax.f32 %v2735, 0.0
    %v3636 = vmax.f32 %v2737, 0.0
    %v3637 = vmax.f32 %v3507, 0.0
    %v3638 = vmax.f32 %v3509, 0.0
    %v3639 = vmax.f32 %v2739, 0.0
    %v3640 = vmax.f32 %v2741, 0.0
    %v3641 = vmax.f32 %v3511, 0.0
    %v3642 = vmax.f32 %v3513, 0.0
    %v3643 = vpack.c.bf16 %v3519, %v3515
    %v3644 = vpack.c.bf16 %v3520, %v3516
    %v3645 = vpack.c.bf16 %v3521, %v3517
    %v3646 = vpack.c.bf16 %v3522, %v3518
    %v3647 = vpack.c.bf16 %v3527, %v3523
    %v3648 = vpack.c.bf16 %v3528, %v3524
    %v3649 = vpack.c.bf16 %v3529, %v3525
    %v3650 = vpack.c.bf16 %v3530, %v3526
    %v3651 = vpack.c.bf16 %v3535, %v3531
    %v3652 = vpack.c.bf16 %v3536, %v3532
    %v3653 = vpack.c.bf16 %v3537, %v3533
    %v3654 = vpack.c.bf16 %v3538, %v3534
    %v3655 = vpack.c.bf16 %v3543, %v3539
    %v3656 = vpack.c.bf16 %v3544, %v3540
    %v3657 = vpack.c.bf16 %v3545, %v3541
    %v3658 = vpack.c.bf16 %v3546, %v3542
    %v3659 = vpack.c.bf16 %v3551, %v3547
    %v3660 = vpack.c.bf16 %v3552, %v3548
    %v3661 = vpack.c.bf16 %v3553, %v3549
    %v3662 = vpack.c.bf16 %v3554, %v3550
    %v3663 = vpack.c.bf16 %v3559, %v3555
    %v3664 = vpack.c.bf16 %v3560, %v3556
    %v3665 = vpack.c.bf16 %v3561, %v3557
    %v3666 = vpack.c.bf16 %v3562, %v3558
    %v3667 = vpack.c.bf16 %v3567, %v3563
    %v3668 = vpack.c.bf16 %v3568, %v3564
    %v3669 = vpack.c.bf16 %v3569, %v3565
    %v3670 = vpack.c.bf16 %v3570, %v3566
    %v3671 = vpack.c.bf16 %v3575, %v3571
    %v3672 = vpack.c.bf16 %v3576, %v3572
    %v3673 = vpack.c.bf16 %v3577, %v3573
    %v3674 = vpack.c.bf16 %v3578, %v3574
    %v3675 = vpack.c.bf16 %v3583, %v3579
    %v3676 = vpack.c.bf16 %v3584, %v3580
    %v3677 = vpack.c.bf16 %v3585, %v3581
    %v3678 = vpack.c.bf16 %v3586, %v3582
    %v3679 = vpack.c.bf16 %v3591, %v3587
    %v3680 = vpack.c.bf16 %v3592, %v3588
    %v3681 = vpack.c.bf16 %v3593, %v3589
    %v3682 = vpack.c.bf16 %v3594, %v3590
    %v3683 = vpack.c.bf16 %v3599, %v3595
    %v3684 = vpack.c.bf16 %v3600, %v3596
    %v3685 = vpack.c.bf16 %v3601, %v3597
    %v3686 = vpack.c.bf16 %v3602, %v3598
    %v3687 = vpack.c.bf16 %v3607, %v3603
    %v3688 = vpack.c.bf16 %v3608, %v3604
    %v3689 = vpack.c.bf16 %v3609, %v3605
    %v3690 = vpack.c.bf16 %v3610, %v3606
    %v3691 = vpack.c.bf16 %v3615, %v3611
    %v3692 = vpack.c.bf16 %v3616, %v3612
    %v3693 = vpack.c.bf16 %v3617, %v3613
    %v3694 = vpack.c.bf16 %v3618, %v3614
    %v3695 = vpack.c.bf16 %v3623, %v3619
    %v3696 = vpack.c.bf16 %v3624, %v3620
    %v3697 = vpack.c.bf16 %v3625, %v3621
    %v3698 = vpack.c.bf16 %v3626, %v3622
    %v3699 = vpack.c.bf16 %v3631, %v3627
    %v3700 = vpack.c.bf16 %v3632, %v3628
    %v3701 = vpack.c.bf16 %v3633, %v3629
    %v3702 = vpack.c.bf16 %v3634, %v3630
    %v3703 = vpack.c.bf16 %v3639, %v3635
    %v3704 = vpack.c.bf16 %v3640, %v3636
    %v3705 = vpack.c.bf16 %v3641, %v3637
    %v3706 = vpack.c.bf16 %v3642, %v3638
    %v3707 = vld [vmem:[#allocation2] sm:$0xf]
    %v3708 = vld [vmem:[#allocation2 + $0x4] sm:$0xf]
    %v3709 = vld [vmem:[#allocation2 + $0x8] sm:$0xf]
    %v3710 = vld [vmem:[#allocation2 + $0xc] sm:$0xf]
    %v3711 = vld [vmem:[#allocation2 + $0x10] sm:$0xf]
    %v3712 = vld [vmem:[#allocation2 + $0x14] sm:$0xf]
    %v3713 = vld [vmem:[#allocation2 + $0x18] sm:$0xf]
    %v3714 = vld [vmem:[#allocation2 + $0x1c] sm:$0xf]
    %v3715 = vld [vmem:[#allocation2 + $0x20] sm:$0xf]
    %v3716 = vld [vmem:[#allocation2 + $0x24] sm:$0xf]
    %v3717 = vld [vmem:[#allocation2 + $0x28] sm:$0xf]
    %v3718 = vld [vmem:[#allocation2 + $0x2c] sm:$0xf]
    %v3719 = vld [vmem:[#allocation2 + $0x30] sm:$0xf]
    %v3720 = vld [vmem:[#allocation2 + $0x34] sm:$0xf]
    %v3721 = vld [vmem:[#allocation2 + $0x38] sm:$0xf]
    %v3722 = vld [vmem:[#allocation2 + $0x3c] sm:$0xf]
    %v3723 = vld [vmem:[#allocation2 + $0x40] sm:$0xf]
    %v3724 = vld [vmem:[#allocation2 + $0x44] sm:$0xf]
    %v3725 = vld [vmem:[#allocation2 + $0x48] sm:$0xf]
    %v3726 = vld [vmem:[#allocation2 + $0x4c] sm:$0xf]
    %v3727 = vld [vmem:[#allocation2 + $0x50] sm:$0xf]
    %v3728 = vld [vmem:[#allocation2 + $0x54] sm:$0xf]
    %v3729 = vld [vmem:[#allocation2 + $0x58] sm:$0xf]
    %v3730 = vld [vmem:[#allocation2 + $0x5c] sm:$0xf]
    %v3731 = vld [vmem:[#allocation2 + $0x60] sm:$0xf]
    %v3732 = vld [vmem:[#allocation2 + $0x64] sm:$0xf]
    %v3733 = vld [vmem:[#allocation2 + $0x68] sm:$0xf]
    %v3734 = vld [vmem:[#allocation2 + $0x6c] sm:$0xf]
    %v3735 = vld [vmem:[#allocation2 + $0x70] sm:$0xf]
    %v3736 = vld [vmem:[#allocation2 + $0x74] sm:$0xf]
    %v3737 = vld [vmem:[#allocation2 + $0x78] sm:$0xf]
    %v3738 = vld [vmem:[#allocation2 + $0x7c] sm:$0xf]
    %v3739 = vld [vmem:[#allocation2 + $0x80] sm:$0xf]
    %v3740 = vld [vmem:[#allocation2 + $0x84] sm:$0xf]
    %v3741 = vld [vmem:[#allocation2 + $0x88] sm:$0xf]
    %v3742 = vld [vmem:[#allocation2 + $0x8c] sm:$0xf]
    %v3743 = vld [vmem:[#allocation2 + $0x90] sm:$0xf]
    %v3744 = vld [vmem:[#allocation2 + $0x94] sm:$0xf]
    %v3745 = vld [vmem:[#allocation2 + $0x98] sm:$0xf]
    %v3746 = vld [vmem:[#allocation2 + $0x9c] sm:$0xf]
    %v3747 = vld [vmem:[#allocation2 + $0xa0] sm:$0xf]
    %v3748 = vld [vmem:[#allocation2 + $0xa4] sm:$0xf]
    %v3749 = vld [vmem:[#allocation2 + $0xa8] sm:$0xf]
    %v3750 = vld [vmem:[#allocation2 + $0xac] sm:$0xf]
    %v3751 = vld [vmem:[#allocation2 + $0xb0] sm:$0xf]
    %v3752 = vld [vmem:[#allocation2 + $0xb4] sm:$0xf]
    %v3753 = vld [vmem:[#allocation2 + $0xb8] sm:$0xf]
    %v3754 = vld [vmem:[#allocation2 + $0xbc] sm:$0xf]
    %v3755 = vld [vmem:[#allocation2 + $0xc0] sm:$0xf]
    %v3756 = vld [vmem:[#allocation2 + $0xc4] sm:$0xf]
    %v3757 = vld [vmem:[#allocation2 + $0xc8] sm:$0xf]
    %v3758 = vld [vmem:[#allocation2 + $0xcc] sm:$0xf]
    %v3759 = vld [vmem:[#allocation2 + $0xd0] sm:$0xf]
    %v3760 = vld [vmem:[#allocation2 + $0xd4] sm:$0xf]
    %v3761 = vld [vmem:[#allocation2 + $0xd8] sm:$0xf]
    %v3762 = vld [vmem:[#allocation2 + $0xdc] sm:$0xf]
    %v3763 = vld [vmem:[#allocation2 + $0xe0] sm:$0xf]
    %v3764 = vld [vmem:[#allocation2 + $0xe4] sm:$0xf]
    %v3765 = vld [vmem:[#allocation2 + $0xe8] sm:$0xf]
    %v3766 = vld [vmem:[#allocation2 + $0xec] sm:$0xf]
    %v3767 = vld [vmem:[#allocation2 + $0xf0] sm:$0xf]
    %v3768 = vld [vmem:[#allocation2 + $0xf4] sm:$0xf]
    %v3769 = vld [vmem:[#allocation2 + $0xf8] sm:$0xf]
    %v3770 = vld [vmem:[#allocation2 + $0xfc] sm:$0xf]
    %v3771 = vld [vmem:[%s4] sm:$0x1]
    %v3773 = vlaneseq
    %v3774 = vshrl.u32 %v3773, 7
    %v3775 = vsub.s32 0, %v3774
    %v3776 = vrot.slane %v3771, %v3775
    %v3842 = vunpack.c.l.b16 %v3707
    %v3843 = vunpack.c.l.b16 %v3708
    %v3844 = vunpack.c.l.b16 %v3709
    %v3845 = vunpack.c.l.b16 %v3710
    %v3846 = vunpack.c.l.b16 %v3711
    %v3847 = vunpack.c.l.b16 %v3712
    %v3848 = vunpack.c.l.b16 %v3713
    %v3849 = vunpack.c.l.b16 %v3714
    %v3850 = vunpack.c.l.b16 %v3715
    %v3851 = vunpack.c.l.b16 %v3716
    %v3852 = vunpack.c.l.b16 %v3717
    %v3853 = vunpack.c.l.b16 %v3718
    %v3854 = vunpack.c.l.b16 %v3719
    %v3855 = vunpack.c.l.b16 %v3720
    %v3856 = vunpack.c.l.b16 %v3721
    %v3857 = vunpack.c.l.b16 %v3722
    %v3858 = vunpack.c.l.b16 %v3723
    %v3859 = vunpack.c.l.b16 %v3724
    %v3860 = vunpack.c.l.b16 %v3725
    %v3861 = vunpack.c.l.b16 %v3726
    %v3862 = vunpack.c.l.b16 %v3727
    %v3863 = vunpack.c.l.b16 %v3728
    %v3864 = vunpack.c.l.b16 %v3729
    %v3865 = vunpack.c.l.b16 %v3730
    %v3866 = vunpack.c.l.b16 %v3731
    %v3867 = vunpack.c.l.b16 %v3732
    %v3868 = vunpack.c.l.b16 %v3733
    %v3869 = vunpack.c.l.b16 %v3734
    %v3870 = vunpack.c.l.b16 %v3735
    %v3871 = vunpack.c.l.b16 %v3736
    %v3872 = vunpack.c.l.b16 %v3737
    %v3873 = vunpack.c.l.b16 %v3738
    %v3874 = vunpack.c.l.b16 %v3739
    %v3875 = vunpack.c.l.b16 %v3740
    %v3876 = vunpack.c.l.b16 %v3741
    %v3877 = vunpack.c.l.b16 %v3742
    %v3878 = vunpack.c.l.b16 %v3743
    %v3879 = vunpack.c.l.b16 %v3744
    %v3880 = vunpack.c.l.b16 %v3745
    %v3881 = vunpack.c.l.b16 %v3746
    %v3882 = vunpack.c.l.b16 %v3747
    %v3883 = vunpack.c.l.b16 %v3748
    %v3884 = vunpack.c.l.b16 %v3749
    %v3885 = vunpack.c.l.b16 %v3750
    %v3886 = vunpack.c.l.b16 %v3751
    %v3887 = vunpack.c.l.b16 %v3752
    %v3888 = vunpack.c.l.b16 %v3753
    %v3889 = vunpack.c.l.b16 %v3754
    %v3890 = vunpack.c.l.b16 %v3755
    %v3891 = vunpack.c.l.b16 %v3756
    %v3892 = vunpack.c.l.b16 %v3757
    %v3893 = vunpack.c.l.b16 %v3758
    %v3894 = vunpack.c.l.b16 %v3759
    %v3895 = vunpack.c.l.b16 %v3760
    %v3896 = vunpack.c.l.b16 %v3761
    %v3897 = vunpack.c.l.b16 %v3762
    %v3898 = vunpack.c.l.b16 %v3763
    %v3899 = vunpack.c.l.b16 %v3764
    %v3900 = vunpack.c.l.b16 %v3765
    %v3901 = vunpack.c.l.b16 %v3766
    %v3902 = vunpack.c.l.b16 %v3767
    %v3903 = vunpack.c.l.b16 %v3768
    %v3904 = vunpack.c.l.b16 %v3769
    %v3905 = vunpack.c.l.b16 %v3770
    %v3906 = vpack.c.b16 %v3843, %v3842
    %v3907 = vpack.c.b16 %v3845, %v3844
    %v3908 = vpack.c.b16 %v3847, %v3846
    %v3909 = vpack.c.b16 %v3849, %v3848
    %v3910 = vpack.c.b16 %v3851, %v3850
    %v3911 = vpack.c.b16 %v3853, %v3852
    %v3912 = vpack.c.b16 %v3855, %v3854
    %v3913 = vpack.c.b16 %v3857, %v3856
    %v3914 = vpack.c.b16 %v3859, %v3858
    %v3915 = vpack.c.b16 %v3861, %v3860
    %v3916 = vpack.c.b16 %v3863, %v3862
    %v3917 = vpack.c.b16 %v3865, %v3864
    %v3918 = vpack.c.b16 %v3867, %v3866
    %v3919 = vpack.c.b16 %v3869, %v3868
    %v3920 = vpack.c.b16 %v3871, %v3870
    %v3921 = vpack.c.b16 %v3873, %v3872
    %v3922 = vpack.c.b16 %v3875, %v3874
    %v3923 = vpack.c.b16 %v3877, %v3876
    %v3924 = vpack.c.b16 %v3879, %v3878
    %v3925 = vpack.c.b16 %v3881, %v3880
    %v3926 = vpack.c.b16 %v3883, %v3882
    %v3927 = vpack.c.b16 %v3885, %v3884
    %v3928 = vpack.c.b16 %v3887, %v3886
    %v3929 = vpack.c.b16 %v3889, %v3888
    %v3930 = vpack.c.b16 %v3891, %v3890
    %v3931 = vpack.c.b16 %v3893, %v3892
    %v3932 = vpack.c.b16 %v3895, %v3894
    %v3933 = vpack.c.b16 %v3897, %v3896
    %v3934 = vpack.c.b16 %v3899, %v3898
    %v3935 = vpack.c.b16 %v3901, %v3900
    %v3936 = vpack.c.b16 %v3903, %v3902
    %v3937 = vpack.c.b16 %v3905, %v3904
    %3970 = vmatprep.subr.bf16.mxu0 0
    %3971 = vmatpush1.bf16.msra.mxu0 %v3913
    %3972 = vmatprep.subr.bf16.mxu0 0
    %3973 = vmatpush1.bf16.msra.mxu0 %v3912
    %3974 = vmatprep.subr.bf16.mxu0 0
    %3975 = vmatpush1.bf16.msra.mxu0 %v3911
    %3976 = vmatprep.subr.bf16.mxu0 0
    %3977 = vmatpush1.bf16.msra.mxu0 %v3910
    %3978 = vmatprep.subr.bf16.mxu0 0
    %3979 = vmatpush1.bf16.msra.mxu0 %v3909
    %3980 = vmatprep.subr.bf16.mxu0 0
    %3981 = vmatpush1.bf16.msra.mxu0 %v3908
    %3982 = vmatprep.subr.bf16.mxu0 0
    %3983 = vmatpush1.bf16.msra.mxu0 %v3907
    %3984 = vmatprep.subr.bf16.mxu0 0
    %3985 = vmatpush1.bf16.msra.mxu0 %v3906
    %3986 = vmatprep.subr.bf16.mxu0 0
    %3987 = vmatpush2.bf16.msra.mxu0 %v3921
    %3988 = vmatprep.subr.bf16.mxu0 0
    %3989 = vmatpush2.bf16.msra.mxu0 %v3920
    %3990 = vmatprep.subr.bf16.mxu0 0
    %3991 = vmatpush2.bf16.msra.mxu0 %v3919
    %3992 = vmatprep.subr.bf16.mxu0 0
    %3993 = vmatpush2.bf16.msra.mxu0 %v3918
    %3994 = vmatprep.subr.bf16.mxu0 0
    %3995 = vmatpush2.bf16.msra.mxu0 %v3917
    %3996 = vmatprep.subr.bf16.mxu0 0
    %3997 = vmatpush2.bf16.msra.mxu0 %v3916
    %3998 = vmatprep.subr.bf16.mxu0 0
    %3999 = vmatpush2.bf16.msra.mxu0 %v3915
    %4000 = vmatprep.subr.bf16.mxu0 0
    %4001 = vmatpush2.bf16.msra.mxu0 %v3914
    %4002 = vmatprep.mubr.bf16.mxu0 %v3644
    %4003 = vmatmul.mubr.bf16.gmra.mxu0 %v3643
    %v4004 = vpop.f32.mrf.mxu0
    %v4005 = vadd.f32 %v3776, %v4004
    %v4006 = vpop.f32.mrf.mxu0
    %v4007 = vpop.f32.mrf.mxu0
    %v4008 = vadd.f32 %v3776, %v4007
    %v4009 = vpop.f32.mrf.mxu0
    %4010 = vmatprep.mubr.bf16.mxu0 %v3648
    %4011 = vmatmul.mubr.bf16.gmra.mxu0 %v3647
    %v4012 = vpop.f32.mrf.mxu0
    %v4013 = vadd.f32 %v3776, %v4012
    %v4014 = vpop.f32.mrf.mxu0
    %v4015 = vpop.f32.mrf.mxu0
    %v4016 = vadd.f32 %v3776, %v4015
    %v4017 = vpop.f32.mrf.mxu0
    %4018 = vmatprep.mubr.bf16.mxu0 %v3652
    %4019 = vmatmul.mubr.bf16.gmra.mxu0 %v3651
    %v4020 = vpop.f32.mrf.mxu0
    %v4021 = vadd.f32 %v3776, %v4020
    %v4022 = vpop.f32.mrf.mxu0
    %v4023 = vpop.f32.mrf.mxu0
    %v4024 = vadd.f32 %v3776, %v4023
    %v4025 = vpop.f32.mrf.mxu0
    %4026 = vmatprep.mubr.bf16.mxu0 %v3656
    %4027 = vmatmul.mubr.bf16.gmra.mxu0 %v3655
    %v4028 = vpop.f32.mrf.mxu0
    %v4029 = vadd.f32 %v3776, %v4028
    %v4030 = vpop.f32.mrf.mxu0
    %v4031 = vpop.f32.mrf.mxu0
    %v4032 = vadd.f32 %v3776, %v4031
    %v4033 = vpop.f32.mrf.mxu0
    %4034 = vmatprep.mubr.bf16.mxu0 %v3660
    %4035 = vmatmul.mubr.bf16.gmra.mxu0 %v3659
    %v4036 = vpop.f32.mrf.mxu0
    %v4037 = vadd.f32 %v3776, %v4036
    %v4038 = vpop.f32.mrf.mxu0
    %v4039 = vpop.f32.mrf.mxu0
    %v4040 = vadd.f32 %v3776, %v4039
    %v4041 = vpop.f32.mrf.mxu0
    %4042 = vmatprep.mubr.bf16.mxu0 %v3664
    %4043 = vmatmul.mubr.bf16.gmra.mxu0 %v3663
    %v4044 = vpop.f32.mrf.mxu0
    %v4045 = vadd.f32 %v3776, %v4044
    %v4046 = vpop.f32.mrf.mxu0
    %v4047 = vpop.f32.mrf.mxu0
    %v4048 = vadd.f32 %v3776, %v4047
    %v4049 = vpop.f32.mrf.mxu0
    %4050 = vmatprep.mubr.bf16.mxu0 %v3668
    %4051 = vmatmul.mubr.bf16.gmra.mxu0 %v3667
    %v4052 = vpop.f32.mrf.mxu0
    %v4053 = vadd.f32 %v3776, %v4052
    %v4054 = vpop.f32.mrf.mxu0
    %v4055 = vpop.f32.mrf.mxu0
    %v4056 = vadd.f32 %v3776, %v4055
    %v4057 = vpop.f32.mrf.mxu0
    %4058 = vmatprep.mubr.bf16.mxu0 %v3672
    %4059 = vmatmul.mubr.bf16.gmra.mxu0 %v3671
    %v4060 = vpop.f32.mrf.mxu0
    %v4061 = vadd.f32 %v3776, %v4060
    %v4062 = vpop.f32.mrf.mxu0
    %v4063 = vpop.f32.mrf.mxu0
    %v4064 = vadd.f32 %v3776, %v4063
    %v4065 = vpop.f32.mrf.mxu0
    %4066 = vmatprep.mubr.bf16.mxu0 %v3676
    %4067 = vmatmul.mubr.bf16.gmra.mxu0 %v3675
    %v4068 = vpop.f32.mrf.mxu0
    %v4069 = vadd.f32 %v3776, %v4068
    %v4070 = vpop.f32.mrf.mxu0
    %v4071 = vpop.f32.mrf.mxu0
    %v4072 = vadd.f32 %v3776, %v4071
    %v4073 = vpop.f32.mrf.mxu0
    %4074 = vmatprep.mubr.bf16.mxu0 %v3680
    %4075 = vmatmul.mubr.bf16.gmra.mxu0 %v3679
    %v4076 = vpop.f32.mrf.mxu0
    %v4077 = vadd.f32 %v3776, %v4076
    %v4078 = vpop.f32.mrf.mxu0
    %v4079 = vpop.f32.mrf.mxu0
    %v4080 = vadd.f32 %v3776, %v4079
    %v4081 = vpop.f32.mrf.mxu0
    %4082 = vmatprep.mubr.bf16.mxu0 %v3684
    %4083 = vmatmul.mubr.bf16.gmra.mxu0 %v3683
    %v4084 = vpop.f32.mrf.mxu0
    %v4085 = vadd.f32 %v3776, %v4084
    %v4086 = vpop.f32.mrf.mxu0
    %v4087 = vpop.f32.mrf.mxu0
    %v4088 = vadd.f32 %v3776, %v4087
    %v4089 = vpop.f32.mrf.mxu0
    %4090 = vmatprep.mubr.bf16.mxu0 %v3688
    %4091 = vmatmul.mubr.bf16.gmra.mxu0 %v3687
    %v4092 = vpop.f32.mrf.mxu0
    %v4093 = vadd.f32 %v3776, %v4092
    %v4094 = vpop.f32.mrf.mxu0
    %v4095 = vpop.f32.mrf.mxu0
    %v4096 = vadd.f32 %v3776, %v4095
    %v4097 = vpop.f32.mrf.mxu0
    %4098 = vmatprep.mubr.bf16.mxu0 %v3692
    %4099 = vmatmul.mubr.bf16.gmra.mxu0 %v3691
    %v4100 = vpop.f32.mrf.mxu0
    %v4101 = vadd.f32 %v3776, %v4100
    %v4102 = vpop.f32.mrf.mxu0
    %v4103 = vpop.f32.mrf.mxu0
    %v4104 = vadd.f32 %v3776, %v4103
    %v4105 = vpop.f32.mrf.mxu0
    %4106 = vmatprep.mubr.bf16.mxu0 %v3696
    %4107 = vmatmul.mubr.bf16.gmra.mxu0 %v3695
    %v4108 = vpop.f32.mrf.mxu0
    %v4109 = vadd.f32 %v3776, %v4108
    %v4110 = vpop.f32.mrf.mxu0
    %v4111 = vpop.f32.mrf.mxu0
    %v4112 = vadd.f32 %v3776, %v4111
    %v4113 = vpop.f32.mrf.mxu0
    %4114 = vmatprep.mubr.bf16.mxu0 %v3700
    %4115 = vmatmul.mubr.bf16.gmra.mxu0 %v3699
    %v4116 = vpop.f32.mrf.mxu0
    %v4117 = vadd.f32 %v3776, %v4116
    %v4118 = vpop.f32.mrf.mxu0
    %v4119 = vpop.f32.mrf.mxu0
    %v4120 = vadd.f32 %v3776, %v4119
    %v4121 = vpop.f32.mrf.mxu0
    %4122 = vmatprep.mubr.bf16.mxu0 %v3704
    %4123 = vmatmul.mubr.bf16.gmra.mxu0 %v3703
    %v4124 = vpop.f32.mrf.mxu0
    %v4125 = vadd.f32 %v3776, %v4124
    %v4126 = vpop.f32.mrf.mxu0
    %v4127 = vpop.f32.mrf.mxu0
    %v4128 = vadd.f32 %v3776, %v4127
    %v4129 = vpop.f32.mrf.mxu0
    %4130 = vdwg.mxu0
    %4131 = vmatprep.subr.bf16.mxu0 0
    %4132 = vmatpush1.bf16.msra.mxu0 %v3929
    %4133 = vmatprep.subr.bf16.mxu0 0
    %4134 = vmatpush1.bf16.msra.mxu0 %v3928
    %4135 = vmatprep.subr.bf16.mxu0 0
    %4136 = vmatpush1.bf16.msra.mxu0 %v3927
    %4137 = vmatprep.subr.bf16.mxu0 0
    %4138 = vmatpush1.bf16.msra.mxu0 %v3926
    %4139 = vmatprep.subr.bf16.mxu0 0
    %4140 = vmatpush1.bf16.msra.mxu0 %v3925
    %4141 = vmatprep.subr.bf16.mxu0 0
    %4142 = vmatpush1.bf16.msra.mxu0 %v3924
    %4143 = vmatprep.subr.bf16.mxu0 0
    %4144 = vmatpush1.bf16.msra.mxu0 %v3923
    %4145 = vmatprep.subr.bf16.mxu0 0
    %4146 = vmatpush1.bf16.msra.mxu0 %v3922
    %4147 = vmatprep.subr.bf16.mxu0 0
    %4148 = vmatpush2.bf16.msra.mxu0 %v3937
    %4149 = vmatprep.subr.bf16.mxu0 0
    %4150 = vmatpush2.bf16.msra.mxu0 %v3936
    %4151 = vmatprep.subr.bf16.mxu0 0
    %4152 = vmatpush2.bf16.msra.mxu0 %v3935
    %4153 = vmatprep.subr.bf16.mxu0 0
    %4154 = vmatpush2.bf16.msra.mxu0 %v3934
    %4155 = vmatprep.subr.bf16.mxu0 0
    %4156 = vmatpush2.bf16.msra.mxu0 %v3933
    %4157 = vmatprep.subr.bf16.mxu0 0
    %4158 = vmatpush2.bf16.msra.mxu0 %v3932
    %4159 = vmatprep.subr.bf16.mxu0 0
    %4160 = vmatpush2.bf16.msra.mxu0 %v3931
    %4161 = vmatprep.subr.bf16.mxu0 0
    %4162 = vmatpush2.bf16.msra.mxu0 %v3930
    %4163 = vmatprep.mubr.bf16.mxu0 %v3646
    %4164 = vmatmul.mubr.bf16.gmra.mxu0 %v3645
    %v4165 = vpop.f32.mrf.mxu0
    %v4166 = vadd.f32 %v4005, %v4165
    %v4167 = vpop.f32.mrf.mxu0
    %v4168 = vpop.f32.mrf.mxu0
    %v4169 = vadd.f32 %v4008, %v4168
    %v4170 = vpop.f32.mrf.mxu0
    %4171 = vmatprep.mubr.bf16.mxu0 %v3650
    %4172 = vmatmul.mubr.bf16.gmra.mxu0 %v3649
    %v4173 = vpop.f32.mrf.mxu0
    %v4174 = vadd.f32 %v4013, %v4173
    %v4175 = vpop.f32.mrf.mxu0
    %v4176 = vpop.f32.mrf.mxu0
    %v4177 = vadd.f32 %v4016, %v4176
    %v4178 = vpop.f32.mrf.mxu0
    %4179 = vmatprep.mubr.bf16.mxu0 %v3654
    %4180 = vmatmul.mubr.bf16.gmra.mxu0 %v3653
    %v4181 = vpop.f32.mrf.mxu0
    %v4182 = vadd.f32 %v4021, %v4181
    %v4183 = vpop.f32.mrf.mxu0
    %v4184 = vpop.f32.mrf.mxu0
    %v4185 = vadd.f32 %v4024, %v4184
    %v4186 = vpop.f32.mrf.mxu0
    %4187 = vmatprep.mubr.bf16.mxu0 %v3658
    %4188 = vmatmul.mubr.bf16.gmra.mxu0 %v3657
    %v4189 = vpop.f32.mrf.mxu0
    %v4190 = vadd.f32 %v4029, %v4189
    %v4191 = vpop.f32.mrf.mxu0
    %v4192 = vpop.f32.mrf.mxu0
    %v4193 = vadd.f32 %v4032, %v4192
    %v4194 = vpop.f32.mrf.mxu0
    %4195 = vmatprep.mubr.bf16.mxu0 %v3662
    %4196 = vmatmul.mubr.bf16.gmra.mxu0 %v3661
    %v4197 = vpop.f32.mrf.mxu0
    %v4198 = vadd.f32 %v4037, %v4197
    %v4199 = vpop.f32.mrf.mxu0
    %v4200 = vpop.f32.mrf.mxu0
    %v4201 = vadd.f32 %v4040, %v4200
    %v4202 = vpop.f32.mrf.mxu0
    %4203 = vmatprep.mubr.bf16.mxu0 %v3666
    %4204 = vmatmul.mubr.bf16.gmra.mxu0 %v3665
    %v4205 = vpop.f32.mrf.mxu0
    %v4206 = vadd.f32 %v4045, %v4205
    %v4207 = vpop.f32.mrf.mxu0
    %v4208 = vpop.f32.mrf.mxu0
    %v4209 = vadd.f32 %v4048, %v4208
    %v4210 = vpop.f32.mrf.mxu0
    %4211 = vmatprep.mubr.bf16.mxu0 %v3670
    %4212 = vmatmul.mubr.bf16.gmra.mxu0 %v3669
    %v4213 = vpop.f32.mrf.mxu0
    %v4214 = vadd.f32 %v4053, %v4213
    %v4215 = vpop.f32.mrf.mxu0
    %v4216 = vpop.f32.mrf.mxu0
    %v4217 = vadd.f32 %v4056, %v4216
    %v4218 = vpop.f32.mrf.mxu0
    %4219 = vmatprep.mubr.bf16.mxu0 %v3674
    %4220 = vmatmul.mubr.bf16.gmra.mxu0 %v3673
    %v4221 = vpop.f32.mrf.mxu0
    %v4222 = vadd.f32 %v4061, %v4221
    %v4223 = vpop.f32.mrf.mxu0
    %v4224 = vpop.f32.mrf.mxu0
    %v4225 = vadd.f32 %v4064, %v4224
    %v4226 = vpop.f32.mrf.mxu0
    %4227 = vmatprep.mubr.bf16.mxu0 %v3678
    %4228 = vmatmul.mubr.bf16.gmra.mxu0 %v3677
    %v4229 = vpop.f32.mrf.mxu0
    %v4230 = vadd.f32 %v4069, %v4229
    %v4231 = vpop.f32.mrf.mxu0
    %v4232 = vpop.f32.mrf.mxu0
    %v4233 = vadd.f32 %v4072, %v4232
    %v4234 = vpop.f32.mrf.mxu0
    %4235 = vmatprep.mubr.bf16.mxu0 %v3682
    %4236 = vmatmul.mubr.bf16.gmra.mxu0 %v3681
    %v4237 = vpop.f32.mrf.mxu0
    %v4238 = vadd.f32 %v4077, %v4237
    %v4239 = vpop.f32.mrf.mxu0
    %v4240 = vpop.f32.mrf.mxu0
    %v4241 = vadd.f32 %v4080, %v4240
    %v4242 = vpop.f32.mrf.mxu0
    %4243 = vmatprep.mubr.bf16.mxu0 %v3686
    %4244 = vmatmul.mubr.bf16.gmra.mxu0 %v3685
    %v4245 = vpop.f32.mrf.mxu0
    %v4246 = vadd.f32 %v4085, %v4245
    %v4247 = vpop.f32.mrf.mxu0
    %v4248 = vpop.f32.mrf.mxu0
    %v4249 = vadd.f32 %v4088, %v4248
    %v4250 = vpop.f32.mrf.mxu0
    %4251 = vmatprep.mubr.bf16.mxu0 %v3690
    %4252 = vmatmul.mubr.bf16.gmra.mxu0 %v3689
    %v4253 = vpop.f32.mrf.mxu0
    %v4254 = vadd.f32 %v4093, %v4253
    %v4255 = vpop.f32.mrf.mxu0
    %v4256 = vpop.f32.mrf.mxu0
    %v4257 = vadd.f32 %v4096, %v4256
    %v4258 = vpop.f32.mrf.mxu0
    %4259 = vmatprep.mubr.bf16.mxu0 %v3694
    %4260 = vmatmul.mubr.bf16.gmra.mxu0 %v3693
    %v4261 = vpop.f32.mrf.mxu0
    %v4262 = vadd.f32 %v4101, %v4261
    %v4263 = vpop.f32.mrf.mxu0
    %v4264 = vpop.f32.mrf.mxu0
    %v4265 = vadd.f32 %v4104, %v4264
    %v4266 = vpop.f32.mrf.mxu0
    %4267 = vmatprep.mubr.bf16.mxu0 %v3698
    %4268 = vmatmul.mubr.bf16.gmra.mxu0 %v3697
    %v4269 = vpop.f32.mrf.mxu0
    %v4270 = vadd.f32 %v4109, %v4269
    %v4271 = vpop.f32.mrf.mxu0
    %v4272 = vpop.f32.mrf.mxu0
    %v4273 = vadd.f32 %v4112, %v4272
    %v4274 = vpop.f32.mrf.mxu0
    %4275 = vmatprep.mubr.bf16.mxu0 %v3702
    %4276 = vmatmul.mubr.bf16.gmra.mxu0 %v3701
    %v4277 = vpop.f32.mrf.mxu0
    %v4278 = vadd.f32 %v4117, %v4277
    %v4279 = vpop.f32.mrf.mxu0
    %v4280 = vpop.f32.mrf.mxu0
    %v4281 = vadd.f32 %v4120, %v4280
    %v4282 = vpop.f32.mrf.mxu0
    %4283 = vmatprep.mubr.bf16.mxu0 %v3706
    %4284 = vmatmul.mubr.bf16.gmra.mxu0 %v3705
    %v4285 = vpop.f32.mrf.mxu0
    %v4286 = vadd.f32 %v4125, %v4285
    %v4287 = vpop.f32.mrf.mxu0
    %v4288 = vpop.f32.mrf.mxu0
    %v4289 = vadd.f32 %v4128, %v4288
    %v4290 = vpop.f32.mrf.mxu0
    %4291 = vdwg.mxu0
    %4292 = vst [vmem:[#allocation5] sm:$0xff] %v4166
    %4293 = vst [vmem:[#allocation5 + $0x8] sm:$0xff] %v4169
    %4294 = vst [vmem:[#allocation5 + $0x10] sm:$0xff] %v4174
    %4295 = vst [vmem:[#allocation5 + $0x18] sm:$0xff] %v4177
    %4296 = vst [vmem:[#allocation5 + $0x20] sm:$0xff] %v4182
    %4297 = vst [vmem:[#allocation5 + $0x28] sm:$0xff] %v4185
    %4298 = vst [vmem:[#allocation5 + $0x30] sm:$0xff] %v4190
    %4299 = vst [vmem:[#allocation5 + $0x38] sm:$0xff] %v4193
    %4300 = vst [vmem:[#allocation5 + $0x40] sm:$0xff] %v4198
    %4301 = vst [vmem:[#allocation5 + $0x48] sm:$0xff] %v4201
    %4302 = vst [vmem:[#allocation5 + $0x50] sm:$0xff] %v4206
    %4303 = vst [vmem:[#allocation5 + $0x58] sm:$0xff] %v4209
    %4304 = vst [vmem:[#allocation5 + $0x60] sm:$0xff] %v4214
    %4305 = vst [vmem:[#allocation5 + $0x68] sm:$0xff] %v4217
    %4306 = vst [vmem:[#allocation5 + $0x70] sm:$0xff] %v4222
    %4307 = vst [vmem:[#allocation5 + $0x78] sm:$0xff] %v4225
    %4308 = vst [vmem:[#allocation5 + $0x80] sm:$0xff] %v4230
    %4309 = vst [vmem:[#allocation5 + $0x88] sm:$0xff] %v4233
    %4310 = vst [vmem:[#allocation5 + $0x90] sm:$0xff] %v4238
    %4311 = vst [vmem:[#allocation5 + $0x98] sm:$0xff] %v4241
    %4312 = vst [vmem:[#allocation5 + $0xa0] sm:$0xff] %v4246
    %4313 = vst [vmem:[#allocation5 + $0xa8] sm:$0xff] %v4249
    %4314 = vst [vmem:[#allocation5 + $0xb0] sm:$0xff] %v4254
    %4315 = vst [vmem:[#allocation5 + $0xb8] sm:$0xff] %v4257
    %4316 = vst [vmem:[#allocation5 + $0xc0] sm:$0xff] %v4262
    %4317 = vst [vmem:[#allocation5 + $0xc8] sm:$0xff] %v4265
    %4318 = vst [vmem:[#allocation5 + $0xd0] sm:$0xff] %v4270
    %4319 = vst [vmem:[#allocation5 + $0xd8] sm:$0xff] %v4273
    %4320 = vst [vmem:[#allocation5 + $0xe0] sm:$0xff] %v4278
    %4321 = vst [vmem:[#allocation5 + $0xe8] sm:$0xff] %v4281
    %4322 = vst [vmem:[#allocation5 + $0xf0] sm:$0xff] %v4286
    %4323 = vst [vmem:[#allocation5 + $0xf8] sm:$0xff] %v4289
    // Predicated region
    $region26: #{tpu_custom_call.1} parent=1 // pred_check
      _
    $region27: #{tpu_custom_call.1} parent=1 // pred_check_branch
      %4325 = sbr.rel (0) target = $region29
    $region28: #{tpu_custom_call.1} parent=1 // pred_region
      %s4327 = ssub.s32 4096, 4096
      %4328 = vsyncadd [#allocation4], %s4327
      %s4329 = sshll.u32 [#allocation5], 4
      %s4330 = int_to_ptr.vmem [resolvable:$true] %s4329
      %4335 = dma.vmem_to_hbm [thread:$0]  %s4330, 4096, %s5, [#allocation4], 128, 128, 8
    $region29: #{tpu_custom_call.1} parent=1 // pred_fallthru
      _
    // Predicated region
    $region30: #{tpu_custom_call.1} parent=1 // pred_check
      _
    $region31: #{tpu_custom_call.1} parent=1 // pred_check_branch
      %4337 = sbr.rel (0) target = $region33
    $region32: #{tpu_custom_call.1} parent=1 // pred_region
      %4338 = dma.done [#allocation4], 4096
    $region33: #{tpu_custom_call.1} parent=1 // pred_fallthru
      _
    %4339 = vsyncpa [#allocation3], 1
    %4340 = vsyncpa [#allocation4], 1

</llo_original>
